<compile_context>
chip_gen: v7x
topology: tpu7x:2x2x1
jax: 0.10.0
libtpu: 0.0.40
codegen_flags: <defaults>
</compile_context>

<pallas_src>
import functools

import jax
import jax.numpy as jnp
import numpy as np
from jax import lax
from jax.experimental import pallas as pl
from jax.experimental.pallas import tpu as pltpu

MXU_DTYPE = jnp.bfloat16   # matmul-operand dtype (accumulation is always f32).
                           # Set to jnp.float32 to match the f32 reference to 2e-4.
GATE_PAD = 128             # lanes per GRU gate block [r|z|n], lane-tile aligned
SUBLANE = 8


# ----------------------------------------------------------------------------
# Fused Pallas kernel
# ----------------------------------------------------------------------------
def _fused_forward_kernel(x_ref, cwb_ref, cb_ref,
                          w1_ref, b1_ref, w2_ref, b2_ref,
                          wih_ref, bih_ref, whh_ref, bhh_ref,
                          wo_ref, bo_ref, out_ref,
                          *, ts, bsp, gp, n_oh, band, band_stride, mxu_dtype):
    f32 = jnp.float32

    x = x_ref[...]                                     # (ts*bsp, H*C*W) mxu_dtype
    wb = cwb_ref[...]                                  # (K*C*W, OC*OW)  mxu_dtype

    # --- conv (VALID, stride s) as OH row-banded matmuls; cols ordered (oh, oc, ow)
    parts = []
    for oh in range(n_oh):
        lo = oh * band_stride                          # multiples of 128 lanes
        parts.append(jnp.dot(x[:, lo:lo + band], wb, preferred_element_type=f32))
    y = jnp.concatenate(parts, axis=1) + cb_ref[...]   # (N, OC*OH*OW) f32
    y = jnp.maximum(y, 0.0)                            # conv + ReLU

    # --- fc1 / fc2 (frame-encoder tail), f32 accumulation, bf16 MXU operands -----
    y = jnp.dot(y.astype(mxu_dtype), w1_ref[...], preferred_element_type=f32) + b1_ref[...]
    y = jnp.maximum(y, 0.0)
    feat = jnp.dot(y.astype(mxu_dtype), w2_ref[...], preferred_element_type=f32) + b2_ref[...]
    feat = jnp.maximum(feat, 0.0)                      # (N, F)

    # --- GRU: input-gate projections hoisted out of the recurrence --------------
    gi = jnp.dot(feat.astype(mxu_dtype), wih_ref[...],
                 preferred_element_type=f32) + bih_ref[...]          # (N, 3*gp)

    whh = whh_ref[...]                                 # (gp, 3*gp), gates [r|z|n]
    bhh = bhh_ref[...]                                 # (1, 3*gp)
    h = jnp.zeros((bsp, gp), f32)
    for t in range(ts):                # static trip count -> fully unrolled
        xg = gi[t * bsp:(t + 1) * bsp, :]              # full (bsp, 3*gp) tile
        gh = jnp.dot(h.astype(mxu_dtype), whh, preferred_element_type=f32) + bhh
        r = jax.nn.sigmoid(xg[:, :gp] + gh[:, :gp])
        z = jax.nn.sigmoid(xg[:, gp:2 * gp] + gh[:, gp:2 * gp])
        n = jnp.tanh(xg[:, 2 * gp:] + r * gh[:, 2 * gp:])
        h = (1.0 - z) * n + z * h                      # full-vreg, gate math in f32

    # --- output head -------------------------------------------------------------
    logits = jnp.dot(h.astype(mxu_dtype), wo_ref[...],
                     preferred_element_type=f32) + bo_ref[...]
    out_ref[...] = logits.astype(out_ref.dtype)


def conv_gru_icm_forward(obs, prep, cfg):
    """obs: (bs, ts, c, h, w) float32 -> logits (bs, output_dim)."""
    bs, ts, c, h, w = obs.shape
    K, s = cfg["kernel_size"], cfg["stride"]
    OUT = cfg["output_dim"]
    CH, CO = cfg["cnn_hidden_dim"], cfg["cnn_output_dim"]
    FD = cfg["flatten_dim"]
    OH = (h - K) // s + 1
    band = K * c * w
    band_stride = s * c * w
    bsp = -(-bs // SUBLANE) * SUBLANE      # pad batch to a sublane multiple (2 -> 8)
    N = ts * bsp

    # Glue: (t, b)-major rows, (h, c, w)-ordered columns, batch zero-padded to bsp,
    # cast to the MXU operand dtype (<= 128 KiB slab).
    x = obs.transpose(1, 0, 3, 2, 4).reshape(ts, bs, h * c * w)
    x = jnp.pad(x, ((0, 0), (0, bsp - bs), (0, 0)))
    x2d = x.reshape(N, h * c * w).astype(MXU_DTYPE)

    operands = (x2d, prep["conv_wb"], prep["conv_b"],
                prep["fc1_wt"], prep["fc1_b"], prep["fc2_wt"], prep["fc2_b"],
                prep["wih_pad"], prep["bih_pad"], prep["whh_pad"], prep["bhh_pad"],
                prep["wo_pad"], prep["fc_b"])

    pc = prep["conv_wb"].shape[1]                    # OC*OW
    flops = 2 * (N * OH * band * pc + N * FD * CH + N * CH * CO
                 + N * CO * 3 * GATE_PAD
                 + ts * bsp * GATE_PAD * 3 * GATE_PAD
                 + bsp * GATE_PAD * OUT)
    bytes_accessed = (sum(int(np.prod(a.shape)) * a.dtype.itemsize for a in operands)
                      + bsp * OUT * 4)
    cost = pl.CostEstimate(flops=int(flops),
                           transcendentals=int(ts * bsp * 3 * GATE_PAD),
                           bytes_accessed=int(bytes_accessed))

    kernel = functools.partial(_fused_forward_kernel, ts=ts, bsp=bsp, gp=GATE_PAD,
                               n_oh=OH, band=band, band_stride=band_stride,
                               mxu_dtype=MXU_DTYPE)
    in_specs = [pl.BlockSpec(memory_space=pltpu.MemorySpace.VMEM)
                for _ in range(len(operands))]
    out = pl.pallas_call(
        kernel,
        out_shape=jax.ShapeDtypeStruct((bsp, OUT), jnp.float32),
        in_specs=in_specs,
        out_specs=pl.BlockSpec(memory_space=pltpu.MemorySpace.VMEM),
        cost_estimate=cost,
    )(*operands)
    return out[:bs]


# ----------------------------------------------------------------------------
# Parameter setup (PyTorch-style init + one-time host-side kernel layouts)
# ----------------------------------------------------------------------------
def init_params(key, cfg):
    def uni(k, shape, fan_in):
        bound = 1.0 / np.sqrt(fan_in)
        return jax.random.uniform(k, shape, jnp.float32, -bound, bound)

    C, OC, K = cfg["in_channels"], cfg["out_channels"], cfg["kernel_size"]
    F, HID, OUT = cfg["rnn_input_size"], cfg["rnn_hidden_size"], cfg["output_dim"]
    CH, CO = cfg["cnn_hidden_dim"], cfg["cnn_output_dim"]
    FD = cfg["flatten_dim"]
    ks = jax.random.split(key, 12)
    return {
        "conv_w": uni(ks[0], (OC, C, K, K), C * K * K),
        "conv_b": uni(ks[1], (OC,), C * K * K),
        "fc1_w": uni(ks[2], (CH, FD), FD),
        "fc1_b": uni(ks[3], (CH,), FD),
        "fc2_w": uni(ks[4], (CO, CH), CH),
        "fc2_b": uni(ks[5], (CO,), CH),
        "gru_wih": uni(ks[6], (3 * HID, F), HID),
        "gru_whh": uni(ks[7], (3 * HID, HID), HID),
        "gru_bih": uni(ks[8], (3 * HID,), HID),
        "gru_bhh": uni(ks[9], (3 * HID,), HID),
        "fc_w": uni(ks[10], (OUT, HID), HID),
        "fc_b": uni(ks[11], (OUT,), HID),
    }


def prepare_params(params, cfg, H, W, weight_dtype=MXU_DTYPE):
    """One-time host-side re-layout of PyTorch-format weights for the kernel."""
    C, OC = cfg["in_channels"], cfg["out_channels"]
    K, s = cfg["kernel_size"], cfg["stride"]
    HID, OUT = cfg["rnn_hidden_size"], cfg["output_dim"]
    GP = GATE_PAD
    OH = (H - K) // s + 1
    OW = (W - K) // s + 1
    CW = C * W
    BAND = K * CW

    # Row-banded conv weight (K*C*W, OC*OW), shared across all OH output rows.
    # Input band layout per row oh: lanes [oh*s*C*W, oh*s*C*W + K*C*W) of the
    # (h, c, w)-ordered frame; band-internal index = dh*C*W + c*W + iw.
    cw = np.asarray(params["conv_w"], np.float32)
    Wb = np.zeros((BAND, OC * OW), np.float32)
    for oc in range(OC):
        for ow in range(OW):
            col = oc * OW + ow
            for dh in range(K):
                for c in range(C):
                    for kw in range(K):
                        Wb[dh * CW + c * W + ow * s + kw, col] = cw[oc, c, dh, kw]

    # Conv output columns (after per-oh concat) are ordered (oh, oc, ow); permute
    # fc1's weight rows from nn.Flatten's (oc, oh, ow) order to match (free).
    ohg, ocg, owg = np.meshgrid(np.arange(OH), np.arange(OC), np.arange(OW),
                                indexing="ij")
    flat_idx = (ocg * OH * OW + ohg * OW + owg).reshape(-1)
    fc1_wt = np.asarray(params["fc1_w"], np.float32).T[flat_idx, :]
    conv_b = np.asarray(params["conv_b"], np.float32)[ocg.reshape(-1)][None, :]

    # GRU: lane-pad each gate block 32 -> 128 (exact: padded lanes stay zero).
    def pad_gate_cols(w_t):
        out = np.zeros((w_t.shape[0], 3 * GP), np.float32)
        for g in range(3):
            out[:, g * GP:g * GP + HID] = w_t[:, g * HID:(g + 1) * HID]
        return out

    def pad_gate_bias(b):
        out = np.zeros((1, 3 * GP), np.float32)
        for g in range(3):
            out[0, g * GP:g * GP + HID] = b[g * HID:(g + 1) * HID]
        return out

    wih_pad = pad_gate_cols(np.asarray(params["gru_wih"], np.float32).T)  # (F, 3GP)
    whh_pad = np.zeros((GP, 3 * GP), np.float32)                          # (GP, 3GP)
    whh_pad[:HID, :] = pad_gate_cols(np.asarray(params["gru_whh"], np.float32).T)
    bih_pad = pad_gate_bias(np.asarray(params["gru_bih"], np.float32))
    bhh_pad = pad_gate_bias(np.asarray(params["gru_bhh"], np.float32))

    wo_pad = np.zeros((GP, OUT), np.float32)
    wo_pad[:HID, :] = np.asarray(params["fc_w"], np.float32).T

    wd = weight_dtype
    return dict(
        conv_wb=jnp.asarray(Wb, wd),                          # (K*C*W, OC*OW)
        conv_b=jnp.asarray(conv_b),                           # (1, OC*OH*OW) f32
        fc1_wt=jnp.asarray(fc1_wt, wd),                       # (FD, CH) permuted
        fc1_b=jnp.asarray(np.asarray(params["fc1_b"], np.float32)[None, :]),
        fc2_wt=jnp.asarray(np.asarray(params["fc2_w"], np.float32).T, wd),
        fc2_b=jnp.asarray(np.asarray(params["fc2_b"], np.float32)[None, :]),
        wih_pad=jnp.asarray(wih_pad, wd),                     # (F, 3*GP)
        bih_pad=jnp.asarray(bih_pad),                         # (1, 3*GP) f32
        whh_pad=jnp.asarray(whh_pad, wd),                     # (GP, 3*GP)
        bhh_pad=jnp.asarray(bhh_pad),                         # (1, 3*GP) f32
        wo_pad=jnp.asarray(wo_pad, wd),                       # (GP, OUT)
        fc_b=jnp.asarray(np.asarray(params["fc_b"], np.float32)[None, :]),
    )


# ----------------------------------------------------------------------------
# Pure-JAX reference (verification only, full f32)
# ----------------------------------------------------------------------------
def reference_forward(obs, params, cfg):
    bs, ts, c, h, w = obs.shape
    stride, HID = cfg["stride"], cfg["rnn_hidden_size"]
    x = obs.reshape(bs * ts, c, h, w)
    y = lax.conv_general_dilated(x, params["conv_w"], (stride, stride), "VALID",
                                 dimension_numbers=("NCHW", "OIHW", "NCHW"))
    y = jax.nn.relu(y + params["conv_b"][None, :, None, None])
    flat = y.reshape(bs * ts, -1)
    h1 = jax.nn.relu(flat @ params["fc1_w"].T + params["fc1_b"])
    feat = jax.nn.relu(h1 @ params["fc2_w"].T + params["fc2_b"])
    seq = feat.reshape(bs, ts, -1)
    hstate = jnp.zeros((bs, HID), jnp.float32)
    for t in range(ts):
        xt = seq[:, t, :]
        gi = xt @ params["gru_wih"].T + params["gru_bih"]
        gh = hstate @ params["gru_whh"].T + params["gru_bhh"]
        i_r, i_z, i_n = jnp.split(gi, 3, axis=1)
        h_r, h_z, h_n = jnp.split(gh, 3, axis=1)
        r = jax.nn.sigmoid(i_r + h_r)
        z = jax.nn.sigmoid(i_z + h_z)
        n = jnp.tanh(i_n + r * h_n)
        hstate = (1.0 - z) * n + z * hstate
    return hstate @ params["fc_w"].T + params["fc_b"]


# ----------------------------------------------------------------------------
if __name__ == "__main__":
    cfg = dict(
        in_channels=4, out_channels=8, kernel_size=3, stride=2,
        flatten_dim=8 * 7 * 7,          # (16-3)//2+1 = 7
        cnn_hidden_dim=64, cnn_output_dim=32,
        rnn_input_size=32, rnn_hidden_size=32, rnn_num_layers=1,
        rnn_batch_first=True, output_dim=16,
    )
    bs, ts, c, h, w = 2, 8, cfg["in_channels"], 16, 16

    key = jax.random.PRNGKey(0)
    k_obs, k_par = jax.random.split(key)
    obs = jax.random.normal(k_obs, (bs, ts, c, h, w), jnp.float32)
    params = init_params(k_par, cfg)
    prep = prepare_params(params, cfg, h, w)

    logits = conv_gru_icm_forward(obs, prep, cfg)
    logits = jax.block_until_ready(logits)

    ref = reference_forward(obs, params, cfg)
    # bf16 matmul operands (per perf review) => loosened tolerance vs. the pure-f32
    # reference; with MXU_DTYPE = jnp.float32 this kernel matches to 2e-4.
    tol = 2e-4 if MXU_DTYPE == jnp.float32 else 3e-2
    np.testing.assert_allclose(np.asarray(logits), np.asarray(ref),
                               rtol=tol, atol=tol)
    assert logits.shape == (bs, cfg["output_dim"])
    print("KERNEL_OK")
</pallas_src>

<mosaic_0001>
module attributes {stable_mosaic.version = 11 : i64} {
  func.func @_fused_forward_kernel(%arg0: memref<64x1024xbf16, #tpu.memory_space<vmem>>, %arg1: memref<192x56xbf16, #tpu.memory_space<vmem>>, %arg2: memref<1x392xf32, #tpu.memory_space<vmem>>, %arg3: memref<392x64xbf16, #tpu.memory_space<vmem>>, %arg4: memref<1x64xf32, #tpu.memory_space<vmem>>, %arg5: memref<64x32xbf16, #tpu.memory_space<vmem>>, %arg6: memref<1x32xf32, #tpu.memory_space<vmem>>, %arg7: memref<32x384xbf16, #tpu.memory_space<vmem>>, %arg8: memref<1x384xf32, #tpu.memory_space<vmem>>, %arg9: memref<128x384xbf16, #tpu.memory_space<vmem>>, %arg10: memref<1x384xf32, #tpu.memory_space<vmem>>, %arg11: memref<128x16xbf16, #tpu.memory_space<vmem>>, %arg12: memref<1x16xf32, #tpu.memory_space<vmem>>, %arg13: memref<8x16xf32, #tpu.memory_space<vmem>>) attributes {dimension_semantics = [], scalar_prefetch = 0 : i64, scratch_operands = 0 : i64, tpu.core_type = #tpu.core_type<tc>} {
    %c0 = arith.constant 0 : index
    %c0_0 = arith.constant 0 : index
    %0 = vector.load %arg0[%c0, %c0_0] : memref<64x1024xbf16, #tpu.memory_space<vmem>>, vector<64x1024xbf16>
    %c0_1 = arith.constant 0 : index
    %c0_2 = arith.constant 0 : index
    %1 = vector.load %arg1[%c0_1, %c0_2] : memref<192x56xbf16, #tpu.memory_space<vmem>>, vector<192x56xbf16>
    %2 = vector.extract_strided_slice %0 {offsets = [0, 0], sizes = [64, 192], strides = [1, 1]} : vector<64x1024xbf16> to vector<64x192xbf16>
    %cst = arith.constant dense<0.000000e+00> : vector<64x56xf32>
    %3 = tpu.matmul %2, %1, %cst {dimension_numbers = #tpu.dot_dimension_numbers<[1], [0], [0], [1], [0, 0, 1, 1], [], []>} : vector<64x192xbf16>, vector<192x56xbf16>, vector<64x56xf32> -> vector<64x56xf32>
    %4 = vector.extract_strided_slice %0 {offsets = [0, 128], sizes = [64, 192], strides = [1, 1]} : vector<64x1024xbf16> to vector<64x192xbf16>
    %cst_3 = arith.constant dense<0.000000e+00> : vector<64x56xf32>
    %5 = tpu.matmul %4, %1, %cst_3 {dimension_numbers = #tpu.dot_dimension_numbers<[1], [0], [0], [1], [0, 0, 1, 1], [], []>} : vector<64x192xbf16>, vector<192x56xbf16>, vector<64x56xf32> -> vector<64x56xf32>
    %6 = vector.extract_strided_slice %0 {offsets = [0, 256], sizes = [64, 192], strides = [1, 1]} : vector<64x1024xbf16> to vector<64x192xbf16>
    %cst_4 = arith.constant dense<0.000000e+00> : vector<64x56xf32>
    %7 = tpu.matmul %6, %1, %cst_4 {dimension_numbers = #tpu.dot_dimension_numbers<[1], [0], [0], [1], [0, 0, 1, 1], [], []>} : vector<64x192xbf16>, vector<192x56xbf16>, vector<64x56xf32> -> vector<64x56xf32>
    %8 = vector.extract_strided_slice %0 {offsets = [0, 384], sizes = [64, 192], strides = [1, 1]} : vector<64x1024xbf16> to vector<64x192xbf16>
    %cst_5 = arith.constant dense<0.000000e+00> : vector<64x56xf32>
    %9 = tpu.matmul %8, %1, %cst_5 {dimension_numbers = #tpu.dot_dimension_numbers<[1], [0], [0], [1], [0, 0, 1, 1], [], []>} : vector<64x192xbf16>, vector<192x56xbf16>, vector<64x56xf32> -> vector<64x56xf32>
    %10 = vector.extract_strided_slice %0 {offsets = [0, 512], sizes = [64, 192], strides = [1, 1]} : vector<64x1024xbf16> to vector<64x192xbf16>
    %cst_6 = arith.constant dense<0.000000e+00> : vector<64x56xf32>
    %11 = tpu.matmul %10, %1, %cst_6 {dimension_numbers = #tpu.dot_dimension_numbers<[1], [0], [0], [1], [0, 0, 1, 1], [], []>} : vector<64x192xbf16>, vector<192x56xbf16>, vector<64x56xf32> -> vector<64x56xf32>
    %12 = vector.extract_strided_slice %0 {offsets = [0, 640], sizes = [64, 192], strides = [1, 1]} : vector<64x1024xbf16> to vector<64x192xbf16>
    %cst_7 = arith.constant dense<0.000000e+00> : vector<64x56xf32>
    %13 = tpu.matmul %12, %1, %cst_7 {dimension_numbers = #tpu.dot_dimension_numbers<[1], [0], [0], [1], [0, 0, 1, 1], [], []>} : vector<64x192xbf16>, vector<192x56xbf16>, vector<64x56xf32> -> vector<64x56xf32>
    %14 = vector.extract_strided_slice %0 {offsets = [0, 768], sizes = [64, 192], strides = [1, 1]} : vector<64x1024xbf16> to vector<64x192xbf16>
    %cst_8 = arith.constant dense<0.000000e+00> : vector<64x56xf32>
    %15 = tpu.matmul %14, %1, %cst_8 {dimension_numbers = #tpu.dot_dimension_numbers<[1], [0], [0], [1], [0, 0, 1, 1], [], []>} : vector<64x192xbf16>, vector<192x56xbf16>, vector<64x56xf32> -> vector<64x56xf32>
    %16 = tpu.concatenate %3, %5, %7, %9, %11, %13, %15 in 1 : vector<64x56xf32>, vector<64x56xf32>, vector<64x56xf32>, vector<64x56xf32>, vector<64x56xf32>, vector<64x56xf32>, vector<64x56xf32> -> vector<64x392xf32>
    %c0_9 = arith.constant 0 : index
    %c0_10 = arith.constant 0 : index
    %17 = vector.load %arg2[%c0_9, %c0_10] : memref<1x392xf32, #tpu.memory_space<vmem>>, vector<1x392xf32>
    %18 = vector.broadcast %17 : vector<1x392xf32> to vector<64x392xf32>
    %19 = arith.addf %16, %18 : vector<64x392xf32>
    %cst_11 = arith.constant 0.000000e+00 : f32
    %20 = vector.broadcast %cst_11 : f32 to vector<64x392xf32>
    %21 = arith.maximumf %19, %20 : vector<64x392xf32>
    %22 = arith.truncf %21 : vector<64x392xf32> to vector<64x392xbf16>
    %c0_12 = arith.constant 0 : index
    %c0_13 = arith.constant 0 : index
    %23 = vector.load %arg3[%c0_12, %c0_13] : memref<392x64xbf16, #tpu.memory_space<vmem>>, vector<392x64xbf16>
    %cst_14 = arith.constant dense<0.000000e+00> : vector<64x64xf32>
    %24 = tpu.matmul %22, %23, %cst_14 {dimension_numbers = #tpu.dot_dimension_numbers<[1], [0], [0], [1], [0, 0, 1, 1], [], []>} : vector<64x392xbf16>, vector<392x64xbf16>, vector<64x64xf32> -> vector<64x64xf32>
    %c0_15 = arith.constant 0 : index
    %c0_16 = arith.constant 0 : index
    %25 = vector.load %arg4[%c0_15, %c0_16] : memref<1x64xf32, #tpu.memory_space<vmem>>, vector<1x64xf32>
    %26 = vector.broadcast %25 : vector<1x64xf32> to vector<64x64xf32>
    %27 = arith.addf %24, %26 : vector<64x64xf32>
    %cst_17 = arith.constant 0.000000e+00 : f32
    %28 = vector.broadcast %cst_17 : f32 to vector<64x64xf32>
    %29 = arith.maximumf %27, %28 : vector<64x64xf32>
    %30 = arith.truncf %29 : vector<64x64xf32> to vector<64x64xbf16>
    %c0_18 = arith.constant 0 : index
    %c0_19 = arith.constant 0 : index
    %31 = vector.load %arg5[%c0_18, %c0_19] : memref<64x32xbf16, #tpu.memory_space<vmem>>, vector<64x32xbf16>
    %cst_20 = arith.constant dense<0.000000e+00> : vector<64x32xf32>
    %32 = tpu.matmul %30, %31, %cst_20 {dimension_numbers = #tpu.dot_dimension_numbers<[1], [0], [0], [1], [0, 0, 1, 1], [], []>} : vector<64x64xbf16>, vector<64x32xbf16>, vector<64x32xf32> -> vector<64x32xf32>
    %c0_21 = arith.constant 0 : index
    %c0_22 = arith.constant 0 : index
    %33 = vector.load %arg6[%c0_21, %c0_22] : memref<1x32xf32, #tpu.memory_space<vmem>>, vector<1x32xf32>
    %34 = vector.broadcast %33 : vector<1x32xf32> to vector<64x32xf32>
    %35 = arith.addf %32, %34 : vector<64x32xf32>
    %cst_23 = arith.constant 0.000000e+00 : f32
    %36 = vector.broadcast %cst_23 : f32 to vector<64x32xf32>
    %37 = arith.maximumf %35, %36 : vector<64x32xf32>
    %38 = arith.truncf %37 : vector<64x32xf32> to vector<64x32xbf16>
    %c0_24 = arith.constant 0 : index
    %c0_25 = arith.constant 0 : index
    %39 = vector.load %arg7[%c0_24, %c0_25] : memref<32x384xbf16, #tpu.memory_space<vmem>>, vector<32x384xbf16>
    %cst_26 = arith.constant dense<0.000000e+00> : vector<64x384xf32>
    %40 = tpu.matmul %38, %39, %cst_26 {dimension_numbers = #tpu.dot_dimension_numbers<[1], [0], [0], [1], [0, 0, 1, 1], [], []>} : vector<64x32xbf16>, vector<32x384xbf16>, vector<64x384xf32> -> vector<64x384xf32>
    %c0_27 = arith.constant 0 : index
    %c0_28 = arith.constant 0 : index
    %41 = vector.load %arg8[%c0_27, %c0_28] : memref<1x384xf32, #tpu.memory_space<vmem>>, vector<1x384xf32>
    %42 = vector.broadcast %41 : vector<1x384xf32> to vector<64x384xf32>
    %43 = arith.addf %40, %42 : vector<64x384xf32>
    %c0_29 = arith.constant 0 : index
    %c0_30 = arith.constant 0 : index
    %44 = vector.load %arg9[%c0_29, %c0_30] : memref<128x384xbf16, #tpu.memory_space<vmem>>, vector<128x384xbf16>
    %c0_31 = arith.constant 0 : index
    %c0_32 = arith.constant 0 : index
    %45 = vector.load %arg10[%c0_31, %c0_32] : memref<1x384xf32, #tpu.memory_space<vmem>>, vector<1x384xf32>
    %cst_33 = arith.constant 0.000000e+00 : f32
    %46 = vector.broadcast %cst_33 : f32 to vector<8x128xf32>
    %47 = vector.extract_strided_slice %43 {offsets = [0, 0], sizes = [8, 384], strides = [1, 1]} : vector<64x384xf32> to vector<8x384xf32>
    %48 = arith.truncf %46 : vector<8x128xf32> to vector<8x128xbf16>
    %cst_34 = arith.constant dense<0.000000e+00> : vector<8x384xf32>
    %49 = tpu.matmul %48, %44, %cst_34 {dimension_numbers = #tpu.dot_dimension_numbers<[1], [0], [0], [1], [0, 0, 1, 1], [], []>} : vector<8x128xbf16>, vector<128x384xbf16>, vector<8x384xf32> -> vector<8x384xf32>
    %50 = vector.broadcast %45 : vector<1x384xf32> to vector<8x384xf32>
    %51 = arith.addf %49, %50 : vector<8x384xf32>
    %52 = vector.extract_strided_slice %47 {offsets = [0, 0], sizes = [8, 128], strides = [1, 1]} : vector<8x384xf32> to vector<8x128xf32>
    %53 = vector.extract_strided_slice %51 {offsets = [0, 0], sizes = [8, 128], strides = [1, 1]} : vector<8x384xf32> to vector<8x128xf32>
    %54 = arith.addf %52, %53 : vector<8x128xf32>
    %55 = arith.negf %54 : vector<8x128xf32>
    %56 = math.exp %55 : vector<8x128xf32>
    %cst_35 = arith.constant 1.000000e+00 : f32
    %57 = vector.broadcast %cst_35 : f32 to vector<8x128xf32>
    %58 = arith.addf %57, %56 : vector<8x128xf32>
    %59 = arith.divf %57, %58 : vector<8x128xf32>
    %60 = vector.extract_strided_slice %47 {offsets = [0, 128], sizes = [8, 128], strides = [1, 1]} : vector<8x384xf32> to vector<8x128xf32>
    %61 = vector.extract_strided_slice %51 {offsets = [0, 128], sizes = [8, 128], strides = [1, 1]} : vector<8x384xf32> to vector<8x128xf32>
    %62 = arith.addf %60, %61 : vector<8x128xf32>
    %63 = arith.negf %62 : vector<8x128xf32>
    %64 = math.exp %63 : vector<8x128xf32>
    %cst_36 = arith.constant 1.000000e+00 : f32
    %65 = vector.broadcast %cst_36 : f32 to vector<8x128xf32>
    %66 = arith.addf %65, %64 : vector<8x128xf32>
    %67 = arith.divf %65, %66 : vector<8x128xf32>
    %68 = vector.extract_strided_slice %47 {offsets = [0, 256], sizes = [8, 128], strides = [1, 1]} : vector<8x384xf32> to vector<8x128xf32>
    %69 = vector.extract_strided_slice %51 {offsets = [0, 256], sizes = [8, 128], strides = [1, 1]} : vector<8x384xf32> to vector<8x128xf32>
    %70 = arith.mulf %59, %69 : vector<8x128xf32>
    %71 = arith.addf %68, %70 : vector<8x128xf32>
    %72 = math.tanh %71 : vector<8x128xf32>
    %cst_37 = arith.constant 1.000000e+00 : f32
    %73 = vector.broadcast %cst_37 : f32 to vector<8x128xf32>
    %74 = arith.subf %73, %67 : vector<8x128xf32>
    %75 = arith.mulf %74, %72 : vector<8x128xf32>
    %76 = arith.mulf %67, %46 : vector<8x128xf32>
    %77 = arith.addf %75, %76 : vector<8x128xf32>
    %78 = vector.extract_strided_slice %43 {offsets = [8, 0], sizes = [8, 384], strides = [1, 1]} : vector<64x384xf32> to vector<8x384xf32>
    %79 = arith.truncf %77 : vector<8x128xf32> to vector<8x128xbf16>
    %cst_38 = arith.constant dense<0.000000e+00> : vector<8x384xf32>
    %80 = tpu.matmul %79, %44, %cst_38 {dimension_numbers = #tpu.dot_dimension_numbers<[1], [0], [0], [1], [0, 0, 1, 1], [], []>} : vector<8x128xbf16>, vector<128x384xbf16>, vector<8x384xf32> -> vector<8x384xf32>
    %81 = vector.broadcast %45 : vector<1x384xf32> to vector<8x384xf32>
    %82 = arith.addf %80, %81 : vector<8x384xf32>
    %83 = vector.extract_strided_slice %78 {offsets = [0, 0], sizes = [8, 128], strides = [1, 1]} : vector<8x384xf32> to vector<8x128xf32>
    %84 = vector.extract_strided_slice %82 {offsets = [0, 0], sizes = [8, 128], strides = [1, 1]} : vector<8x384xf32> to vector<8x128xf32>
    %85 = arith.addf %83, %84 : vector<8x128xf32>
    %86 = arith.negf %85 : vector<8x128xf32>
    %87 = math.exp %86 : vector<8x128xf32>
    %cst_39 = arith.constant 1.000000e+00 : f32
    %88 = vector.broadcast %cst_39 : f32 to vector<8x128xf32>
    %89 = arith.addf %88, %87 : vector<8x128xf32>
    %90 = arith.divf %88, %89 : vector<8x128xf32>
    %91 = vector.extract_strided_slice %78 {offsets = [0, 128], sizes = [8, 128], strides = [1, 1]} : vector<8x384xf32> to vector<8x128xf32>
    %92 = vector.extract_strided_slice %82 {offsets = [0, 128], sizes = [8, 128], strides = [1, 1]} : vector<8x384xf32> to vector<8x128xf32>
    %93 = arith.addf %91, %92 : vector<8x128xf32>
    %94 = arith.negf %93 : vector<8x128xf32>
    %95 = math.exp %94 : vector<8x128xf32>
    %cst_40 = arith.constant 1.000000e+00 : f32
    %96 = vector.broadcast %cst_40 : f32 to vector<8x128xf32>
    %97 = arith.addf %96, %95 : vector<8x128xf32>
    %98 = arith.divf %96, %97 : vector<8x128xf32>
    %99 = vector.extract_strided_slice %78 {offsets = [0, 256], sizes = [8, 128], strides = [1, 1]} : vector<8x384xf32> to vector<8x128xf32>
    %100 = vector.extract_strided_slice %82 {offsets = [0, 256], sizes = [8, 128], strides = [1, 1]} : vector<8x384xf32> to vector<8x128xf32>
    %101 = arith.mulf %90, %100 : vector<8x128xf32>
    %102 = arith.addf %99, %101 : vector<8x128xf32>
    %103 = math.tanh %102 : vector<8x128xf32>
    %cst_41 = arith.constant 1.000000e+00 : f32
    %104 = vector.broadcast %cst_41 : f32 to vector<8x128xf32>
    %105 = arith.subf %104, %98 : vector<8x128xf32>
    %106 = arith.mulf %105, %103 : vector<8x128xf32>
    %107 = arith.mulf %98, %77 : vector<8x128xf32>
    %108 = arith.addf %106, %107 : vector<8x128xf32>
    %109 = vector.extract_strided_slice %43 {offsets = [16, 0], sizes = [8, 384], strides = [1, 1]} : vector<64x384xf32> to vector<8x384xf32>
    %110 = arith.truncf %108 : vector<8x128xf32> to vector<8x128xbf16>
    %cst_42 = arith.constant dense<0.000000e+00> : vector<8x384xf32>
    %111 = tpu.matmul %110, %44, %cst_42 {dimension_numbers = #tpu.dot_dimension_numbers<[1], [0], [0], [1], [0, 0, 1, 1], [], []>} : vector<8x128xbf16>, vector<128x384xbf16>, vector<8x384xf32> -> vector<8x384xf32>
    %112 = vector.broadcast %45 : vector<1x384xf32> to vector<8x384xf32>
    %113 = arith.addf %111, %112 : vector<8x384xf32>
    %114 = vector.extract_strided_slice %109 {offsets = [0, 0], sizes = [8, 128], strides = [1, 1]} : vector<8x384xf32> to vector<8x128xf32>
    %115 = vector.extract_strided_slice %113 {offsets = [0, 0], sizes = [8, 128], strides = [1, 1]} : vector<8x384xf32> to vector<8x128xf32>
    %116 = arith.addf %114, %115 : vector<8x128xf32>
    %117 = arith.negf %116 : vector<8x128xf32>
    %118 = math.exp %117 : vector<8x128xf32>
    %cst_43 = arith.constant 1.000000e+00 : f32
    %119 = vector.broadcast %cst_43 : f32 to vector<8x128xf32>
    %120 = arith.addf %119, %118 : vector<8x128xf32>
    %121 = arith.divf %119, %120 : vector<8x128xf32>
    %122 = vector.extract_strided_slice %109 {offsets = [0, 128], sizes = [8, 128], strides = [1, 1]} : vector<8x384xf32> to vector<8x128xf32>
    %123 = vector.extract_strided_slice %113 {offsets = [0, 128], sizes = [8, 128], strides = [1, 1]} : vector<8x384xf32> to vector<8x128xf32>
    %124 = arith.addf %122, %123 : vector<8x128xf32>
    %125 = arith.negf %124 : vector<8x128xf32>
    %126 = math.exp %125 : vector<8x128xf32>
    %cst_44 = arith.constant 1.000000e+00 : f32
    %127 = vector.broadcast %cst_44 : f32 to vector<8x128xf32>
    %128 = arith.addf %127, %126 : vector<8x128xf32>
    %129 = arith.divf %127, %128 : vector<8x128xf32>
    %130 = vector.extract_strided_slice %109 {offsets = [0, 256], sizes = [8, 128], strides = [1, 1]} : vector<8x384xf32> to vector<8x128xf32>
    %131 = vector.extract_strided_slice %113 {offsets = [0, 256], sizes = [8, 128], strides = [1, 1]} : vector<8x384xf32> to vector<8x128xf32>
    %132 = arith.mulf %121, %131 : vector<8x128xf32>
    %133 = arith.addf %130, %132 : vector<8x128xf32>
    %134 = math.tanh %133 : vector<8x128xf32>
    %cst_45 = arith.constant 1.000000e+00 : f32
    %135 = vector.broadcast %cst_45 : f32 to vector<8x128xf32>
    %136 = arith.subf %135, %129 : vector<8x128xf32>
    %137 = arith.mulf %136, %134 : vector<8x128xf32>
    %138 = arith.mulf %129, %108 : vector<8x128xf32>
    %139 = arith.addf %137, %138 : vector<8x128xf32>
    %140 = vector.extract_strided_slice %43 {offsets = [24, 0], sizes = [8, 384], strides = [1, 1]} : vector<64x384xf32> to vector<8x384xf32>
    %141 = arith.truncf %139 : vector<8x128xf32> to vector<8x128xbf16>
    %cst_46 = arith.constant dense<0.000000e+00> : vector<8x384xf32>
    %142 = tpu.matmul %141, %44, %cst_46 {dimension_numbers = #tpu.dot_dimension_numbers<[1], [0], [0], [1], [0, 0, 1, 1], [], []>} : vector<8x128xbf16>, vector<128x384xbf16>, vector<8x384xf32> -> vector<8x384xf32>
    %143 = vector.broadcast %45 : vector<1x384xf32> to vector<8x384xf32>
    %144 = arith.addf %142, %143 : vector<8x384xf32>
    %145 = vector.extract_strided_slice %140 {offsets = [0, 0], sizes = [8, 128], strides = [1, 1]} : vector<8x384xf32> to vector<8x128xf32>
    %146 = vector.extract_strided_slice %144 {offsets = [0, 0], sizes = [8, 128], strides = [1, 1]} : vector<8x384xf32> to vector<8x128xf32>
    %147 = arith.addf %145, %146 : vector<8x128xf32>
    %148 = arith.negf %147 : vector<8x128xf32>
    %149 = math.exp %148 : vector<8x128xf32>
    %cst_47 = arith.constant 1.000000e+00 : f32
    %150 = vector.broadcast %cst_47 : f32 to vector<8x128xf32>
    %151 = arith.addf %150, %149 : vector<8x128xf32>
    %152 = arith.divf %150, %151 : vector<8x128xf32>
    %153 = vector.extract_strided_slice %140 {offsets = [0, 128], sizes = [8, 128], strides = [1, 1]} : vector<8x384xf32> to vector<8x128xf32>
    %154 = vector.extract_strided_slice %144 {offsets = [0, 128], sizes = [8, 128], strides = [1, 1]} : vector<8x384xf32> to vector<8x128xf32>
    %155 = arith.addf %153, %154 : vector<8x128xf32>
    %156 = arith.negf %155 : vector<8x128xf32>
    %157 = math.exp %156 : vector<8x128xf32>
    %cst_48 = arith.constant 1.000000e+00 : f32
    %158 = vector.broadcast %cst_48 : f32 to vector<8x128xf32>
    %159 = arith.addf %158, %157 : vector<8x128xf32>
    %160 = arith.divf %158, %159 : vector<8x128xf32>
    %161 = vector.extract_strided_slice %140 {offsets = [0, 256], sizes = [8, 128], strides = [1, 1]} : vector<8x384xf32> to vector<8x128xf32>
    %162 = vector.extract_strided_slice %144 {offsets = [0, 256], sizes = [8, 128], strides = [1, 1]} : vector<8x384xf32> to vector<8x128xf32>
    %163 = arith.mulf %152, %162 : vector<8x128xf32>
    %164 = arith.addf %161, %163 : vector<8x128xf32>
    %165 = math.tanh %164 : vector<8x128xf32>
    %cst_49 = arith.constant 1.000000e+00 : f32
    %166 = vector.broadcast %cst_49 : f32 to vector<8x128xf32>
    %167 = arith.subf %166, %160 : vector<8x128xf32>
    %168 = arith.mulf %167, %165 : vector<8x128xf32>
    %169 = arith.mulf %160, %139 : vector<8x128xf32>
    %170 = arith.addf %168, %169 : vector<8x128xf32>
    %171 = vector.extract_strided_slice %43 {offsets = [32, 0], sizes = [8, 384], strides = [1, 1]} : vector<64x384xf32> to vector<8x384xf32>
    %172 = arith.truncf %170 : vector<8x128xf32> to vector<8x128xbf16>
    %cst_50 = arith.constant dense<0.000000e+00> : vector<8x384xf32>
    %173 = tpu.matmul %172, %44, %cst_50 {dimension_numbers = #tpu.dot_dimension_numbers<[1], [0], [0], [1], [0, 0, 1, 1], [], []>} : vector<8x128xbf16>, vector<128x384xbf16>, vector<8x384xf32> -> vector<8x384xf32>
    %174 = vector.broadcast %45 : vector<1x384xf32> to vector<8x384xf32>
    %175 = arith.addf %173, %174 : vector<8x384xf32>
    %176 = vector.extract_strided_slice %171 {offsets = [0, 0], sizes = [8, 128], strides = [1, 1]} : vector<8x384xf32> to vector<8x128xf32>
    %177 = vector.extract_strided_slice %175 {offsets = [0, 0], sizes = [8, 128], strides = [1, 1]} : vector<8x384xf32> to vector<8x128xf32>
    %178 = arith.addf %176, %177 : vector<8x128xf32>
    %179 = arith.negf %178 : vector<8x128xf32>
    %180 = math.exp %179 : vector<8x128xf32>
    %cst_51 = arith.constant 1.000000e+00 : f32
    %181 = vector.broadcast %cst_51 : f32 to vector<8x128xf32>
    %182 = arith.addf %181, %180 : vector<8x128xf32>
    %183 = arith.divf %181, %182 : vector<8x128xf32>
    %184 = vector.extract_strided_slice %171 {offsets = [0, 128], sizes = [8, 128], strides = [1, 1]} : vector<8x384xf32> to vector<8x128xf32>
    %185 = vector.extract_strided_slice %175 {offsets = [0, 128], sizes = [8, 128], strides = [1, 1]} : vector<8x384xf32> to vector<8x128xf32>
    %186 = arith.addf %184, %185 : vector<8x128xf32>
    %187 = arith.negf %186 : vector<8x128xf32>
    %188 = math.exp %187 : vector<8x128xf32>
    %cst_52 = arith.constant 1.000000e+00 : f32
    %189 = vector.broadcast %cst_52 : f32 to vector<8x128xf32>
    %190 = arith.addf %189, %188 : vector<8x128xf32>
    %191 = arith.divf %189, %190 : vector<8x128xf32>
    %192 = vector.extract_strided_slice %171 {offsets = [0, 256], sizes = [8, 128], strides = [1, 1]} : vector<8x384xf32> to vector<8x128xf32>
    %193 = vector.extract_strided_slice %175 {offsets = [0, 256], sizes = [8, 128], strides = [1, 1]} : vector<8x384xf32> to vector<8x128xf32>
    %194 = arith.mulf %183, %193 : vector<8x128xf32>
    %195 = arith.addf %192, %194 : vector<8x128xf32>
    %196 = math.tanh %195 : vector<8x128xf32>
    %cst_53 = arith.constant 1.000000e+00 : f32
    %197 = vector.broadcast %cst_53 : f32 to vector<8x128xf32>
    %198 = arith.subf %197, %191 : vector<8x128xf32>
    %199 = arith.mulf %198, %196 : vector<8x128xf32>
    %200 = arith.mulf %191, %170 : vector<8x128xf32>
    %201 = arith.addf %199, %200 : vector<8x128xf32>
    %202 = vector.extract_strided_slice %43 {offsets = [40, 0], sizes = [8, 384], strides = [1, 1]} : vector<64x384xf32> to vector<8x384xf32>
    %203 = arith.truncf %201 : vector<8x128xf32> to vector<8x128xbf16>
    %cst_54 = arith.constant dense<0.000000e+00> : vector<8x384xf32>
    %204 = tpu.matmul %203, %44, %cst_54 {dimension_numbers = #tpu.dot_dimension_numbers<[1], [0], [0], [1], [0, 0, 1, 1], [], []>} : vector<8x128xbf16>, vector<128x384xbf16>, vector<8x384xf32> -> vector<8x384xf32>
    %205 = vector.broadcast %45 : vector<1x384xf32> to vector<8x384xf32>
    %206 = arith.addf %204, %205 : vector<8x384xf32>
    %207 = vector.extract_strided_slice %202 {offsets = [0, 0], sizes = [8, 128], strides = [1, 1]} : vector<8x384xf32> to vector<8x128xf32>
    %208 = vector.extract_strided_slice %206 {offsets = [0, 0], sizes = [8, 128], strides = [1, 1]} : vector<8x384xf32> to vector<8x128xf32>
    %209 = arith.addf %207, %208 : vector<8x128xf32>
    %210 = arith.negf %209 : vector<8x128xf32>
    %211 = math.exp %210 : vector<8x128xf32>
    %cst_55 = arith.constant 1.000000e+00 : f32
    %212 = vector.broadcast %cst_55 : f32 to vector<8x128xf32>
    %213 = arith.addf %212, %211 : vector<8x128xf32>
    %214 = arith.divf %212, %213 : vector<8x128xf32>
    %215 = vector.extract_strided_slice %202 {offsets = [0, 128], sizes = [8, 128], strides = [1, 1]} : vector<8x384xf32> to vector<8x128xf32>
    %216 = vector.extract_strided_slice %206 {offsets = [0, 128], sizes = [8, 128], strides = [1, 1]} : vector<8x384xf32> to vector<8x128xf32>
    %217 = arith.addf %215, %216 : vector<8x128xf32>
    %218 = arith.negf %217 : vector<8x128xf32>
    %219 = math.exp %218 : vector<8x128xf32>
    %cst_56 = arith.constant 1.000000e+00 : f32
    %220 = vector.broadcast %cst_56 : f32 to vector<8x128xf32>
    %221 = arith.addf %220, %219 : vector<8x128xf32>
    %222 = arith.divf %220, %221 : vector<8x128xf32>
    %223 = vector.extract_strided_slice %202 {offsets = [0, 256], sizes = [8, 128], strides = [1, 1]} : vector<8x384xf32> to vector<8x128xf32>
    %224 = vector.extract_strided_slice %206 {offsets = [0, 256], sizes = [8, 128], strides = [1, 1]} : vector<8x384xf32> to vector<8x128xf32>
    %225 = arith.mulf %214, %224 : vector<8x128xf32>
    %226 = arith.addf %223, %225 : vector<8x128xf32>
    %227 = math.tanh %226 : vector<8x128xf32>
    %cst_57 = arith.constant 1.000000e+00 : f32
    %228 = vector.broadcast %cst_57 : f32 to vector<8x128xf32>
    %229 = arith.subf %228, %222 : vector<8x128xf32>
    %230 = arith.mulf %229, %227 : vector<8x128xf32>
    %231 = arith.mulf %222, %201 : vector<8x128xf32>
    %232 = arith.addf %230, %231 : vector<8x128xf32>
    %233 = vector.extract_strided_slice %43 {offsets = [48, 0], sizes = [8, 384], strides = [1, 1]} : vector<64x384xf32> to vector<8x384xf32>
    %234 = arith.truncf %232 : vector<8x128xf32> to vector<8x128xbf16>
    %cst_58 = arith.constant dense<0.000000e+00> : vector<8x384xf32>
    %235 = tpu.matmul %234, %44, %cst_58 {dimension_numbers = #tpu.dot_dimension_numbers<[1], [0], [0], [1], [0, 0, 1, 1], [], []>} : vector<8x128xbf16>, vector<128x384xbf16>, vector<8x384xf32> -> vector<8x384xf32>
    %236 = vector.broadcast %45 : vector<1x384xf32> to vector<8x384xf32>
    %237 = arith.addf %235, %236 : vector<8x384xf32>
    %238 = vector.extract_strided_slice %233 {offsets = [0, 0], sizes = [8, 128], strides = [1, 1]} : vector<8x384xf32> to vector<8x128xf32>
    %239 = vector.extract_strided_slice %237 {offsets = [0, 0], sizes = [8, 128], strides = [1, 1]} : vector<8x384xf32> to vector<8x128xf32>
    %240 = arith.addf %238, %239 : vector<8x128xf32>
    %241 = arith.negf %240 : vector<8x128xf32>
    %242 = math.exp %241 : vector<8x128xf32>
    %cst_59 = arith.constant 1.000000e+00 : f32
    %243 = vector.broadcast %cst_59 : f32 to vector<8x128xf32>
    %244 = arith.addf %243, %242 : vector<8x128xf32>
    %245 = arith.divf %243, %244 : vector<8x128xf32>
    %246 = vector.extract_strided_slice %233 {offsets = [0, 128], sizes = [8, 128], strides = [1, 1]} : vector<8x384xf32> to vector<8x128xf32>
    %247 = vector.extract_strided_slice %237 {offsets = [0, 128], sizes = [8, 128], strides = [1, 1]} : vector<8x384xf32> to vector<8x128xf32>
    %248 = arith.addf %246, %247 : vector<8x128xf32>
    %249 = arith.negf %248 : vector<8x128xf32>
    %250 = math.exp %249 : vector<8x128xf32>
    %cst_60 = arith.constant 1.000000e+00 : f32
    %251 = vector.broadcast %cst_60 : f32 to vector<8x128xf32>
    %252 = arith.addf %251, %250 : vector<8x128xf32>
    %253 = arith.divf %251, %252 : vector<8x128xf32>
    %254 = vector.extract_strided_slice %233 {offsets = [0, 256], sizes = [8, 128], strides = [1, 1]} : vector<8x384xf32> to vector<8x128xf32>
    %255 = vector.extract_strided_slice %237 {offsets = [0, 256], sizes = [8, 128], strides = [1, 1]} : vector<8x384xf32> to vector<8x128xf32>
    %256 = arith.mulf %245, %255 : vector<8x128xf32>
    %257 = arith.addf %254, %256 : vector<8x128xf32>
    %258 = math.tanh %257 : vector<8x128xf32>
    %cst_61 = arith.constant 1.000000e+00 : f32
    %259 = vector.broadcast %cst_61 : f32 to vector<8x128xf32>
    %260 = arith.subf %259, %253 : vector<8x128xf32>
    %261 = arith.mulf %260, %258 : vector<8x128xf32>
    %262 = arith.mulf %253, %232 : vector<8x128xf32>
    %263 = arith.addf %261, %262 : vector<8x128xf32>
    %264 = vector.extract_strided_slice %43 {offsets = [56, 0], sizes = [8, 384], strides = [1, 1]} : vector<64x384xf32> to vector<8x384xf32>
    %265 = arith.truncf %263 : vector<8x128xf32> to vector<8x128xbf16>
    %cst_62 = arith.constant dense<0.000000e+00> : vector<8x384xf32>
    %266 = tpu.matmul %265, %44, %cst_62 {dimension_numbers = #tpu.dot_dimension_numbers<[1], [0], [0], [1], [0, 0, 1, 1], [], []>} : vector<8x128xbf16>, vector<128x384xbf16>, vector<8x384xf32> -> vector<8x384xf32>
    %267 = vector.broadcast %45 : vector<1x384xf32> to vector<8x384xf32>
    %268 = arith.addf %266, %267 : vector<8x384xf32>
    %269 = vector.extract_strided_slice %264 {offsets = [0, 0], sizes = [8, 128], strides = [1, 1]} : vector<8x384xf32> to vector<8x128xf32>
    %270 = vector.extract_strided_slice %268 {offsets = [0, 0], sizes = [8, 128], strides = [1, 1]} : vector<8x384xf32> to vector<8x128xf32>
    %271 = arith.addf %269, %270 : vector<8x128xf32>
    %272 = arith.negf %271 : vector<8x128xf32>
    %273 = math.exp %272 : vector<8x128xf32>
    %cst_63 = arith.constant 1.000000e+00 : f32
    %274 = vector.broadcast %cst_63 : f32 to vector<8x128xf32>
    %275 = arith.addf %274, %273 : vector<8x128xf32>
    %276 = arith.divf %274, %275 : vector<8x128xf32>
    %277 = vector.extract_strided_slice %264 {offsets = [0, 128], sizes = [8, 128], strides = [1, 1]} : vector<8x384xf32> to vector<8x128xf32>
    %278 = vector.extract_strided_slice %268 {offsets = [0, 128], sizes = [8, 128], strides = [1, 1]} : vector<8x384xf32> to vector<8x128xf32>
    %279 = arith.addf %277, %278 : vector<8x128xf32>
    %280 = arith.negf %279 : vector<8x128xf32>
    %281 = math.exp %280 : vector<8x128xf32>
    %cst_64 = arith.constant 1.000000e+00 : f32
    %282 = vector.broadcast %cst_64 : f32 to vector<8x128xf32>
    %283 = arith.addf %282, %281 : vector<8x128xf32>
    %284 = arith.divf %282, %283 : vector<8x128xf32>
    %285 = vector.extract_strided_slice %264 {offsets = [0, 256], sizes = [8, 128], strides = [1, 1]} : vector<8x384xf32> to vector<8x128xf32>
    %286 = vector.extract_strided_slice %268 {offsets = [0, 256], sizes = [8, 128], strides = [1, 1]} : vector<8x384xf32> to vector<8x128xf32>
    %287 = arith.mulf %276, %286 : vector<8x128xf32>
    %288 = arith.addf %285, %287 : vector<8x128xf32>
    %289 = math.tanh %288 : vector<8x128xf32>
    %cst_65 = arith.constant 1.000000e+00 : f32
    %290 = vector.broadcast %cst_65 : f32 to vector<8x128xf32>
    %291 = arith.subf %290, %284 : vector<8x128xf32>
    %292 = arith.mulf %291, %289 : vector<8x128xf32>
    %293 = arith.mulf %284, %263 : vector<8x128xf32>
    %294 = arith.addf %292, %293 : vector<8x128xf32>
    %295 = arith.truncf %294 : vector<8x128xf32> to vector<8x128xbf16>
    %c0_66 = arith.constant 0 : index
    %c0_67 = arith.constant 0 : index
    %296 = vector.load %arg11[%c0_66, %c0_67] : memref<128x16xbf16, #tpu.memory_space<vmem>>, vector<128x16xbf16>
    %cst_68 = arith.constant dense<0.000000e+00> : vector<8x16xf32>
    %297 = tpu.matmul %295, %296, %cst_68 {dimension_numbers = #tpu.dot_dimension_numbers<[1], [0], [0], [1], [0, 0, 1, 1], [], []>} : vector<8x128xbf16>, vector<128x16xbf16>, vector<8x16xf32> -> vector<8x16xf32>
    %c0_69 = arith.constant 0 : index
    %c0_70 = arith.constant 0 : index
    %298 = vector.load %arg12[%c0_69, %c0_70] : memref<1x16xf32, #tpu.memory_space<vmem>>, vector<1x16xf32>
    %299 = vector.broadcast %298 : vector<1x16xf32> to vector<8x16xf32>
    %300 = arith.addf %297, %299 : vector<8x16xf32>
    %c0_71 = arith.constant 0 : index
    %c0_72 = arith.constant 0 : index
    %301 = vector.load %arg13[%c0_71, %c0_72] : memref<8x16xf32, #tpu.memory_space<vmem>>, vector<8x16xf32>
    tpu.vector_store %arg13[%c0_71, %c0_72], %300 {strides = array<i32>} : memref<8x16xf32, #tpu.memory_space<vmem>>, vector<8x16xf32>,
    return
  }
}

</mosaic_0001>

<llo_original>
// kernel: tpu_custom_call.1
$region0: #{tpu_custom_call.1}
  #allocation0 [shape = 'u32[]', space=smem, size = 0x4, offset = 0x4, fixed_abs, tag = 'smem constant byte address 0x4 - core index']
  #allocation1 [shape = 'u32[144,128]{1,0:T(1,128)}', space=vmem, size = 0x12000, scoped, tag = 'internal scratch']
  %s0 = inlined_call_operand.vmem [shape: bf16[64,1024], index: 0, kind: input, shape index: {}]
  %s1 = inlined_call_operand.vmem [shape: bf16[192,56], index: 1, kind: input, shape index: {}]
  %s2 = inlined_call_operand.vmem [shape: f32[1,392], index: 2, kind: input, shape index: {}]
  %s3 = inlined_call_operand.vmem [shape: bf16[392,64], index: 3, kind: input, shape index: {}]
  %s4 = inlined_call_operand.vmem [shape: f32[1,64], index: 4, kind: input, shape index: {}]
  %s5 = inlined_call_operand.vmem [shape: bf16[64,32], index: 5, kind: input, shape index: {}]
  %s6 = inlined_call_operand.vmem [shape: f32[1,32], index: 6, kind: input, shape index: {}]
  %s7 = inlined_call_operand.hbm [shape: bf16[32,384], index: 7, kind: input, shape index: {}]
  %s8 = inlined_call_operand.vmem [shape: f32[1,384], index: 8, kind: input, shape index: {}]
  %s9 = inlined_call_operand.vmem [shape: bf16[128,384], index: 9, kind: input, shape index: {}]
  %s10 = inlined_call_operand.vmem [shape: f32[1,384], index: 10, kind: input, shape index: {}]
  %s11 = inlined_call_operand.vmem [shape: bf16[128,16], index: 11, kind: input, shape index: {}]
  %s12 = inlined_call_operand.vmem [shape: f32[1,16], index: 12, kind: input, shape index: {}]
  %s13 = inlined_call_operand.hbm [shape: f32[8,16], index: 13, kind: output, shape index: {}]
  %s14 = sld [smem:[#allocation0]]
  $region66: #{tpu_custom_call.1} parent=0
    _
  %s16 = ssub.s32 1, %s14
  %s17 = scalar_select 0, %s16, %s14
  $region1: #{tpu_custom_call.1} parent=0
    #allocation2 [shape = 'u8[24576]{0}', space=vmem, size = 0x6000, scoped, tag = 'input window, operand 7, single buffered']
    #allocation3 [shape = 's32[1]{0}', space=sflag, size = 0x4, scoped, tag = 'scoped memory for tpu_custom_call.1']
    #allocation4 [shape = 's32[1]{0}', space=sflag, size = 0x4, scoped, tag = 'scoped memory for tpu_custom_call.1']
    #allocation5 [shape = 'u8[4096]{0}', space=vmem, size = 0x1000, scoped, tag = 'output window, operand 0, single buffered']
    %18 = vsyncpa [#allocation3], 0
    %19 = vsyncpa [#allocation4], 0
    // Predicated region
    $region2: #{tpu_custom_call.1} parent=1 // pred_check
      _
    $region3: #{tpu_custom_call.1} parent=1 // pred_check_branch
      %21 = sbr.rel (0) target = $region5
    $region4: #{tpu_custom_call.1} parent=1 // pred_region
      _
    $region5: #{tpu_custom_call.1} parent=1 // pred_fallthru
      _
    // Predicated region
    $region6: #{tpu_custom_call.1} parent=1 // pred_check
      _
    $region7: #{tpu_custom_call.1} parent=1 // pred_check_branch
      %23 = sbr.rel (0) target = $region9
    $region8: #{tpu_custom_call.1} parent=1 // pred_region
      _
    $region9: #{tpu_custom_call.1} parent=1 // pred_fallthru
      _
    // Predicated region
    $region10: #{tpu_custom_call.1} parent=1 // pred_check
      _
    $region11: #{tpu_custom_call.1} parent=1 // pred_check_branch
      %25 = sbr.rel (0) target = $region13
    $region12: #{tpu_custom_call.1} parent=1 // pred_region
      _
    $region13: #{tpu_custom_call.1} parent=1 // pred_fallthru
      _
    // Predicated region
    $region14: #{tpu_custom_call.1} parent=1 // pred_check
      _
    $region15: #{tpu_custom_call.1} parent=1 // pred_check_branch
      %27 = sbr.rel (0) target = $region17
    $region16: #{tpu_custom_call.1} parent=1 // pred_region
      _
    $region17: #{tpu_custom_call.1} parent=1 // pred_fallthru
      _
    // Predicated region
    $region18: #{tpu_custom_call.1} parent=1 // pred_check
      _
    $region19: #{tpu_custom_call.1} parent=1 // pred_check_branch
      %29 = sbr.rel (0) target = $region21
    $region20: #{tpu_custom_call.1} parent=1 // pred_region
      _
    $region21: #{tpu_custom_call.1} parent=1 // pred_fallthru
      _
    // Predicated region
    $region22: #{tpu_custom_call.1} parent=1 // pred_check
      _
    $region23: #{tpu_custom_call.1} parent=1 // pred_check_branch
      %31 = sbr.rel (0) target = $region25
    $region24: #{tpu_custom_call.1} parent=1 // pred_region
      _
    $region25: #{tpu_custom_call.1} parent=1 // pred_fallthru
      _
    // Predicated region
    $region26: #{tpu_custom_call.1} parent=1 // pred_check
      _
    $region27: #{tpu_custom_call.1} parent=1 // pred_check_branch
      %33 = sbr.rel (0) target = $region29
    $region28: #{tpu_custom_call.1} parent=1 // pred_region
      _
    $region29: #{tpu_custom_call.1} parent=1 // pred_fallthru
      _
    // Predicated region
    $region30: #{tpu_custom_call.1} parent=1 // pred_check
      _
    $region31: #{tpu_custom_call.1} parent=1 // pred_check_branch
      %35 = sbr.rel (0) target = $region33
    $region32: #{tpu_custom_call.1} parent=1 // pred_region
      %s37 = ssub.s32 768, 768
      %38 = vsyncadd [#allocation3], %s37
      %s39 = sshll.u32 [#allocation2], 4
      %s40 = int_to_ptr.vmem [resolvable:$true] %s39
      %45 = dma.hbm_to_vmem [thread:$0]  %s7, 768, %s40, [#allocation3], 192, 192, 12
    $region33: #{tpu_custom_call.1} parent=1 // pred_fallthru
      _
    // Predicated region
    $region34: #{tpu_custom_call.1} parent=1 // pred_check
      _
    $region35: #{tpu_custom_call.1} parent=1 // pred_check_branch
      %47 = sbr.rel (0) target = $region37
    $region36: #{tpu_custom_call.1} parent=1 // pred_region
      _
    $region37: #{tpu_custom_call.1} parent=1 // pred_fallthru
      _
    // Predicated region
    $region38: #{tpu_custom_call.1} parent=1 // pred_check
      _
    $region39: #{tpu_custom_call.1} parent=1 // pred_check_branch
      %49 = sbr.rel (0) target = $region41
    $region40: #{tpu_custom_call.1} parent=1 // pred_region
      _
    $region41: #{tpu_custom_call.1} parent=1 // pred_fallthru
      _
    // Predicated region
    $region42: #{tpu_custom_call.1} parent=1 // pred_check
      _
    $region43: #{tpu_custom_call.1} parent=1 // pred_check_branch
      %51 = sbr.rel (0) target = $region45
    $region44: #{tpu_custom_call.1} parent=1 // pred_region
      _
    $region45: #{tpu_custom_call.1} parent=1 // pred_fallthru
      _
    // Predicated region
    $region46: #{tpu_custom_call.1} parent=1 // pred_check
      _
    $region47: #{tpu_custom_call.1} parent=1 // pred_check_branch
      %53 = sbr.rel (0) target = $region49
    $region48: #{tpu_custom_call.1} parent=1 // pred_region
      _
    $region49: #{tpu_custom_call.1} parent=1 // pred_fallthru
      _
    // Predicated region
    $region50: #{tpu_custom_call.1} parent=1 // pred_check
      _
    $region51: #{tpu_custom_call.1} parent=1 // pred_check_branch
      %55 = sbr.rel (0) target = $region53
    $region52: #{tpu_custom_call.1} parent=1 // pred_region
      _
    $region53: #{tpu_custom_call.1} parent=1 // pred_fallthru
      _
    // Predicated region
    $region54: #{tpu_custom_call.1} parent=1 // pred_check
      _
    $region55: #{tpu_custom_call.1} parent=1 // pred_check_branch
      %57 = sbr.rel (0) target = $region57
    $region56: #{tpu_custom_call.1} parent=1 // pred_region
      %58 = dma.done [#allocation3], 768
    $region57: #{tpu_custom_call.1} parent=1 // pred_fallthru
      _
    %v60 = vld [vmem:[%s0] sm:$0xff]
    %v61 = vld [vmem:[%s0 + $0x8] sm:$0xff]
    %v62 = vld [vmem:[%s0 + $0x10] sm:$0xff]
    %v63 = vld [vmem:[%s0 + $0x18] sm:$0xff]
    %v64 = vld [vmem:[%s0 + $0x20] sm:$0xff]
    %v65 = vld [vmem:[%s0 + $0x28] sm:$0xff]
    %v66 = vld [vmem:[%s0 + $0x30] sm:$0xff]
    %v67 = vld [vmem:[%s0 + $0x38] sm:$0xff]
    %v68 = vld [vmem:[%s0 + $0x40] sm:$0xff]
    %v69 = vld [vmem:[%s0 + $0x48] sm:$0xff]
    %v70 = vld [vmem:[%s0 + $0x50] sm:$0xff]
    %v71 = vld [vmem:[%s0 + $0x58] sm:$0xff]
    %v72 = vld [vmem:[%s0 + $0x60] sm:$0xff]
    %v73 = vld [vmem:[%s0 + $0x68] sm:$0xff]
    %v74 = vld [vmem:[%s0 + $0x70] sm:$0xff]
    %v75 = vld [vmem:[%s0 + $0x78] sm:$0xff]
    %v76 = vld [vmem:[%s0 + $0x80] sm:$0xff]
    %v77 = vld [vmem:[%s0 + $0x88] sm:$0xff]
    %v78 = vld [vmem:[%s0 + $0x90] sm:$0xff]
    %v79 = vld [vmem:[%s0 + $0x98] sm:$0xff]
    %v80 = vld [vmem:[%s0 + $0xa0] sm:$0xff]
    %v81 = vld [vmem:[%s0 + $0xa8] sm:$0xff]
    %v82 = vld [vmem:[%s0 + $0xb0] sm:$0xff]
    %v83 = vld [vmem:[%s0 + $0xb8] sm:$0xff]
    %v84 = vld [vmem:[%s0 + $0xc0] sm:$0xff]
    %v85 = vld [vmem:[%s0 + $0xc8] sm:$0xff]
    %v86 = vld [vmem:[%s0 + $0xd0] sm:$0xff]
    %v87 = vld [vmem:[%s0 + $0xd8] sm:$0xff]
    %v88 = vld [vmem:[%s0 + $0xe0] sm:$0xff]
    %v89 = vld [vmem:[%s0 + $0xe8] sm:$0xff]
    %v90 = vld [vmem:[%s0 + $0xf0] sm:$0xff]
    %v91 = vld [vmem:[%s0 + $0xf8] sm:$0xff]
    %v92 = vld [vmem:[%s1] sm:$0xf]
    %v93 = vld [vmem:[%s1 + $0x4] sm:$0xf]
    %v94 = vld [vmem:[%s1 + $0x8] sm:$0xf]
    %v95 = vld [vmem:[%s1 + $0xc] sm:$0xf]
    %v96 = vld [vmem:[%s1 + $0x10] sm:$0xf]
    %v97 = vld [vmem:[%s1 + $0x14] sm:$0xf]
    %v98 = vld [vmem:[%s1 + $0x18] sm:$0xf]
    %v99 = vld [vmem:[%s1 + $0x1c] sm:$0xf]
    %v100 = vld [vmem:[%s1 + $0x20] sm:$0xf]
    %v101 = vld [vmem:[%s1 + $0x24] sm:$0xf]
    %v102 = vld [vmem:[%s1 + $0x28] sm:$0xf]
    %v103 = vld [vmem:[%s1 + $0x2c] sm:$0xf]
    %v104 = vld [vmem:[%s1 + $0x30] sm:$0xf]
    %v105 = vld [vmem:[%s1 + $0x34] sm:$0xf]
    %v106 = vld [vmem:[%s1 + $0x38] sm:$0xf]
    %v107 = vld [vmem:[%s1 + $0x3c] sm:$0xf]
    %v108 = vld [vmem:[%s1 + $0x40] sm:$0xf]
    %v109 = vld [vmem:[%s1 + $0x44] sm:$0xf]
    %v110 = vld [vmem:[%s1 + $0x48] sm:$0xf]
    %v111 = vld [vmem:[%s1 + $0x4c] sm:$0xf]
    %v112 = vld [vmem:[%s1 + $0x50] sm:$0xf]
    %v113 = vld [vmem:[%s1 + $0x54] sm:$0xf]
    %v114 = vld [vmem:[%s1 + $0x58] sm:$0xf]
    %v115 = vld [vmem:[%s1 + $0x5c] sm:$0xf]
    %v124 = vunpack.c.l.b16 %v60
    %v125 = vunpack.c.h.b16 %v60
    %v126 = vunpack.c.l.b16 %v64
    %v127 = vunpack.c.h.b16 %v64
    %v128 = vunpack.c.l.b16 %v68
    %v129 = vunpack.c.h.b16 %v68
    %v130 = vunpack.c.l.b16 %v72
    %v131 = vunpack.c.h.b16 %v72
    %v132 = vunpack.c.l.b16 %v76
    %v133 = vunpack.c.h.b16 %v76
    %v134 = vunpack.c.l.b16 %v80
    %v135 = vunpack.c.h.b16 %v80
    %v136 = vunpack.c.l.b16 %v84
    %v137 = vunpack.c.h.b16 %v84
    %v138 = vunpack.c.l.b16 %v88
    %v139 = vunpack.c.h.b16 %v88
    %v140 = vpack.c.b16 %v126, %v124
    %v141 = vpack.c.b16 %v127, %v125
    %v142 = vpack.c.b16 %v130, %v128
    %v143 = vpack.c.b16 %v131, %v129
    %v144 = vpack.c.b16 %v134, %v132
    %v145 = vpack.c.b16 %v135, %v133
    %v146 = vpack.c.b16 %v138, %v136
    %v147 = vpack.c.b16 %v139, %v137
    %v176 = vunpack.c.l.b16 %v92
    %v177 = vunpack.c.l.b16 %v93
    %v178 = vunpack.c.l.b16 %v94
    %v179 = vunpack.c.l.b16 %v95
    %v180 = vunpack.c.l.b16 %v96
    %v181 = vunpack.c.l.b16 %v97
    %v182 = vunpack.c.l.b16 %v98
    %v183 = vunpack.c.l.b16 %v99
    %v184 = vunpack.c.l.b16 %v100
    %v185 = vunpack.c.l.b16 %v101
    %v186 = vunpack.c.l.b16 %v102
    %v187 = vunpack.c.l.b16 %v103
    %v188 = vunpack.c.l.b16 %v104
    %v189 = vunpack.c.l.b16 %v105
    %v190 = vunpack.c.l.b16 %v106
    %v191 = vunpack.c.l.b16 %v107
    %v192 = vunpack.c.l.b16 %v108
    %v193 = vunpack.c.l.b16 %v109
    %v194 = vunpack.c.l.b16 %v110
    %v195 = vunpack.c.l.b16 %v111
    %v196 = vunpack.c.l.b16 %v112
    %v197 = vunpack.c.l.b16 %v113
    %v198 = vunpack.c.l.b16 %v114
    %v199 = vunpack.c.l.b16 %v115
    %v200 = vpack.c.b16 %v177, %v176
    %v201 = vpack.c.b16 %v179, %v178
    %v202 = vpack.c.b16 %v181, %v180
    %v203 = vpack.c.b16 %v183, %v182
    %v204 = vpack.c.b16 %v185, %v184
    %v205 = vpack.c.b16 %v187, %v186
    %v206 = vpack.c.b16 %v189, %v188
    %v207 = vpack.c.b16 %v191, %v190
    %v208 = vpack.c.b16 %v193, %v192
    %v209 = vpack.c.b16 %v195, %v194
    %v210 = vpack.c.b16 %v197, %v196
    %v211 = vpack.c.b16 %v199, %v198
    %vm224 = vcmask 523264
    %v226 = vsel %vm224, %v141, 0
    %v229 = vsel %vm224, %v143, 0
    %v232 = vsel %vm224, %v145, 0
    %v235 = vsel %vm224, %v147, 0
    %237 = vmatprep.subr.bf16.mxu0 0
    %238 = vmatpush1.bf16.msra.mxu0 %v200
    %239 = vmatprep.subr.bf16.mxu0 0
    %240 = vmatpush1.bf16.msra.mxu0 %v201
    %241 = vmatprep.subr.bf16.mxu0 0
    %242 = vmatpush1.bf16.msra.mxu0 %v202
    %243 = vmatprep.subr.bf16.mxu0 0
    %244 = vmatpush1.bf16.msra.mxu0 %v203
    %245 = vmatprep.subr.bf16.mxu0 0
    %246 = vmatpush1.bf16.msra.mxu0 %v204
    %247 = vmatprep.subr.bf16.mxu0 0
    %248 = vmatpush1.bf16.msra.mxu0 %v205
    %249 = vmatprep.subr.bf16.mxu0 0
    %250 = vmatpush1.bf16.msra.mxu0 %v206
    %251 = vmatprep.subr.bf16.mxu0 0
    %252 = vmatpush1.bf16.msra.mxu0 %v207
    %253 = vmatprep.subr.bf16.mxu0 0
    %254 = vmatpush1.bf16.msra.mxu0 %v208
    %255 = vmatprep.subr.bf16.mxu0 0
    %256 = vmatpush1.bf16.msra.mxu0 %v209
    %257 = vmatprep.subr.bf16.mxu0 0
    %258 = vmatpush1.bf16.msra.mxu0 %v210
    %259 = vmatprep.subr.bf16.mxu0 0
    %260 = vmatpush1.bf16.msra.mxu0 %v211
    %261 = vmatprep.subr.bf16.mxu0 0
    %262 = vmatpush1.bf16.msra.mxu0 0
    %263 = vmatprep.subr.bf16.mxu0 0
    %264 = vmatpush1.bf16.msra.mxu0 0
    %265 = vmatprep.subr.bf16.mxu0 0
    %266 = vmatpush1.bf16.msra.mxu0 0
    %267 = vmatprep.subr.bf16.mxu0 0
    %268 = vmatpush1.bf16.msra.mxu0 0
    %269 = vmatprep.mubr.bf16.mxu0 %v226
    %270 = vmatmul.mubr.bf16.gmra.mrb[0].mxu0 %v140
    %v271 = vpop.f32.mrb[0].mxu0
    %v272 = vadd.f32 0.0, %v271
    %v273 = vpop.f32.mrb[0].mxu0
    %v274 = vpop.f32.mrb[0].mxu0
    %v275 = vadd.f32 0.0, %v274
    %v276 = vpop.f32.mrb[0].mxu0
    %277 = vmatprep.mubr.bf16.mxu0 %v229
    %278 = vmatmul.mubr.bf16.gmra.mrb[0].mxu0 %v142
    %v279 = vpop.f32.mrb[0].mxu0
    %v280 = vadd.f32 0.0, %v279
    %v281 = vpop.f32.mrb[0].mxu0
    %v282 = vpop.f32.mrb[0].mxu0
    %v283 = vadd.f32 0.0, %v282
    %v284 = vpop.f32.mrb[0].mxu0
    %285 = vmatprep.mubr.bf16.mxu0 %v232
    %286 = vmatmul.mubr.bf16.gmra.mrb[0].mxu0 %v144
    %v287 = vpop.f32.mrb[0].mxu0
    %v288 = vadd.f32 0.0, %v287
    %v289 = vpop.f32.mrb[0].mxu0
    %v290 = vpop.f32.mrb[0].mxu0
    %v291 = vadd.f32 0.0, %v290
    %v292 = vpop.f32.mrb[0].mxu0
    %293 = vmatprep.mubr.bf16.mxu0 %v235
    %294 = vmatmul.mubr.bf16.gmra.mrb[0].mxu0 %v146
    %v295 = vpop.f32.mrb[0].mxu0
    %v296 = vadd.f32 0.0, %v295
    %v297 = vpop.f32.mrb[0].mxu0
    %v298 = vpop.f32.mrb[0].mxu0
    %v299 = vadd.f32 0.0, %v298
    %v300 = vpop.f32.mrb[0].mxu0
    %301 = vdwg.mxu0
    %v310 = vunpack.c.l.b16 %v61
    %v311 = vunpack.c.l.b16 %v65
    %v312 = vunpack.c.l.b16 %v69
    %v313 = vunpack.c.l.b16 %v73
    %v314 = vunpack.c.l.b16 %v77
    %v315 = vunpack.c.l.b16 %v81
    %v316 = vunpack.c.l.b16 %v85
    %v317 = vunpack.c.l.b16 %v89
    %v318 = vpack.c.b16 %v311, %v310
    %v319 = vpack.c.b16 %v313, %v312
    %v320 = vpack.c.b16 %v315, %v314
    %v321 = vpack.c.b16 %v317, %v316
    %v327 = vsel %vm224, %v318, 0
    %v330 = vsel %vm224, %v319, 0
    %v333 = vsel %vm224, %v320, 0
    %v336 = vsel %vm224, %v321, 0
    %338 = vmatprep.subr.bf16.mxu0 0
    %339 = vmatpush1.bf16.msra.mxu0 %v200
    %340 = vmatprep.subr.bf16.mxu0 0
    %341 = vmatpush1.bf16.msra.mxu0 %v201
    %342 = vmatprep.subr.bf16.mxu0 0
    %343 = vmatpush1.bf16.msra.mxu0 %v202
    %344 = vmatprep.subr.bf16.mxu0 0
    %345 = vmatpush1.bf16.msra.mxu0 %v203
    %346 = vmatprep.subr.bf16.mxu0 0
    %347 = vmatpush1.bf16.msra.mxu0 %v204
    %348 = vmatprep.subr.bf16.mxu0 0
    %349 = vmatpush1.bf16.msra.mxu0 %v205
    %350 = vmatprep.subr.bf16.mxu0 0
    %351 = vmatpush1.bf16.msra.mxu0 %v206
    %352 = vmatprep.subr.bf16.mxu0 0
    %353 = vmatpush1.bf16.msra.mxu0 %v207
    %354 = vmatprep.subr.bf16.mxu0 0
    %355 = vmatpush1.bf16.msra.mxu0 %v208
    %356 = vmatprep.subr.bf16.mxu0 0
    %357 = vmatpush1.bf16.msra.mxu0 %v209
    %358 = vmatprep.subr.bf16.mxu0 0
    %359 = vmatpush1.bf16.msra.mxu0 %v210
    %360 = vmatprep.subr.bf16.mxu0 0
    %361 = vmatpush1.bf16.msra.mxu0 %v211
    %362 = vmatprep.subr.bf16.mxu0 0
    %363 = vmatpush1.bf16.msra.mxu0 0
    %364 = vmatprep.subr.bf16.mxu0 0
    %365 = vmatpush1.bf16.msra.mxu0 0
    %366 = vmatprep.subr.bf16.mxu0 0
    %367 = vmatpush1.bf16.msra.mxu0 0
    %368 = vmatprep.subr.bf16.mxu0 0
    %369 = vmatpush1.bf16.msra.mxu0 0
    %370 = vmatprep.mubr.bf16.mxu0 %v327
    %371 = vmatmul.mubr.bf16.gmra.mrb[0].mxu0 %v141
    %v372 = vpop.f32.mrb[0].mxu0
    %v373 = vadd.f32 0.0, %v372
    %v374 = vpop.f32.mrb[0].mxu0
    %v375 = vpop.f32.mrb[0].mxu0
    %v376 = vadd.f32 0.0, %v375
    %v377 = vpop.f32.mrb[0].mxu0
    %378 = vmatprep.mubr.bf16.mxu0 %v330
    %379 = vmatmul.mubr.bf16.gmra.mrb[0].mxu0 %v143
    %v380 = vpop.f32.mrb[0].mxu0
    %v381 = vadd.f32 0.0, %v380
    %v382 = vpop.f32.mrb[0].mxu0
    %v383 = vpop.f32.mrb[0].mxu0
    %v384 = vadd.f32 0.0, %v383
    %v385 = vpop.f32.mrb[0].mxu0
    %386 = vmatprep.mubr.bf16.mxu0 %v333
    %387 = vmatmul.mubr.bf16.gmra.mrb[0].mxu0 %v145
    %v388 = vpop.f32.mrb[0].mxu0
    %v389 = vadd.f32 0.0, %v388
    %v390 = vpop.f32.mrb[0].mxu0
    %v391 = vpop.f32.mrb[0].mxu0
    %v392 = vadd.f32 0.0, %v391
    %v393 = vpop.f32.mrb[0].mxu0
    %394 = vmatprep.mubr.bf16.mxu0 %v336
    %395 = vmatmul.mubr.bf16.gmra.mrb[0].mxu0 %v147
    %v396 = vpop.f32.mrb[0].mxu0
    %v397 = vadd.f32 0.0, %v396
    %v398 = vpop.f32.mrb[0].mxu0
    %v399 = vpop.f32.mrb[0].mxu0
    %v400 = vadd.f32 0.0, %v399
    %v401 = vpop.f32.mrb[0].mxu0
    %402 = vdwg.mxu0
    %v403 = vunpack.c.h.b16 %v61
    %v404 = vunpack.c.h.b16 %v65
    %v405 = vunpack.c.h.b16 %v69
    %v406 = vunpack.c.h.b16 %v73
    %v407 = vunpack.c.h.b16 %v77
    %v408 = vunpack.c.h.b16 %v81
    %v409 = vunpack.c.h.b16 %v85
    %v410 = vunpack.c.h.b16 %v89
    %v411 = vpack.c.b16 %v404, %v403
    %v412 = vpack.c.b16 %v406, %v405
    %v413 = vpack.c.b16 %v408, %v407
    %v414 = vpack.c.b16 %v410, %v409
    %v420 = vsel %vm224, %v411, 0
    %v423 = vsel %vm224, %v412, 0
    %v426 = vsel %vm224, %v413, 0
    %v429 = vsel %vm224, %v414, 0
    %431 = vmatprep.subr.bf16.mxu0 0
    %432 = vmatpush1.bf16.msra.mxu0 %v200
    %433 = vmatprep.subr.bf16.mxu0 0
    %434 = vmatpush1.bf16.msra.mxu0 %v201
    %435 = vmatprep.subr.bf16.mxu0 0
    %436 = vmatpush1.bf16.msra.mxu0 %v202
    %437 = vmatprep.subr.bf16.mxu0 0
    %438 = vmatpush1.bf16.msra.mxu0 %v203
    %439 = vmatprep.subr.bf16.mxu0 0
    %440 = vmatpush1.bf16.msra.mxu0 %v204
    %441 = vmatprep.subr.bf16.mxu0 0
    %442 = vmatpush1.bf16.msra.mxu0 %v205
    %443 = vmatprep.subr.bf16.mxu0 0
    %444 = vmatpush1.bf16.msra.mxu0 %v206
    %445 = vmatprep.subr.bf16.mxu0 0
    %446 = vmatpush1.bf16.msra.mxu0 %v207
    %447 = vmatprep.subr.bf16.mxu0 0
    %448 = vmatpush1.bf16.msra.mxu0 %v208
    %449 = vmatprep.subr.bf16.mxu0 0
    %450 = vmatpush1.bf16.msra.mxu0 %v209
    %451 = vmatprep.subr.bf16.mxu0 0
    %452 = vmatpush1.bf16.msra.mxu0 %v210
    %453 = vmatprep.subr.bf16.mxu0 0
    %454 = vmatpush1.bf16.msra.mxu0 %v211
    %455 = vmatprep.subr.bf16.mxu0 0
    %456 = vmatpush1.bf16.msra.mxu0 0
    %457 = vmatprep.subr.bf16.mxu0 0
    %458 = vmatpush1.bf16.msra.mxu0 0
    %459 = vmatprep.subr.bf16.mxu0 0
    %460 = vmatpush1.bf16.msra.mxu0 0
    %461 = vmatprep.subr.bf16.mxu0 0
    %462 = vmatpush1.bf16.msra.mxu0 0
    %463 = vmatprep.mubr.bf16.mxu0 %v420
    %464 = vmatmul.mubr.bf16.gmra.mrb[0].mxu0 %v318
    %v465 = vpop.f32.mrb[0].mxu0
    %v466 = vadd.f32 0.0, %v465
    %v467 = vpop.f32.mrb[0].mxu0
    %v468 = vpop.f32.mrb[0].mxu0
    %v469 = vadd.f32 0.0, %v468
    %v470 = vpop.f32.mrb[0].mxu0
    %471 = vmatprep.mubr.bf16.mxu0 %v423
    %472 = vmatmul.mubr.bf16.gmra.mrb[0].mxu0 %v319
    %v473 = vpop.f32.mrb[0].mxu0
    %v474 = vadd.f32 0.0, %v473
    %v475 = vpop.f32.mrb[0].mxu0
    %v476 = vpop.f32.mrb[0].mxu0
    %v477 = vadd.f32 0.0, %v476
    %v478 = vpop.f32.mrb[0].mxu0
    %479 = vmatprep.mubr.bf16.mxu0 %v426
    %480 = vmatmul.mubr.bf16.gmra.mrb[0].mxu0 %v320
    %v481 = vpop.f32.mrb[0].mxu0
    %v482 = vadd.f32 0.0, %v481
    %v483 = vpop.f32.mrb[0].mxu0
    %v484 = vpop.f32.mrb[0].mxu0
    %v485 = vadd.f32 0.0, %v484
    %v486 = vpop.f32.mrb[0].mxu0
    %487 = vmatprep.mubr.bf16.mxu0 %v429
    %488 = vmatmul.mubr.bf16.gmra.mrb[0].mxu0 %v321
    %v489 = vpop.f32.mrb[0].mxu0
    %v490 = vadd.f32 0.0, %v489
    %v491 = vpop.f32.mrb[0].mxu0
    %v492 = vpop.f32.mrb[0].mxu0
    %v493 = vadd.f32 0.0, %v492
    %v494 = vpop.f32.mrb[0].mxu0
    %495 = vdwg.mxu0
    %v504 = vunpack.c.l.b16 %v62
    %v505 = vunpack.c.l.b16 %v66
    %v506 = vunpack.c.l.b16 %v70
    %v507 = vunpack.c.l.b16 %v74
    %v508 = vunpack.c.l.b16 %v78
    %v509 = vunpack.c.l.b16 %v82
    %v510 = vunpack.c.l.b16 %v86
    %v511 = vunpack.c.l.b16 %v90
    %v512 = vpack.c.b16 %v505, %v504
    %v513 = vpack.c.b16 %v507, %v506
    %v514 = vpack.c.b16 %v509, %v508
    %v515 = vpack.c.b16 %v511, %v510
    %v521 = vsel %vm224, %v512, 0
    %v524 = vsel %vm224, %v513, 0
    %v527 = vsel %vm224, %v514, 0
    %v530 = vsel %vm224, %v515, 0
    %532 = vmatprep.subr.bf16.mxu0 0
    %533 = vmatpush1.bf16.msra.mxu0 %v200
    %534 = vmatprep.subr.bf16.mxu0 0
    %535 = vmatpush1.bf16.msra.mxu0 %v201
    %536 = vmatprep.subr.bf16.mxu0 0
    %537 = vmatpush1.bf16.msra.mxu0 %v202
    %538 = vmatprep.subr.bf16.mxu0 0
    %539 = vmatpush1.bf16.msra.mxu0 %v203
    %540 = vmatprep.subr.bf16.mxu0 0
    %541 = vmatpush1.bf16.msra.mxu0 %v204
    %542 = vmatprep.subr.bf16.mxu0 0
    %543 = vmatpush1.bf16.msra.mxu0 %v205
    %544 = vmatprep.subr.bf16.mxu0 0
    %545 = vmatpush1.bf16.msra.mxu0 %v206
    %546 = vmatprep.subr.bf16.mxu0 0
    %547 = vmatpush1.bf16.msra.mxu0 %v207
    %548 = vmatprep.subr.bf16.mxu0 0
    %549 = vmatpush1.bf16.msra.mxu0 %v208
    %550 = vmatprep.subr.bf16.mxu0 0
    %551 = vmatpush1.bf16.msra.mxu0 %v209
    %552 = vmatprep.subr.bf16.mxu0 0
    %553 = vmatpush1.bf16.msra.mxu0 %v210
    %554 = vmatprep.subr.bf16.mxu0 0
    %555 = vmatpush1.bf16.msra.mxu0 %v211
    %556 = vmatprep.subr.bf16.mxu0 0
    %557 = vmatpush1.bf16.msra.mxu0 0
    %558 = vmatprep.subr.bf16.mxu0 0
    %559 = vmatpush1.bf16.msra.mxu0 0
    %560 = vmatprep.subr.bf16.mxu0 0
    %561 = vmatpush1.bf16.msra.mxu0 0
    %562 = vmatprep.subr.bf16.mxu0 0
    %563 = vmatpush1.bf16.msra.mxu0 0
    %564 = vmatprep.mubr.bf16.mxu0 %v521
    %565 = vmatmul.mubr.bf16.gmra.mrb[0].mxu0 %v411
    %v566 = vpop.f32.mrb[0].mxu0
    %v567 = vadd.f32 0.0, %v566
    %v568 = vpop.f32.mrb[0].mxu0
    %v569 = vpop.f32.mrb[0].mxu0
    %v570 = vadd.f32 0.0, %v569
    %v571 = vpop.f32.mrb[0].mxu0
    %572 = vmatprep.mubr.bf16.mxu0 %v524
    %573 = vmatmul.mubr.bf16.gmra.mrb[0].mxu0 %v412
    %v574 = vpop.f32.mrb[0].mxu0
    %v575 = vadd.f32 0.0, %v574
    %v576 = vpop.f32.mrb[0].mxu0
    %v577 = vpop.f32.mrb[0].mxu0
    %v578 = vadd.f32 0.0, %v577
    %v579 = vpop.f32.mrb[0].mxu0
    %580 = vmatprep.mubr.bf16.mxu0 %v527
    %581 = vmatmul.mubr.bf16.gmra.mrb[0].mxu0 %v413
    %v582 = vpop.f32.mrb[0].mxu0
    %v583 = vadd.f32 0.0, %v582
    %v584 = vpop.f32.mrb[0].mxu0
    %v585 = vpop.f32.mrb[0].mxu0
    %v586 = vadd.f32 0.0, %v585
    %v587 = vpop.f32.mrb[0].mxu0
    %588 = vmatprep.mubr.bf16.mxu0 %v530
    %589 = vmatmul.mubr.bf16.gmra.mrb[0].mxu0 %v414
    %v590 = vpop.f32.mrb[0].mxu0
    %v591 = vadd.f32 0.0, %v590
    %v592 = vpop.f32.mrb[0].mxu0
    %v593 = vpop.f32.mrb[0].mxu0
    %v594 = vadd.f32 0.0, %v593
    %v595 = vpop.f32.mrb[0].mxu0
    %596 = vdwg.mxu0
    %v597 = vunpack.c.h.b16 %v62
    %v598 = vunpack.c.h.b16 %v66
    %v599 = vunpack.c.h.b16 %v70
    %v600 = vunpack.c.h.b16 %v74
    %v601 = vunpack.c.h.b16 %v78
    %v602 = vunpack.c.h.b16 %v82
    %v603 = vunpack.c.h.b16 %v86
    %v604 = vunpack.c.h.b16 %v90
    %v605 = vpack.c.b16 %v598, %v597
    %v606 = vpack.c.b16 %v600, %v599
    %v607 = vpack.c.b16 %v602, %v601
    %v608 = vpack.c.b16 %v604, %v603
    %v614 = vsel %vm224, %v605, 0
    %v617 = vsel %vm224, %v606, 0
    %v620 = vsel %vm224, %v607, 0
    %v623 = vsel %vm224, %v608, 0
    %625 = vmatprep.subr.bf16.mxu0 0
    %626 = vmatpush1.bf16.msra.mxu0 %v200
    %627 = vmatprep.subr.bf16.mxu0 0
    %628 = vmatpush1.bf16.msra.mxu0 %v201
    %629 = vmatprep.subr.bf16.mxu0 0
    %630 = vmatpush1.bf16.msra.mxu0 %v202
    %631 = vmatprep.subr.bf16.mxu0 0
    %632 = vmatpush1.bf16.msra.mxu0 %v203
    %633 = vmatprep.subr.bf16.mxu0 0
    %634 = vmatpush1.bf16.msra.mxu0 %v204
    %635 = vmatprep.subr.bf16.mxu0 0
    %636 = vmatpush1.bf16.msra.mxu0 %v205
    %637 = vmatprep.subr.bf16.mxu0 0
    %638 = vmatpush1.bf16.msra.mxu0 %v206
    %639 = vmatprep.subr.bf16.mxu0 0
    %640 = vmatpush1.bf16.msra.mxu0 %v207
    %641 = vmatprep.subr.bf16.mxu0 0
    %642 = vmatpush1.bf16.msra.mxu0 %v208
    %643 = vmatprep.subr.bf16.mxu0 0
    %644 = vmatpush1.bf16.msra.mxu0 %v209
    %645 = vmatprep.subr.bf16.mxu0 0
    %646 = vmatpush1.bf16.msra.mxu0 %v210
    %647 = vmatprep.subr.bf16.mxu0 0
    %648 = vmatpush1.bf16.msra.mxu0 %v211
    %649 = vmatprep.subr.bf16.mxu0 0
    %650 = vmatpush1.bf16.msra.mxu0 0
    %651 = vmatprep.subr.bf16.mxu0 0
    %652 = vmatpush1.bf16.msra.mxu0 0
    %653 = vmatprep.subr.bf16.mxu0 0
    %654 = vmatpush1.bf16.msra.mxu0 0
    %655 = vmatprep.subr.bf16.mxu0 0
    %656 = vmatpush1.bf16.msra.mxu0 0
    %657 = vmatprep.mubr.bf16.mxu0 %v614
    %658 = vmatmul.mubr.bf16.gmra.mrb[0].mxu0 %v512
    %v659 = vpop.f32.mrb[0].mxu0
    %v660 = vadd.f32 0.0, %v659
    %v661 = vpop.f32.mrb[0].mxu0
    %v662 = vpop.f32.mrb[0].mxu0
    %v663 = vadd.f32 0.0, %v662
    %v664 = vpop.f32.mrb[0].mxu0
    %665 = vmatprep.mubr.bf16.mxu0 %v617
    %666 = vmatmul.mubr.bf16.gmra.mrb[0].mxu0 %v513
    %v667 = vpop.f32.mrb[0].mxu0
    %v668 = vadd.f32 0.0, %v667
    %v669 = vpop.f32.mrb[0].mxu0
    %v670 = vpop.f32.mrb[0].mxu0
    %v671 = vadd.f32 0.0, %v670
    %v672 = vpop.f32.mrb[0].mxu0
    %673 = vmatprep.mubr.bf16.mxu0 %v620
    %674 = vmatmul.mubr.bf16.gmra.mrb[0].mxu0 %v514
    %v675 = vpop.f32.mrb[0].mxu0
    %v676 = vadd.f32 0.0, %v675
    %v677 = vpop.f32.mrb[0].mxu0
    %v678 = vpop.f32.mrb[0].mxu0
    %v679 = vadd.f32 0.0, %v678
    %v680 = vpop.f32.mrb[0].mxu0
    %681 = vmatprep.mubr.bf16.mxu0 %v623
    %682 = vmatmul.mubr.bf16.gmra.mrb[0].mxu0 %v515
    %v683 = vpop.f32.mrb[0].mxu0
    %v684 = vadd.f32 0.0, %v683
    %v685 = vpop.f32.mrb[0].mxu0
    %v686 = vpop.f32.mrb[0].mxu0
    %v687 = vadd.f32 0.0, %v686
    %v688 = vpop.f32.mrb[0].mxu0
    %689 = vdwg.mxu0
    %v698 = vunpack.c.l.b16 %v63
    %v699 = vunpack.c.l.b16 %v67
    %v700 = vunpack.c.l.b16 %v71
    %v701 = vunpack.c.l.b16 %v75
    %v702 = vunpack.c.l.b16 %v79
    %v703 = vunpack.c.l.b16 %v83
    %v704 = vunpack.c.l.b16 %v87
    %v705 = vunpack.c.l.b16 %v91
    %v706 = vpack.c.b16 %v699, %v698
    %v707 = vpack.c.b16 %v701, %v700
    %v708 = vpack.c.b16 %v703, %v702
    %v709 = vpack.c.b16 %v705, %v704
    %v715 = vsel %vm224, %v706, 0
    %v718 = vsel %vm224, %v707, 0
    %v721 = vsel %vm224, %v708, 0
    %v724 = vsel %vm224, %v709, 0
    %726 = vmatprep.subr.bf16.mxu0 0
    %727 = vmatpush1.bf16.msra.mxu0 %v200
    %728 = vmatprep.subr.bf16.mxu0 0
    %729 = vmatpush1.bf16.msra.mxu0 %v201
    %730 = vmatprep.subr.bf16.mxu0 0
    %731 = vmatpush1.bf16.msra.mxu0 %v202
    %732 = vmatprep.subr.bf16.mxu0 0
    %733 = vmatpush1.bf16.msra.mxu0 %v203
    %734 = vmatprep.subr.bf16.mxu0 0
    %735 = vmatpush1.bf16.msra.mxu0 %v204
    %736 = vmatprep.subr.bf16.mxu0 0
    %737 = vmatpush1.bf16.msra.mxu0 %v205
    %738 = vmatprep.subr.bf16.mxu0 0
    %739 = vmatpush1.bf16.msra.mxu0 %v206
    %740 = vmatprep.subr.bf16.mxu0 0
    %741 = vmatpush1.bf16.msra.mxu0 %v207
    %742 = vmatprep.subr.bf16.mxu0 0
    %743 = vmatpush1.bf16.msra.mxu0 %v208
    %744 = vmatprep.subr.bf16.mxu0 0
    %745 = vmatpush1.bf16.msra.mxu0 %v209
    %746 = vmatprep.subr.bf16.mxu0 0
    %747 = vmatpush1.bf16.msra.mxu0 %v210
    %748 = vmatprep.subr.bf16.mxu0 0
    %749 = vmatpush1.bf16.msra.mxu0 %v211
    %750 = vmatprep.subr.bf16.mxu0 0
    %751 = vmatpush1.bf16.msra.mxu0 0
    %752 = vmatprep.subr.bf16.mxu0 0
    %753 = vmatpush1.bf16.msra.mxu0 0
    %754 = vmatprep.subr.bf16.mxu0 0
    %755 = vmatpush1.bf16.msra.mxu0 0
    %756 = vmatprep.subr.bf16.mxu0 0
    %757 = vmatpush1.bf16.msra.mxu0 0
    %758 = vmatprep.mubr.bf16.mxu0 %v715
    %759 = vmatmul.mubr.bf16.gmra.mrb[0].mxu0 %v605
    %v760 = vpop.f32.mrb[0].mxu0
    %v761 = vadd.f32 0.0, %v760
    %v762 = vpop.f32.mrb[0].mxu0
    %v763 = vpop.f32.mrb[0].mxu0
    %v764 = vadd.f32 0.0, %v763
    %v765 = vpop.f32.mrb[0].mxu0
    %766 = vmatprep.mubr.bf16.mxu0 %v718
    %767 = vmatmul.mubr.bf16.gmra.mrb[0].mxu0 %v606
    %v768 = vpop.f32.mrb[0].mxu0
    %v769 = vadd.f32 0.0, %v768
    %v770 = vpop.f32.mrb[0].mxu0
    %v771 = vpop.f32.mrb[0].mxu0
    %v772 = vadd.f32 0.0, %v771
    %v773 = vpop.f32.mrb[0].mxu0
    %774 = vmatprep.mubr.bf16.mxu0 %v721
    %775 = vmatmul.mubr.bf16.gmra.mrb[0].mxu0 %v607
    %v776 = vpop.f32.mrb[0].mxu0
    %v777 = vadd.f32 0.0, %v776
    %v778 = vpop.f32.mrb[0].mxu0
    %v779 = vpop.f32.mrb[0].mxu0
    %v780 = vadd.f32 0.0, %v779
    %v781 = vpop.f32.mrb[0].mxu0
    %782 = vmatprep.mubr.bf16.mxu0 %v724
    %783 = vmatmul.mubr.bf16.gmra.mrb[0].mxu0 %v608
    %v784 = vpop.f32.mrb[0].mxu0
    %v785 = vadd.f32 0.0, %v784
    %v786 = vpop.f32.mrb[0].mxu0
    %v787 = vpop.f32.mrb[0].mxu0
    %v788 = vadd.f32 0.0, %v787
    %v789 = vpop.f32.mrb[0].mxu0
    %790 = vdwg.mxu0
    %v791 = vunpack.c.h.b16 %v63
    %v792 = vunpack.c.h.b16 %v67
    %v793 = vunpack.c.h.b16 %v71
    %v794 = vunpack.c.h.b16 %v75
    %v795 = vunpack.c.h.b16 %v79
    %v796 = vunpack.c.h.b16 %v83
    %v797 = vunpack.c.h.b16 %v87
    %v798 = vunpack.c.h.b16 %v91
    %v799 = vpack.c.b16 %v792, %v791
    %v800 = vpack.c.b16 %v794, %v793
    %v801 = vpack.c.b16 %v796, %v795
    %v802 = vpack.c.b16 %v798, %v797
    %v808 = vsel %vm224, %v799, 0
    %v811 = vsel %vm224, %v800, 0
    %v814 = vsel %vm224, %v801, 0
    %v817 = vsel %vm224, %v802, 0
    %819 = vmatprep.subr.bf16.mxu0 0
    %820 = vmatpush1.bf16.msra.mxu0 %v200
    %821 = vmatprep.subr.bf16.mxu0 0
    %822 = vmatpush1.bf16.msra.mxu0 %v201
    %823 = vmatprep.subr.bf16.mxu0 0
    %824 = vmatpush1.bf16.msra.mxu0 %v202
    %825 = vmatprep.subr.bf16.mxu0 0
    %826 = vmatpush1.bf16.msra.mxu0 %v203
    %827 = vmatprep.subr.bf16.mxu0 0
    %828 = vmatpush1.bf16.msra.mxu0 %v204
    %829 = vmatprep.subr.bf16.mxu0 0
    %830 = vmatpush1.bf16.msra.mxu0 %v205
    %831 = vmatprep.subr.bf16.mxu0 0
    %832 = vmatpush1.bf16.msra.mxu0 %v206
    %833 = vmatprep.subr.bf16.mxu0 0
    %834 = vmatpush1.bf16.msra.mxu0 %v207
    %835 = vmatprep.subr.bf16.mxu0 0
    %836 = vmatpush1.bf16.msra.mxu0 %v208
    %837 = vmatprep.subr.bf16.mxu0 0
    %838 = vmatpush1.bf16.msra.mxu0 %v209
    %839 = vmatprep.subr.bf16.mxu0 0
    %840 = vmatpush1.bf16.msra.mxu0 %v210
    %841 = vmatprep.subr.bf16.mxu0 0
    %842 = vmatpush1.bf16.msra.mxu0 %v211
    %843 = vmatprep.subr.bf16.mxu0 0
    %844 = vmatpush1.bf16.msra.mxu0 0
    %845 = vmatprep.subr.bf16.mxu0 0
    %846 = vmatpush1.bf16.msra.mxu0 0
    %847 = vmatprep.subr.bf16.mxu0 0
    %848 = vmatpush1.bf16.msra.mxu0 0
    %849 = vmatprep.subr.bf16.mxu0 0
    %850 = vmatpush1.bf16.msra.mxu0 0
    %851 = vmatprep.mubr.bf16.mxu0 %v808
    %852 = vmatmul.mubr.bf16.gmra.mrb[0].mxu0 %v706
    %v853 = vpop.f32.mrb[0].mxu0
    %v854 = vadd.f32 0.0, %v853
    %v855 = vpop.f32.mrb[0].mxu0
    %v856 = vpop.f32.mrb[0].mxu0
    %v857 = vadd.f32 0.0, %v856
    %v858 = vpop.f32.mrb[0].mxu0
    %859 = vmatprep.mubr.bf16.mxu0 %v811
    %860 = vmatmul.mubr.bf16.gmra.mrb[0].mxu0 %v707
    %v861 = vpop.f32.mrb[0].mxu0
    %v862 = vadd.f32 0.0, %v861
    %v863 = vpop.f32.mrb[0].mxu0
    %v864 = vpop.f32.mrb[0].mxu0
    %v865 = vadd.f32 0.0, %v864
    %v866 = vpop.f32.mrb[0].mxu0
    %867 = vmatprep.mubr.bf16.mxu0 %v814
    %868 = vmatmul.mubr.bf16.gmra.mrb[0].mxu0 %v708
    %v869 = vpop.f32.mrb[0].mxu0
    %v870 = vadd.f32 0.0, %v869
    %v871 = vpop.f32.mrb[0].mxu0
    %v872 = vpop.f32.mrb[0].mxu0
    %v873 = vadd.f32 0.0, %v872
    %v874 = vpop.f32.mrb[0].mxu0
    %875 = vmatprep.mubr.bf16.mxu0 %v817
    %876 = vmatmul.mubr.bf16.gmra.mrb[0].mxu0 %v709
    %v877 = vpop.f32.mrb[0].mxu0
    %v878 = vadd.f32 0.0, %v877
    %v879 = vpop.f32.mrb[0].mxu0
    %v880 = vpop.f32.mrb[0].mxu0
    %v881 = vadd.f32 0.0, %v880
    %v882 = vpop.f32.mrb[0].mxu0
    %883 = vdwg.mxu0
    %892 = vrot.lane.b32.xlu0 %v373, 56
    %v893 = vpop.permute.xlu0 %892
    %894 = vrot.lane.b32.xlu0 %v376, 56
    %v895 = vpop.permute.xlu0 %894
    %896 = vrot.lane.b32.xlu0 %v381, 56
    %v897 = vpop.permute.xlu0 %896
    %898 = vrot.lane.b32.xlu0 %v384, 56
    %v899 = vpop.permute.xlu0 %898
    %900 = vrot.lane.b32.xlu0 %v389, 56
    %v901 = vpop.permute.xlu0 %900
    %902 = vrot.lane.b32.xlu0 %v392, 56
    %v903 = vpop.permute.xlu0 %902
    %904 = vrot.lane.b32.xlu0 %v397, 56
    %v905 = vpop.permute.xlu0 %904
    %906 = vrot.lane.b32.xlu0 %v400, 56
    %v907 = vpop.permute.xlu0 %906
    %924 = vrot.lane.b32.xlu0 %v466, 112
    %v925 = vpop.permute.xlu0 %924
    %926 = vrot.lane.b32.xlu0 %v469, 112
    %v927 = vpop.permute.xlu0 %926
    %928 = vrot.lane.b32.xlu0 %v474, 112
    %v929 = vpop.permute.xlu0 %928
    %930 = vrot.lane.b32.xlu0 %v477, 112
    %v931 = vpop.permute.xlu0 %930
    %932 = vrot.lane.b32.xlu0 %v482, 112
    %v933 = vpop.permute.xlu0 %932
    %934 = vrot.lane.b32.xlu0 %v485, 112
    %v935 = vpop.permute.xlu0 %934
    %936 = vrot.lane.b32.xlu0 %v490, 112
    %v937 = vpop.permute.xlu0 %936
    %938 = vrot.lane.b32.xlu0 %v493, 112
    %v939 = vpop.permute.xlu0 %938
    %956 = vrot.lane.b32.xlu0 %v567, 40
    %v957 = vpop.permute.xlu0 %956
    %958 = vrot.lane.b32.xlu0 %v570, 40
    %v959 = vpop.permute.xlu0 %958
    %960 = vrot.lane.b32.xlu0 %v575, 40
    %v961 = vpop.permute.xlu0 %960
    %962 = vrot.lane.b32.xlu0 %v578, 40
    %v963 = vpop.permute.xlu0 %962
    %964 = vrot.lane.b32.xlu0 %v583, 40
    %v965 = vpop.permute.xlu0 %964
    %966 = vrot.lane.b32.xlu0 %v586, 40
    %v967 = vpop.permute.xlu0 %966
    %968 = vrot.lane.b32.xlu0 %v591, 40
    %v969 = vpop.permute.xlu0 %968
    %970 = vrot.lane.b32.xlu0 %v594, 40
    %v971 = vpop.permute.xlu0 %970
    %988 = vrot.lane.b32.xlu0 %v660, 96
    %v989 = vpop.permute.xlu0 %988
    %990 = vrot.lane.b32.xlu0 %v663, 96
    %v991 = vpop.permute.xlu0 %990
    %992 = vrot.lane.b32.xlu0 %v668, 96
    %v993 = vpop.permute.xlu0 %992
    %994 = vrot.lane.b32.xlu0 %v671, 96
    %v995 = vpop.permute.xlu0 %994
    %996 = vrot.lane.b32.xlu0 %v676, 96
    %v997 = vpop.permute.xlu0 %996
    %998 = vrot.lane.b32.xlu0 %v679, 96
    %v999 = vpop.permute.xlu0 %998
    %1000 = vrot.lane.b32.xlu0 %v684, 96
    %v1001 = vpop.permute.xlu0 %1000
    %1002 = vrot.lane.b32.xlu0 %v687, 96
    %v1003 = vpop.permute.xlu0 %1002
    %1020 = vrot.lane.b32.xlu0 %v761, 24
    %v1021 = vpop.permute.xlu0 %1020
    %1022 = vrot.lane.b32.xlu0 %v764, 24
    %v1023 = vpop.permute.xlu0 %1022
    %1024 = vrot.lane.b32.xlu0 %v769, 24
    %v1025 = vpop.permute.xlu0 %1024
    %1026 = vrot.lane.b32.xlu0 %v772, 24
    %v1027 = vpop.permute.xlu0 %1026
    %1028 = vrot.lane.b32.xlu0 %v777, 24
    %v1029 = vpop.permute.xlu0 %1028
    %1030 = vrot.lane.b32.xlu0 %v780, 24
    %v1031 = vpop.permute.xlu0 %1030
    %1032 = vrot.lane.b32.xlu0 %v785, 24
    %v1033 = vpop.permute.xlu0 %1032
    %1034 = vrot.lane.b32.xlu0 %v788, 24
    %v1035 = vpop.permute.xlu0 %1034
    %1052 = vrot.lane.b32.xlu0 %v854, 80
    %v1053 = vpop.permute.xlu0 %1052
    %1054 = vrot.lane.b32.xlu0 %v857, 80
    %v1055 = vpop.permute.xlu0 %1054
    %1056 = vrot.lane.b32.xlu0 %v862, 80
    %v1057 = vpop.permute.xlu0 %1056
    %1058 = vrot.lane.b32.xlu0 %v865, 80
    %v1059 = vpop.permute.xlu0 %1058
    %1060 = vrot.lane.b32.xlu0 %v870, 80
    %v1061 = vpop.permute.xlu0 %1060
    %1062 = vrot.lane.b32.xlu0 %v873, 80
    %v1063 = vpop.permute.xlu0 %1062
    %1064 = vrot.lane.b32.xlu0 %v878, 80
    %v1065 = vpop.permute.xlu0 %1064
    %1066 = vrot.lane.b32.xlu0 %v881, 80
    %v1067 = vpop.permute.xlu0 %1066
    %vm1076 = vcmask 457728
    %v1077 = vsel %vm1076, %v272, %v893
    %v1078 = vsel %vm1076, %v275, %v895
    %v1079 = vsel %vm1076, %v280, %v897
    %v1080 = vsel %vm1076, %v283, %v899
    %v1081 = vsel %vm1076, %v288, %v901
    %v1082 = vsel %vm1076, %v291, %v903
    %v1083 = vsel %vm1076, %v296, %v905
    %v1084 = vsel %vm1076, %v299, %v907
    %vm1085 = vcmask 916480
    %v1086 = vsel %vm1085, %v1077, %v925
    %v1087 = vsel %vm1085, %v1078, %v927
    %v1088 = vsel %vm1085, %v1079, %v929
    %v1089 = vsel %vm1085, %v1080, %v931
    %v1090 = vsel %vm1085, %v1081, %v933
    %v1091 = vsel %vm1085, %v1082, %v935
    %v1092 = vsel %vm1085, %v1083, %v937
    %v1093 = vsel %vm1085, %v1084, %v939
    %vm1094 = vcmask 326656
    %v1095 = vsel %vm1094, %v925, %v957
    %v1096 = vsel %vm1094, %v927, %v959
    %v1097 = vsel %vm1094, %v929, %v961
    %v1098 = vsel %vm1094, %v931, %v963
    %v1099 = vsel %vm1094, %v933, %v965
    %v1100 = vsel %vm1094, %v935, %v967
    %v1101 = vsel %vm1094, %v937, %v969
    %v1102 = vsel %vm1094, %v939, %v971
    %vm1103 = vcmask 785408
    %v1104 = vsel %vm1103, %v1095, %v989
    %v1105 = vsel %vm1103, %v1096, %v991
    %v1106 = vsel %vm1103, %v1097, %v993
    %v1107 = vsel %vm1103, %v1098, %v995
    %v1108 = vsel %vm1103, %v1099, %v997
    %v1109 = vsel %vm1103, %v1100, %v999
    %v1110 = vsel %vm1103, %v1101, %v1001
    %v1111 = vsel %vm1103, %v1102, %v1003
    %vm1112 = vcmask 195584
    %v1113 = vsel %vm1112, %v989, %v1021
    %v1114 = vsel %vm1112, %v991, %v1023
    %v1115 = vsel %vm1112, %v993, %v1025
    %v1116 = vsel %vm1112, %v995, %v1027
    %v1117 = vsel %vm1112, %v997, %v1029
    %v1118 = vsel %vm1112, %v999, %v1031
    %v1119 = vsel %vm1112, %v1001, %v1033
    %v1120 = vsel %vm1112, %v1003, %v1035
    %vm1121 = vcmask 654336
    %v1122 = vsel %vm1121, %v1113, %v1053
    %v1123 = vsel %vm1121, %v1114, %v1055
    %v1124 = vsel %vm1121, %v1115, %v1057
    %v1125 = vsel %vm1121, %v1116, %v1059
    %v1126 = vsel %vm1121, %v1117, %v1061
    %v1127 = vsel %vm1121, %v1118, %v1063
    %v1128 = vsel %vm1121, %v1119, %v1065
    %v1129 = vsel %vm1121, %v1120, %v1067
    %v1130 = vld [vmem:[%s2] sm:$0xf]
    %v1132 = vlaneseq
    %v1133 = vshrl.u32 %v1132, 7
    %v1134 = vsub.s32 0, %v1133
    %v1135 = vrot.slane %v1130, %v1134
    %v1136 = vlaneseq
    %v1137 = vshrl.u32 %v1136, 7
    %v1138 = vsub.s32 1, %v1137
    %v1139 = vrot.slane %v1130, %v1138
    %v1140 = vlaneseq
    %v1141 = vshrl.u32 %v1140, 7
    %v1142 = vsub.s32 2, %v1141
    %v1143 = vrot.slane %v1130, %v1142
    %v1144 = vlaneseq
    %v1145 = vshrl.u32 %v1144, 7
    %v1146 = vsub.s32 3, %v1145
    %v1147 = vrot.slane %v1130, %v1146
    %v1152 = vadd.f32 %v1086, %v1135
    %v1153 = vadd.f32 %v1104, %v1139
    %v1154 = vadd.f32 %v1122, %v1143
    %v1155 = vadd.f32 %v1053, %v1147
    %v1156 = vadd.f32 %v1087, %v1135
    %v1157 = vadd.f32 %v1105, %v1139
    %v1158 = vadd.f32 %v1123, %v1143
    %v1159 = vadd.f32 %v1055, %v1147
    %v1160 = vadd.f32 %v1088, %v1135
    %v1161 = vadd.f32 %v1106, %v1139
    %v1162 = vadd.f32 %v1124, %v1143
    %v1163 = vadd.f32 %v1057, %v1147
    %v1164 = vadd.f32 %v1089, %v1135
    %v1165 = vadd.f32 %v1107, %v1139
    %v1166 = vadd.f32 %v1125, %v1143
    %v1167 = vadd.f32 %v1059, %v1147
    %v1168 = vadd.f32 %v1090, %v1135
    %v1169 = vadd.f32 %v1108, %v1139
    %v1170 = vadd.f32 %v1126, %v1143
    %v1171 = vadd.f32 %v1061, %v1147
    %v1172 = vadd.f32 %v1091, %v1135
    %v1173 = vadd.f32 %v1109, %v1139
    %v1174 = vadd.f32 %v1127, %v1143
    %v1175 = vadd.f32 %v1063, %v1147
    %v1176 = vadd.f32 %v1092, %v1135
    %v1177 = vadd.f32 %v1110, %v1139
    %v1178 = vadd.f32 %v1128, %v1143
    %v1179 = vadd.f32 %v1065, %v1147
    %v1180 = vadd.f32 %v1093, %v1135
    %v1181 = vadd.f32 %v1111, %v1139
    %v1182 = vadd.f32 %v1129, %v1143
    %v1183 = vadd.f32 %v1067, %v1147
    %v1184 = vmax.f32 %v1152, 0.0
    %v1185 = vmax.f32 %v1153, 0.0
    %v1186 = vmax.f32 %v1154, 0.0
    %v1187 = vmax.f32 %v1155, 0.0
    %v1188 = vmax.f32 %v1156, 0.0
    %v1189 = vmax.f32 %v1157, 0.0
    %v1190 = vmax.f32 %v1158, 0.0
    %v1191 = vmax.f32 %v1159, 0.0
    %v1192 = vmax.f32 %v1160, 0.0
    %v1193 = vmax.f32 %v1161, 0.0
    %v1194 = vmax.f32 %v1162, 0.0
    %v1195 = vmax.f32 %v1163, 0.0
    %v1196 = vmax.f32 %v1164, 0.0
    %v1197 = vmax.f32 %v1165, 0.0
    %v1198 = vmax.f32 %v1166, 0.0
    %v1199 = vmax.f32 %v1167, 0.0
    %v1200 = vmax.f32 %v1168, 0.0
    %v1201 = vmax.f32 %v1169, 0.0
    %v1202 = vmax.f32 %v1170, 0.0
    %v1203 = vmax.f32 %v1171, 0.0
    %v1204 = vmax.f32 %v1172, 0.0
    %v1205 = vmax.f32 %v1173, 0.0
    %v1206 = vmax.f32 %v1174, 0.0
    %v1207 = vmax.f32 %v1175, 0.0
    %v1208 = vmax.f32 %v1176, 0.0
    %v1209 = vmax.f32 %v1177, 0.0
    %v1210 = vmax.f32 %v1178, 0.0
    %v1211 = vmax.f32 %v1179, 0.0
    %v1212 = vmax.f32 %v1180, 0.0
    %v1213 = vmax.f32 %v1181, 0.0
    %v1214 = vmax.f32 %v1182, 0.0
    %v1215 = vmax.f32 %v1183, 0.0
    %v1216 = vpack.c.bf16 %v1188, %v1184
    %v1217 = vpack.c.bf16 %v1189, %v1185
    %v1218 = vpack.c.bf16 %v1190, %v1186
    %v1219 = vpack.c.bf16 %v1191, %v1187
    %v1220 = vpack.c.bf16 %v1196, %v1192
    %v1221 = vpack.c.bf16 %v1197, %v1193
    %v1222 = vpack.c.bf16 %v1198, %v1194
    %v1223 = vpack.c.bf16 %v1199, %v1195
    %v1224 = vpack.c.bf16 %v1204, %v1200
    %v1225 = vpack.c.bf16 %v1205, %v1201
    %v1226 = vpack.c.bf16 %v1206, %v1202
    %v1227 = vpack.c.bf16 %v1207, %v1203
    %v1228 = vpack.c.bf16 %v1212, %v1208
    %v1229 = vpack.c.bf16 %v1213, %v1209
    %v1230 = vpack.c.bf16 %v1214, %v1210
    %v1231 = vpack.c.bf16 %v1215, %v1211
    %v1232 = vld [vmem:[%s3] sm:$0xf]
    %v1233 = vld [vmem:[%s3 + $0x4] sm:$0xf]
    %v1234 = vld [vmem:[%s3 + $0x8] sm:$0xf]
    %v1235 = vld [vmem:[%s3 + $0xc] sm:$0xf]
    %v1236 = vld [vmem:[%s3 + $0x10] sm:$0xf]
    %v1237 = vld [vmem:[%s3 + $0x14] sm:$0xf]
    %v1238 = vld [vmem:[%s3 + $0x18] sm:$0xf]
    %v1239 = vld [vmem:[%s3 + $0x1c] sm:$0xf]
    %v1240 = vld [vmem:[%s3 + $0x20] sm:$0xf]
    %v1241 = vld [vmem:[%s3 + $0x24] sm:$0xf]
    %v1242 = vld [vmem:[%s3 + $0x28] sm:$0xf]
    %v1243 = vld [vmem:[%s3 + $0x2c] sm:$0xf]
    %v1244 = vld [vmem:[%s3 + $0x30] sm:$0xf]
    %v1245 = vld [vmem:[%s3 + $0x34] sm:$0xf]
    %v1246 = vld [vmem:[%s3 + $0x38] sm:$0xf]
    %v1247 = vld [vmem:[%s3 + $0x3c] sm:$0xf]
    %v1248 = vld [vmem:[%s3 + $0x40] sm:$0xf]
    %v1249 = vld [vmem:[%s3 + $0x44] sm:$0xf]
    %v1250 = vld [vmem:[%s3 + $0x48] sm:$0xf]
    %v1251 = vld [vmem:[%s3 + $0x4c] sm:$0xf]
    %v1252 = vld [vmem:[%s3 + $0x50] sm:$0xf]
    %v1253 = vld [vmem:[%s3 + $0x54] sm:$0xf]
    %v1254 = vld [vmem:[%s3 + $0x58] sm:$0xf]
    %v1255 = vld [vmem:[%s3 + $0x5c] sm:$0xf]
    %v1256 = vld [vmem:[%s3 + $0x60] sm:$0xf]
    %v1257 = vld [vmem:[%s3 + $0x64] sm:$0xf]
    %v1258 = vld [vmem:[%s3 + $0x68] sm:$0xf]
    %v1259 = vld [vmem:[%s3 + $0x6c] sm:$0xf]
    %v1260 = vld [vmem:[%s3 + $0x70] sm:$0xf]
    %v1261 = vld [vmem:[%s3 + $0x74] sm:$0xf]
    %v1262 = vld [vmem:[%s3 + $0x78] sm:$0xf]
    %v1263 = vld [vmem:[%s3 + $0x7c] sm:$0xf]
    %v1264 = vld [vmem:[%s3 + $0x80] sm:$0xf]
    %v1265 = vld [vmem:[%s3 + $0x84] sm:$0xf]
    %v1266 = vld [vmem:[%s3 + $0x88] sm:$0xf]
    %v1267 = vld [vmem:[%s3 + $0x8c] sm:$0xf]
    %v1268 = vld [vmem:[%s3 + $0x90] sm:$0xf]
    %v1269 = vld [vmem:[%s3 + $0x94] sm:$0xf]
    %v1270 = vld [vmem:[%s3 + $0x98] sm:$0xf]
    %v1271 = vld [vmem:[%s3 + $0x9c] sm:$0xf]
    %v1272 = vld [vmem:[%s3 + $0xa0] sm:$0xf]
    %v1273 = vld [vmem:[%s3 + $0xa4] sm:$0xf]
    %v1274 = vld [vmem:[%s3 + $0xa8] sm:$0xf]
    %v1275 = vld [vmem:[%s3 + $0xac] sm:$0xf]
    %v1276 = vld [vmem:[%s3 + $0xb0] sm:$0xf]
    %v1277 = vld [vmem:[%s3 + $0xb4] sm:$0xf]
    %v1278 = vld [vmem:[%s3 + $0xb8] sm:$0xf]
    %v1279 = vld [vmem:[%s3 + $0xbc] sm:$0xf]
    %v1280 = vld [vmem:[%s3 + $0xc0] sm:$0xf]
    %v1281 = vld [vmem:[%s4] sm:$0x1]
    %v1283 = vlaneseq
    %v1284 = vshrl.u32 %v1283, 7
    %v1285 = vsub.s32 0, %v1284
    %v1286 = vrot.slane %v1281, %v1285
    %v1337 = vunpack.c.l.b16 %v1232
    %v1338 = vunpack.c.l.b16 %v1233
    %v1339 = vunpack.c.l.b16 %v1234
    %v1340 = vunpack.c.l.b16 %v1235
    %v1341 = vunpack.c.l.b16 %v1236
    %v1342 = vunpack.c.l.b16 %v1237
    %v1343 = vunpack.c.l.b16 %v1238
    %v1344 = vunpack.c.l.b16 %v1239
    %v1345 = vunpack.c.l.b16 %v1240
    %v1346 = vunpack.c.l.b16 %v1241
    %v1347 = vunpack.c.l.b16 %v1242
    %v1348 = vunpack.c.l.b16 %v1243
    %v1349 = vunpack.c.l.b16 %v1244
    %v1350 = vunpack.c.l.b16 %v1245
    %v1351 = vunpack.c.l.b16 %v1246
    %v1352 = vunpack.c.l.b16 %v1247
    %v1353 = vunpack.c.l.b16 %v1248
    %v1354 = vunpack.c.l.b16 %v1249
    %v1355 = vunpack.c.l.b16 %v1250
    %v1356 = vunpack.c.l.b16 %v1251
    %v1357 = vunpack.c.l.b16 %v1252
    %v1358 = vunpack.c.l.b16 %v1253
    %v1359 = vunpack.c.l.b16 %v1254
    %v1360 = vunpack.c.l.b16 %v1255
    %v1361 = vunpack.c.l.b16 %v1256
    %v1362 = vunpack.c.l.b16 %v1257
    %v1363 = vunpack.c.l.b16 %v1258
    %v1364 = vunpack.c.l.b16 %v1259
    %v1365 = vunpack.c.l.b16 %v1260
    %v1366 = vunpack.c.l.b16 %v1261
    %v1367 = vunpack.c.l.b16 %v1262
    %v1368 = vunpack.c.l.b16 %v1263
    %v1369 = vunpack.c.l.b16 %v1264
    %v1370 = vunpack.c.l.b16 %v1265
    %v1371 = vunpack.c.l.b16 %v1266
    %v1372 = vunpack.c.l.b16 %v1267
    %v1373 = vunpack.c.l.b16 %v1268
    %v1374 = vunpack.c.l.b16 %v1269
    %v1375 = vunpack.c.l.b16 %v1270
    %v1376 = vunpack.c.l.b16 %v1271
    %v1377 = vunpack.c.l.b16 %v1272
    %v1378 = vunpack.c.l.b16 %v1273
    %v1379 = vunpack.c.l.b16 %v1274
    %v1380 = vunpack.c.l.b16 %v1275
    %v1381 = vunpack.c.l.b16 %v1276
    %v1382 = vunpack.c.l.b16 %v1277
    %v1383 = vunpack.c.l.b16 %v1278
    %v1384 = vunpack.c.l.b16 %v1279
    %v1385 = vunpack.c.l.b16 %v1280
    %v1386 = vpack.c.b16 %v1338, %v1337
    %v1387 = vpack.c.b16 %v1340, %v1339
    %v1388 = vpack.c.b16 %v1342, %v1341
    %v1389 = vpack.c.b16 %v1344, %v1343
    %v1390 = vpack.c.b16 %v1346, %v1345
    %v1391 = vpack.c.b16 %v1348, %v1347
    %v1392 = vpack.c.b16 %v1350, %v1349
    %v1393 = vpack.c.b16 %v1352, %v1351
    %v1394 = vpack.c.b16 %v1354, %v1353
    %v1395 = vpack.c.b16 %v1356, %v1355
    %v1396 = vpack.c.b16 %v1358, %v1357
    %v1397 = vpack.c.b16 %v1360, %v1359
    %v1398 = vpack.c.b16 %v1362, %v1361
    %v1399 = vpack.c.b16 %v1364, %v1363
    %v1400 = vpack.c.b16 %v1366, %v1365
    %v1401 = vpack.c.b16 %v1368, %v1367
    %v1402 = vpack.c.b16 %v1370, %v1369
    %v1403 = vpack.c.b16 %v1372, %v1371
    %v1404 = vpack.c.b16 %v1374, %v1373
    %v1405 = vpack.c.b16 %v1376, %v1375
    %v1406 = vpack.c.b16 %v1378, %v1377
    %v1407 = vpack.c.b16 %v1380, %v1379
    %v1408 = vpack.c.b16 %v1382, %v1381
    %v1409 = vpack.c.b16 %v1384, %v1383
    %v1410 = vpack.c.b16 %v1385, %v1385
    %vm1435 = vcmask 64512
    %v1437 = vsel %vm1435, %v1219, 0
    %v1440 = vsel %vm1435, %v1223, 0
    %v1443 = vsel %vm1435, %v1227, 0
    %v1446 = vsel %vm1435, %v1231, 0
    %vm1448 = vcmask 1043456
    %v1450 = vsel %vm1448, %v1410, 0
    %1452 = vmatprep.subr.bf16.mxu0 0
    %1453 = vmatpush1.bf16.msra.mxu0 %v1386
    %1454 = vmatprep.subr.bf16.mxu0 0
    %1455 = vmatpush1.bf16.msra.mxu0 %v1387
    %1456 = vmatprep.subr.bf16.mxu0 0
    %1457 = vmatpush1.bf16.msra.mxu0 %v1388
    %1458 = vmatprep.subr.bf16.mxu0 0
    %1459 = vmatpush1.bf16.msra.mxu0 %v1389
    %1460 = vmatprep.subr.bf16.mxu0 0
    %1461 = vmatpush1.bf16.msra.mxu0 %v1390
    %1462 = vmatprep.subr.bf16.mxu0 0
    %1463 = vmatpush1.bf16.msra.mxu0 %v1391
    %1464 = vmatprep.subr.bf16.mxu0 0
    %1465 = vmatpush1.bf16.msra.mxu0 %v1392
    %1466 = vmatprep.subr.bf16.mxu0 0
    %1467 = vmatpush1.bf16.msra.mxu0 %v1393
    %1468 = vmatprep.subr.bf16.mxu0 0
    %1469 = vmatpush1.bf16.msra.mxu0 %v1394
    %1470 = vmatprep.subr.bf16.mxu0 0
    %1471 = vmatpush1.bf16.msra.mxu0 %v1395
    %1472 = vmatprep.subr.bf16.mxu0 0
    %1473 = vmatpush1.bf16.msra.mxu0 %v1396
    %1474 = vmatprep.subr.bf16.mxu0 0
    %1475 = vmatpush1.bf16.msra.mxu0 %v1397
    %1476 = vmatprep.subr.bf16.mxu0 0
    %1477 = vmatpush1.bf16.msra.mxu0 %v1398
    %1478 = vmatprep.subr.bf16.mxu0 0
    %1479 = vmatpush1.bf16.msra.mxu0 %v1399
    %1480 = vmatprep.subr.bf16.mxu0 0
    %1481 = vmatpush1.bf16.msra.mxu0 %v1400
    %1482 = vmatprep.subr.bf16.mxu0 0
    %1483 = vmatpush1.bf16.msra.mxu0 %v1401
    %1484 = vmatprep.mubr.bf16.mxu0 %v1217
    %1485 = vmatmul.mubr.bf16.gmra.mrb[0].mxu0 %v1216
    %v1486 = vpop.f32.mrb[0].mxu0
    %v1487 = vadd.f32 %v1286, %v1486
    %v1488 = vpop.f32.mrb[0].mxu0
    %v1489 = vpop.f32.mrb[0].mxu0
    %v1490 = vadd.f32 %v1286, %v1489
    %v1491 = vpop.f32.mrb[0].mxu0
    %1492 = vmatprep.mubr.bf16.mxu0 %v1221
    %1493 = vmatmul.mubr.bf16.gmra.mrb[0].mxu0 %v1220
    %v1494 = vpop.f32.mrb[0].mxu0
    %v1495 = vadd.f32 %v1286, %v1494
    %v1496 = vpop.f32.mrb[0].mxu0
    %v1497 = vpop.f32.mrb[0].mxu0
    %v1498 = vadd.f32 %v1286, %v1497
    %v1499 = vpop.f32.mrb[0].mxu0
    %1500 = vmatprep.mubr.bf16.mxu0 %v1225
    %1501 = vmatmul.mubr.bf16.gmra.mrb[0].mxu0 %v1224
    %v1502 = vpop.f32.mrb[0].mxu0
    %v1503 = vadd.f32 %v1286, %v1502
    %v1504 = vpop.f32.mrb[0].mxu0
    %v1505 = vpop.f32.mrb[0].mxu0
    %v1506 = vadd.f32 %v1286, %v1505
    %v1507 = vpop.f32.mrb[0].mxu0
    %1508 = vmatprep.mubr.bf16.mxu0 %v1229
    %1509 = vmatmul.mubr.bf16.gmra.mrb[0].mxu0 %v1228
    %v1510 = vpop.f32.mrb[0].mxu0
    %v1511 = vadd.f32 %v1286, %v1510
    %v1512 = vpop.f32.mrb[0].mxu0
    %v1513 = vpop.f32.mrb[0].mxu0
    %v1514 = vadd.f32 %v1286, %v1513
    %v1515 = vpop.f32.mrb[0].mxu0
    %1516 = vdwg.mxu0
    %1517 = vmatprep.subr.bf16.mxu0 0
    %1518 = vmatpush1.bf16.msra.mxu0 %v1402
    %1519 = vmatprep.subr.bf16.mxu0 0
    %1520 = vmatpush1.bf16.msra.mxu0 %v1403
    %1521 = vmatprep.subr.bf16.mxu0 0
    %1522 = vmatpush1.bf16.msra.mxu0 %v1404
    %1523 = vmatprep.subr.bf16.mxu0 0
    %1524 = vmatpush1.bf16.msra.mxu0 %v1405
    %1525 = vmatprep.subr.bf16.mxu0 0
    %1526 = vmatpush1.bf16.msra.mxu0 %v1406
    %1527 = vmatprep.subr.bf16.mxu0 0
    %1528 = vmatpush1.bf16.msra.mxu0 %v1407
    %1529 = vmatprep.subr.bf16.mxu0 0
    %1530 = vmatpush1.bf16.msra.mxu0 %v1408
    %1531 = vmatprep.subr.bf16.mxu0 0
    %1532 = vmatpush1.bf16.msra.mxu0 %v1409
    %1533 = vmatprep.subr.bf16.mxu0 0
    %1534 = vmatpush1.bf16.msra.mxu0 %v1450
    %1535 = vmatprep.subr.bf16.mxu0 0
    %1536 = vmatpush1.bf16.msra.mxu0 0
    %1537 = vmatprep.subr.bf16.mxu0 0
    %1538 = vmatpush1.bf16.msra.mxu0 0
    %1539 = vmatprep.subr.bf16.mxu0 0
    %1540 = vmatpush1.bf16.msra.mxu0 0
    %1541 = vmatprep.subr.bf16.mxu0 0
    %1542 = vmatpush1.bf16.msra.mxu0 0
    %1543 = vmatprep.subr.bf16.mxu0 0
    %1544 = vmatpush1.bf16.msra.mxu0 0
    %1545 = vmatprep.subr.bf16.mxu0 0
    %1546 = vmatpush1.bf16.msra.mxu0 0
    %1547 = vmatprep.subr.bf16.mxu0 0
    %1548 = vmatpush1.bf16.msra.mxu0 0
    %1549 = vmatprep.mubr.bf16.mxu0 %v1437
    %1550 = vmatmul.mubr.bf16.gmra.mrb[0].mxu0 %v1218
    %v1551 = vpop.f32.mrb[0].mxu0
    %v1552 = vadd.f32 %v1487, %v1551
    %v1553 = vpop.f32.mrb[0].mxu0
    %v1554 = vpop.f32.mrb[0].mxu0
    %v1555 = vadd.f32 %v1490, %v1554
    %v1556 = vpop.f32.mrb[0].mxu0
    %1557 = vmatprep.mubr.bf16.mxu0 %v1440
    %1558 = vmatmul.mubr.bf16.gmra.mrb[0].mxu0 %v1222
    %v1559 = vpop.f32.mrb[0].mxu0
    %v1560 = vadd.f32 %v1495, %v1559
    %v1561 = vpop.f32.mrb[0].mxu0
    %v1562 = vpop.f32.mrb[0].mxu0
    %v1563 = vadd.f32 %v1498, %v1562
    %v1564 = vpop.f32.mrb[0].mxu0
    %1565 = vmatprep.mubr.bf16.mxu0 %v1443
    %1566 = vmatmul.mubr.bf16.gmra.mrb[0].mxu0 %v1226
    %v1567 = vpop.f32.mrb[0].mxu0
    %v1568 = vadd.f32 %v1503, %v1567
    %v1569 = vpop.f32.mrb[0].mxu0
    %v1570 = vpop.f32.mrb[0].mxu0
    %v1571 = vadd.f32 %v1506, %v1570
    %v1572 = vpop.f32.mrb[0].mxu0
    %1573 = vmatprep.mubr.bf16.mxu0 %v1446
    %1574 = vmatmul.mubr.bf16.gmra.mrb[0].mxu0 %v1230
    %v1575 = vpop.f32.mrb[0].mxu0
    %v1576 = vadd.f32 %v1511, %v1575
    %v1577 = vpop.f32.mrb[0].mxu0
    %v1578 = vpop.f32.mrb[0].mxu0
    %v1579 = vadd.f32 %v1514, %v1578
    %v1580 = vpop.f32.mrb[0].mxu0
    %1581 = vdwg.mxu0
    %v1582 = vmax.f32 %v1552, 0.0
    %v1583 = vmax.f32 %v1555, 0.0
    %v1584 = vmax.f32 %v1560, 0.0
    %v1585 = vmax.f32 %v1563, 0.0
    %v1586 = vmax.f32 %v1568, 0.0
    %v1587 = vmax.f32 %v1571, 0.0
    %v1588 = vmax.f32 %v1576, 0.0
    %v1589 = vmax.f32 %v1579, 0.0
    %v1590 = vpack.c.bf16 %v1583, %v1582
    %v1591 = vpack.c.bf16 %v1585, %v1584
    %v1592 = vpack.c.bf16 %v1587, %v1586
    %v1593 = vpack.c.bf16 %v1589, %v1588
    %v1594 = vld [vmem:[%s5] sm:$0xf]
    %v1595 = vld [vmem:[%s5 + $0x4] sm:$0xf]
    %v1596 = vld [vmem:[%s5 + $0x8] sm:$0xf]
    %v1597 = vld [vmem:[%s5 + $0xc] sm:$0xf]
    %v1598 = vld [vmem:[%s5 + $0x10] sm:$0xf]
    %v1599 = vld [vmem:[%s5 + $0x14] sm:$0xf]
    %v1600 = vld [vmem:[%s5 + $0x18] sm:$0xf]
    %v1601 = vld [vmem:[%s5 + $0x1c] sm:$0xf]
    %v1602 = vld [vmem:[%s6] sm:$0x1]
    %v1604 = vlaneseq
    %v1605 = vshrl.u32 %v1604, 7
    %v1606 = vsub.s32 0, %v1605
    %v1607 = vrot.slane %v1602, %v1606
    %v1617 = vunpack.c.l.b16 %v1594
    %v1618 = vunpack.c.l.b16 %v1595
    %v1619 = vunpack.c.l.b16 %v1596
    %v1620 = vunpack.c.l.b16 %v1597
    %v1621 = vunpack.c.l.b16 %v1598
    %v1622 = vunpack.c.l.b16 %v1599
    %v1623 = vunpack.c.l.b16 %v1600
    %v1624 = vunpack.c.l.b16 %v1601
    %v1625 = vpack.c.b16 %v1618, %v1617
    %v1626 = vpack.c.b16 %v1620, %v1619
    %v1627 = vpack.c.b16 %v1622, %v1621
    %v1628 = vpack.c.b16 %v1624, %v1623
    %v1634 = vsel %vm224, %v1590, 0
    %v1637 = vsel %vm224, %v1591, 0
    %v1640 = vsel %vm224, %v1592, 0
    %v1643 = vsel %vm224, %v1593, 0
    %1645 = vmatprep.subr.bf16.mxu0 0
    %1646 = vmatpush1.bf16.msra.mxu0 %v1625
    %1647 = vmatprep.subr.bf16.mxu0 0
    %1648 = vmatpush1.bf16.msra.mxu0 %v1626
    %1649 = vmatprep.subr.bf16.mxu0 0
    %1650 = vmatpush1.bf16.msra.mxu0 %v1627
    %1651 = vmatprep.subr.bf16.mxu0 0
    %1652 = vmatpush1.bf16.msra.mxu0 %v1628
    %1653 = vmatprep.subr.bf16.mxu0 0
    %1654 = vmatpush1.bf16.msra.mxu0 0
    %1655 = vmatprep.subr.bf16.mxu0 0
    %1656 = vmatpush1.bf16.msra.mxu0 0
    %1657 = vmatprep.subr.bf16.mxu0 0
    %1658 = vmatpush1.bf16.msra.mxu0 0
    %1659 = vmatprep.subr.bf16.mxu0 0
    %1660 = vmatpush1.bf16.msra.mxu0 0
    %1661 = vmatprep.subr.bf16.mxu0 0
    %1662 = vmatpush1.bf16.msra.mxu0 0
    %1663 = vmatprep.subr.bf16.mxu0 0
    %1664 = vmatpush1.bf16.msra.mxu0 0
    %1665 = vmatprep.subr.bf16.mxu0 0
    %1666 = vmatpush1.bf16.msra.mxu0 0
    %1667 = vmatprep.subr.bf16.mxu0 0
    %1668 = vmatpush1.bf16.msra.mxu0 0
    %1669 = vmatprep.subr.bf16.mxu0 0
    %1670 = vmatpush1.bf16.msra.mxu0 0
    %1671 = vmatprep.subr.bf16.mxu0 0
    %1672 = vmatpush1.bf16.msra.mxu0 0
    %1673 = vmatprep.subr.bf16.mxu0 0
    %1674 = vmatpush1.bf16.msra.mxu0 0
    %1675 = vmatprep.subr.bf16.mxu0 0
    %1676 = vmatpush1.bf16.msra.mxu0 0
    %1677 = vmatprep.mubr.bf16.mxu0 0
    %1678 = vmatmul.mubr.bf16.gmra.mrb[0].mxu0 %v1634
    %v1679 = vpop.f32.mrb[0].mxu0
    %v1680 = vadd.f32 %v1607, %v1679
    %v1681 = vpop.f32.mrb[0].mxu0
    %v1682 = vpop.f32.mrb[0].mxu0
    %v1683 = vadd.f32 %v1607, %v1682
    %v1684 = vpop.f32.mrb[0].mxu0
    %1685 = vmatprep.mubr.bf16.mxu0 0
    %1686 = vmatmul.mubr.bf16.gmra.mrb[0].mxu0 %v1637
    %v1687 = vpop.f32.mrb[0].mxu0
    %v1688 = vadd.f32 %v1607, %v1687
    %v1689 = vpop.f32.mrb[0].mxu0
    %v1690 = vpop.f32.mrb[0].mxu0
    %v1691 = vadd.f32 %v1607, %v1690
    %v1692 = vpop.f32.mrb[0].mxu0
    %1693 = vmatprep.mubr.bf16.mxu0 0
    %1694 = vmatmul.mubr.bf16.gmra.mrb[0].mxu0 %v1640
    %v1695 = vpop.f32.mrb[0].mxu0
    %v1696 = vadd.f32 %v1607, %v1695
    %v1697 = vpop.f32.mrb[0].mxu0
    %v1698 = vpop.f32.mrb[0].mxu0
    %v1699 = vadd.f32 %v1607, %v1698
    %v1700 = vpop.f32.mrb[0].mxu0
    %1701 = vmatprep.mubr.bf16.mxu0 0
    %1702 = vmatmul.mubr.bf16.gmra.mrb[0].mxu0 %v1643
    %v1703 = vpop.f32.mrb[0].mxu0
    %v1704 = vadd.f32 %v1607, %v1703
    %v1705 = vpop.f32.mrb[0].mxu0
    %v1706 = vpop.f32.mrb[0].mxu0
    %v1707 = vadd.f32 %v1607, %v1706
    %v1708 = vpop.f32.mrb[0].mxu0
    %1709 = vdwg.mxu0
    %v1710 = vmax.f32 %v1680, 0.0
    %v1711 = vmax.f32 %v1683, 0.0
    %v1712 = vmax.f32 %v1688, 0.0
    %v1713 = vmax.f32 %v1691, 0.0
    %v1714 = vmax.f32 %v1696, 0.0
    %v1715 = vmax.f32 %v1699, 0.0
    %v1716 = vmax.f32 %v1704, 0.0
    %v1717 = vmax.f32 %v1707, 0.0
    %v1718 = vpack.c.bf16 %v1711, %v1710
    %v1719 = vpack.c.bf16 %v1713, %v1712
    %v1720 = vpack.c.bf16 %v1715, %v1714
    %v1721 = vpack.c.bf16 %v1717, %v1716
    %v1722 = vld [vmem:[#allocation2] sm:$0xff]
    %v1723 = vld [vmem:[#allocation2 + $0x8] sm:$0xf]
    %v1724 = vld [vmem:[#allocation2 + $0xc] sm:$0xff]
    %v1725 = vld [vmem:[#allocation2 + $0x14] sm:$0xf]
    %v1726 = vld [vmem:[#allocation2 + $0x18] sm:$0xff]
    %v1727 = vld [vmem:[#allocation2 + $0x20] sm:$0xf]
    %v1728 = vld [vmem:[#allocation2 + $0x24] sm:$0xff]
    %v1729 = vld [vmem:[#allocation2 + $0x2c] sm:$0xf]
    %v1730 = vld [vmem:[%s8] sm:$0x7]
    %v1732 = vlaneseq
    %v1733 = vshrl.u32 %v1732, 7
    %v1734 = vsub.s32 0, %v1733
    %v1735 = vrot.slane %v1730, %v1734
    %v1736 = vlaneseq
    %v1737 = vshrl.u32 %v1736, 7
    %v1738 = vsub.s32 1, %v1737
    %v1739 = vrot.slane %v1730, %v1738
    %v1740 = vlaneseq
    %v1741 = vshrl.u32 %v1740, 7
    %v1742 = vsub.s32 2, %v1741
    %v1743 = vrot.slane %v1730, %v1742
    %v1755 = vunpack.c.l.b16 %v1722
    %v1756 = vunpack.c.h.b16 %v1722
    %v1757 = vunpack.c.l.b16 %v1723
    %v1758 = vunpack.c.l.b16 %v1724
    %v1759 = vunpack.c.h.b16 %v1724
    %v1760 = vunpack.c.l.b16 %v1725
    %v1761 = vunpack.c.l.b16 %v1726
    %v1762 = vunpack.c.h.b16 %v1726
    %v1763 = vunpack.c.l.b16 %v1727
    %v1764 = vunpack.c.l.b16 %v1728
    %v1765 = vunpack.c.h.b16 %v1728
    %v1766 = vunpack.c.l.b16 %v1729
    %v1767 = vpack.c.b16 %v1758, %v1755
    %v1768 = vpack.c.b16 %v1759, %v1756
    %v1769 = vpack.c.b16 %v1760, %v1757
    %v1770 = vpack.c.b16 %v1764, %v1761
    %v1771 = vpack.c.b16 %v1765, %v1762
    %v1772 = vpack.c.b16 %v1766, %v1763
    %vm1779 = vcmask 261120
    %v1781 = vsel %vm1779, %v1718, 0
    %v1784 = vsel %vm1779, %v1719, 0
    %v1787 = vsel %vm1779, %v1720, 0
    %v1790 = vsel %vm1779, %v1721, 0
    %1792 = vmatprep.subr.bf16.mxu0 %v1768
    %1793 = vmatpush1.bf16.msra.mxu0 %v1767
    %1794 = vmatprep.subr.bf16.mxu0 %v1771
    %1795 = vmatpush1.bf16.msra.mxu0 %v1770
    %1796 = vmatprep.subr.bf16.mxu0 0
    %1797 = vmatpush1.bf16.msra.mxu0 0
    %1798 = vmatprep.subr.bf16.mxu0 0
    %1799 = vmatpush1.bf16.msra.mxu0 0
    %1800 = vmatprep.subr.bf16.mxu0 0
    %1801 = vmatpush1.bf16.msra.mxu0 0
    %1802 = vmatprep.subr.bf16.mxu0 0
    %1803 = vmatpush1.bf16.msra.mxu0 0
    %1804 = vmatprep.subr.bf16.mxu0 0
    %1805 = vmatpush1.bf16.msra.mxu0 0
    %1806 = vmatprep.subr.bf16.mxu0 0
    %1807 = vmatpush1.bf16.msra.mxu0 0
    %1808 = vmatprep.subr.bf16.mxu0 0
    %1809 = vmatpush1.bf16.msra.mxu0 0
    %1810 = vmatprep.subr.bf16.mxu0 0
    %1811 = vmatpush1.bf16.msra.mxu0 0
    %1812 = vmatprep.subr.bf16.mxu0 0
    %1813 = vmatpush1.bf16.msra.mxu0 0
    %1814 = vmatprep.subr.bf16.mxu0 0
    %1815 = vmatpush1.bf16.msra.mxu0 0
    %1816 = vmatprep.subr.bf16.mxu0 0
    %1817 = vmatpush1.bf16.msra.mxu0 0
    %1818 = vmatprep.subr.bf16.mxu0 0
    %1819 = vmatpush1.bf16.msra.mxu0 0
    %1820 = vmatprep.subr.bf16.mxu0 0
    %1821 = vmatpush1.bf16.msra.mxu0 0
    %1822 = vmatprep.subr.bf16.mxu0 0
    %1823 = vmatpush1.bf16.msra.mxu0 0
    %1824 = vmatprep.mubr.bf16.mxu0 0
    %1825 = vmatmul.mubr.bf16.gmra.mrb[0].mxu0 %v1781
    %v1826 = vpop.f32.mrb[0].mxu0
    %v1827 = vadd.f32 %v1735, %v1826
    %v1828 = vpop.f32.mrb[0].mxu0
    %v1829 = vadd.f32 %v1739, %v1828
    %v1830 = vpop.f32.mrb[0].mxu0
    %v1831 = vadd.f32 %v1735, %v1830
    %v1832 = vpop.f32.mrb[0].mxu0
    %v1833 = vadd.f32 %v1739, %v1832
    %1834 = vmatprep.mubr.bf16.mxu0 0
    %1835 = vmatmul.mubr.bf16.gmra.mrb[0].mxu0 %v1784
    %v1836 = vpop.f32.mrb[0].mxu0
    %v1837 = vadd.f32 %v1735, %v1836
    %v1838 = vpop.f32.mrb[0].mxu0
    %v1839 = vadd.f32 %v1739, %v1838
    %v1840 = vpop.f32.mrb[0].mxu0
    %v1841 = vadd.f32 %v1735, %v1840
    %v1842 = vpop.f32.mrb[0].mxu0
    %v1843 = vadd.f32 %v1739, %v1842
    %1844 = vmatprep.mubr.bf16.mxu0 0
    %1845 = vmatmul.mubr.bf16.gmra.mrb[0].mxu0 %v1787
    %v1846 = vpop.f32.mrb[0].mxu0
    %v1847 = vadd.f32 %v1735, %v1846
    %v1848 = vpop.f32.mrb[0].mxu0
    %v1849 = vadd.f32 %v1739, %v1848
    %v1850 = vpop.f32.mrb[0].mxu0
    %v1851 = vadd.f32 %v1735, %v1850
    %v1852 = vpop.f32.mrb[0].mxu0
    %v1853 = vadd.f32 %v1739, %v1852
    %1854 = vmatprep.mubr.bf16.mxu0 0
    %1855 = vmatmul.mubr.bf16.gmra.mrb[0].mxu0 %v1790
    %v1856 = vpop.f32.mrb[0].mxu0
    %v1857 = vadd.f32 %v1735, %v1856
    %v1858 = vpop.f32.mrb[0].mxu0
    %v1859 = vadd.f32 %v1739, %v1858
    %v1860 = vpop.f32.mrb[0].mxu0
    %v1861 = vadd.f32 %v1735, %v1860
    %v1862 = vpop.f32.mrb[0].mxu0
    %v1863 = vadd.f32 %v1739, %v1862
    %1864 = vdwg.mxu0
    %1865 = vmatprep.subr.bf16.mxu0 0
    %1866 = vmatpush1.bf16.msra.mxu0 %v1769
    %1867 = vmatprep.subr.bf16.mxu0 0
    %1868 = vmatpush1.bf16.msra.mxu0 %v1772
    %1869 = vmatprep.subr.bf16.mxu0 0
    %1870 = vmatpush1.bf16.msra.mxu0 0
    %1871 = vmatprep.subr.bf16.mxu0 0
    %1872 = vmatpush1.bf16.msra.mxu0 0
    %1873 = vmatprep.subr.bf16.mxu0 0
    %1874 = vmatpush1.bf16.msra.mxu0 0
    %1875 = vmatprep.subr.bf16.mxu0 0
    %1876 = vmatpush1.bf16.msra.mxu0 0
    %1877 = vmatprep.subr.bf16.mxu0 0
    %1878 = vmatpush1.bf16.msra.mxu0 0
    %1879 = vmatprep.subr.bf16.mxu0 0
    %1880 = vmatpush1.bf16.msra.mxu0 0
    %1881 = vmatprep.subr.bf16.mxu0 0
    %1882 = vmatpush1.bf16.msra.mxu0 0
    %1883 = vmatprep.subr.bf16.mxu0 0
    %1884 = vmatpush1.bf16.msra.mxu0 0
    %1885 = vmatprep.subr.bf16.mxu0 0
    %1886 = vmatpush1.bf16.msra.mxu0 0
    %1887 = vmatprep.subr.bf16.mxu0 0
    %1888 = vmatpush1.bf16.msra.mxu0 0
    %1889 = vmatprep.subr.bf16.mxu0 0
    %1890 = vmatpush1.bf16.msra.mxu0 0
    %1891 = vmatprep.subr.bf16.mxu0 0
    %1892 = vmatpush1.bf16.msra.mxu0 0
    %1893 = vmatprep.subr.bf16.mxu0 0
    %1894 = vmatpush1.bf16.msra.mxu0 0
    %1895 = vmatprep.subr.bf16.mxu0 0
    %1896 = vmatpush1.bf16.msra.mxu0 0
    %1897 = vmatprep.mubr.bf16.mxu0 0
    %1898 = vmatmul.mubr.bf16.gmra.mrb[0].mxu0 %v1781
    %v1899 = vpop.f32.mrb[0].mxu0
    %v1900 = vadd.f32 %v1743, %v1899
    %v1901 = vpop.f32.mrb[0].mxu0
    %v1902 = vpop.f32.mrb[0].mxu0
    %v1903 = vadd.f32 %v1743, %v1902
    %v1904 = vpop.f32.mrb[0].mxu0
    %1905 = vmatprep.mubr.bf16.mxu0 0
    %1906 = vmatmul.mubr.bf16.gmra.mrb[0].mxu0 %v1784
    %v1907 = vpop.f32.mrb[0].mxu0
    %v1908 = vadd.f32 %v1743, %v1907
    %v1909 = vpop.f32.mrb[0].mxu0
    %v1910 = vpop.f32.mrb[0].mxu0
    %v1911 = vadd.f32 %v1743, %v1910
    %v1912 = vpop.f32.mrb[0].mxu0
    %1913 = vmatprep.mubr.bf16.mxu0 0
    %1914 = vmatmul.mubr.bf16.gmra.mrb[0].mxu0 %v1787
    %v1915 = vpop.f32.mrb[0].mxu0
    %v1916 = vadd.f32 %v1743, %v1915
    %v1917 = vpop.f32.mrb[0].mxu0
    %v1918 = vpop.f32.mrb[0].mxu0
    %v1919 = vadd.f32 %v1743, %v1918
    %v1920 = vpop.f32.mrb[0].mxu0
    %1921 = vmatprep.mubr.bf16.mxu0 0
    %1922 = vmatmul.mubr.bf16.gmra.mrb[0].mxu0 %v1790
    %v1923 = vpop.f32.mrb[0].mxu0
    %v1924 = vadd.f32 %v1743, %v1923
    %v1925 = vpop.f32.mrb[0].mxu0
    %v1926 = vpop.f32.mrb[0].mxu0
    %v1927 = vadd.f32 %v1743, %v1926
    %v1928 = vpop.f32.mrb[0].mxu0
    %1929 = vdwg.mxu0
    %v1930 = vld [vmem:[%s9] sm:$0xff]
    %v1931 = vld [vmem:[%s9 + $0x8] sm:$0xf]
    %v1932 = vld [vmem:[%s9 + $0xc] sm:$0xff]
    %v1933 = vld [vmem:[%s9 + $0x14] sm:$0xf]
    %v1934 = vld [vmem:[%s9 + $0x18] sm:$0xff]
    %v1935 = vld [vmem:[%s9 + $0x20] sm:$0xf]
    %v1936 = vld [vmem:[%s9 + $0x24] sm:$0xff]
    %v1937 = vld [vmem:[%s9 + $0x2c] sm:$0xf]
    %v1938 = vld [vmem:[%s9 + $0x30] sm:$0xff]
    %v1939 = vld [vmem:[%s9 + $0x38] sm:$0xf]
    %v1940 = vld [vmem:[%s9 + $0x3c] sm:$0xff]
    %v1941 = vld [vmem:[%s9 + $0x44] sm:$0xf]
    %v1942 = vld [vmem:[%s9 + $0x48] sm:$0xff]
    %v1943 = vld [vmem:[%s9 + $0x50] sm:$0xf]
    %v1944 = vld [vmem:[%s9 + $0x54] sm:$0xff]
    %v1945 = vld [vmem:[%s9 + $0x5c] sm:$0xf]
    %v1946 = vld [vmem:[%s9 + $0x60] sm:$0xff]
    %v1947 = vld [vmem:[%s9 + $0x68] sm:$0xf]
    %v1948 = vld [vmem:[%s9 + $0x6c] sm:$0xff]
    %v1949 = vld [vmem:[%s9 + $0x74] sm:$0xf]
    %v1950 = vld [vmem:[%s9 + $0x78] sm:$0xff]
    %v1951 = vld [vmem:[%s9 + $0x80] sm:$0xf]
    %v1952 = vld [vmem:[%s9 + $0x84] sm:$0xff]
    %v1953 = vld [vmem:[%s9 + $0x8c] sm:$0xf]
    %v1954 = vld [vmem:[%s9 + $0x90] sm:$0xff]
    %v1955 = vld [vmem:[%s9 + $0x98] sm:$0xf]
    %v1956 = vld [vmem:[%s9 + $0x9c] sm:$0xff]
    %v1957 = vld [vmem:[%s9 + $0xa4] sm:$0xf]
    %v1958 = vld [vmem:[%s9 + $0xa8] sm:$0xff]
    %v1959 = vld [vmem:[%s9 + $0xb0] sm:$0xf]
    %v1960 = vld [vmem:[%s9 + $0xb4] sm:$0xff]
    %v1961 = vld [vmem:[%s9 + $0xbc] sm:$0xf]
    %v1962 = vld [vmem:[%s10] sm:$0x7]
    %v1964 = vlaneseq
    %v1965 = vshrl.u32 %v1964, 7
    %v1966 = vsub.s32 0, %v1965
    %v1967 = vrot.slane %v1962, %v1966
    %v1968 = vlaneseq
    %v1969 = vshrl.u32 %v1968, 7
    %v1970 = vsub.s32 1, %v1969
    %v1971 = vrot.slane %v1962, %v1970
    %v1972 = vlaneseq
    %v1973 = vshrl.u32 %v1972, 7
    %v1974 = vsub.s32 2, %v1973
    %v1975 = vrot.slane %v1962, %v1974
    %v2011 = vunpack.c.l.b16 %v1930
    %v2012 = vunpack.c.h.b16 %v1930
    %v2013 = vunpack.c.l.b16 %v1931
    %v2014 = vunpack.c.l.b16 %v1932
    %v2015 = vunpack.c.h.b16 %v1932
    %v2016 = vunpack.c.l.b16 %v1933
    %v2017 = vunpack.c.l.b16 %v1934
    %v2018 = vunpack.c.h.b16 %v1934
    %v2019 = vunpack.c.l.b16 %v1935
    %v2020 = vunpack.c.l.b16 %v1936
    %v2021 = vunpack.c.h.b16 %v1936
    %v2022 = vunpack.c.l.b16 %v1937
    %v2023 = vunpack.c.l.b16 %v1938
    %v2024 = vunpack.c.h.b16 %v1938
    %v2025 = vunpack.c.l.b16 %v1939
    %v2026 = vunpack.c.l.b16 %v1940
    %v2027 = vunpack.c.h.b16 %v1940
    %v2028 = vunpack.c.l.b16 %v1941
    %v2029 = vunpack.c.l.b16 %v1942
    %v2030 = vunpack.c.h.b16 %v1942
    %v2031 = vunpack.c.l.b16 %v1943
    %v2032 = vunpack.c.l.b16 %v1944
    %v2033 = vunpack.c.h.b16 %v1944
    %v2034 = vunpack.c.l.b16 %v1945
    %v2035 = vunpack.c.l.b16 %v1946
    %v2036 = vunpack.c.h.b16 %v1946
    %v2037 = vunpack.c.l.b16 %v1947
    %v2038 = vunpack.c.l.b16 %v1948
    %v2039 = vunpack.c.h.b16 %v1948
    %v2040 = vunpack.c.l.b16 %v1949
    %v2041 = vunpack.c.l.b16 %v1950
    %v2042 = vunpack.c.h.b16 %v1950
    %v2043 = vunpack.c.l.b16 %v1951
    %v2044 = vunpack.c.l.b16 %v1952
    %v2045 = vunpack.c.h.b16 %v1952
    %v2046 = vunpack.c.l.b16 %v1953
    %v2047 = vunpack.c.l.b16 %v1954
    %v2048 = vunpack.c.h.b16 %v1954
    %v2049 = vunpack.c.l.b16 %v1955
    %v2050 = vunpack.c.l.b16 %v1956
    %v2051 = vunpack.c.h.b16 %v1956
    %v2052 = vunpack.c.l.b16 %v1957
    %v2053 = vunpack.c.l.b16 %v1958
    %v2054 = vunpack.c.h.b16 %v1958
    %v2055 = vunpack.c.l.b16 %v1959
    %v2056 = vunpack.c.l.b16 %v1960
    %v2057 = vunpack.c.h.b16 %v1960
    %v2058 = vunpack.c.l.b16 %v1961
    %v2059 = vpack.c.b16 %v2014, %v2011
    %v2060 = vpack.c.b16 %v2015, %v2012
    %v2061 = vpack.c.b16 %v2016, %v2013
    %v2062 = vpack.c.b16 %v2020, %v2017
    %v2063 = vpack.c.b16 %v2021, %v2018
    %v2064 = vpack.c.b16 %v2022, %v2019
    %v2065 = vpack.c.b16 %v2026, %v2023
    %v2066 = vpack.c.b16 %v2027, %v2024
    %v2067 = vpack.c.b16 %v2028, %v2025
    %v2068 = vpack.c.b16 %v2032, %v2029
    %v2069 = vpack.c.b16 %v2033, %v2030
    %v2070 = vpack.c.b16 %v2034, %v2031
    %v2071 = vpack.c.b16 %v2038, %v2035
    %v2072 = vpack.c.b16 %v2039, %v2036
    %v2073 = vpack.c.b16 %v2040, %v2037
    %v2074 = vpack.c.b16 %v2044, %v2041
    %v2075 = vpack.c.b16 %v2045, %v2042
    %v2076 = vpack.c.b16 %v2046, %v2043
    %v2077 = vpack.c.b16 %v2050, %v2047
    %v2078 = vpack.c.b16 %v2051, %v2048
    %v2079 = vpack.c.b16 %v2052, %v2049
    %v2080 = vpack.c.b16 %v2056, %v2053
    %v2081 = vpack.c.b16 %v2057, %v2054
    %v2082 = vpack.c.b16 %v2058, %v2055
    %2107 = vmatprep.subr.bf16.mxu0 %v2060
    %2108 = vmatpush1.bf16.msra.mxu0 %v2059
    %2109 = vmatprep.subr.bf16.mxu0 %v2063
    %2110 = vmatpush1.bf16.msra.mxu0 %v2062
    %2111 = vmatprep.subr.bf16.mxu0 %v2066
    %2112 = vmatpush1.bf16.msra.mxu0 %v2065
    %2113 = vmatprep.subr.bf16.mxu0 %v2069
    %2114 = vmatpush1.bf16.msra.mxu0 %v2068
    %2115 = vmatprep.subr.bf16.mxu0 %v2072
    %2116 = vmatpush1.bf16.msra.mxu0 %v2071
    %2117 = vmatprep.subr.bf16.mxu0 %v2075
    %2118 = vmatpush1.bf16.msra.mxu0 %v2074
    %2119 = vmatprep.subr.bf16.mxu0 %v2078
    %2120 = vmatpush1.bf16.msra.mxu0 %v2077
    %2121 = vmatprep.subr.bf16.mxu0 %v2081
    %2122 = vmatpush1.bf16.msra.mxu0 %v2080
    %2123 = vmatprep.subr.bf16.mxu0 0
    %2124 = vmatpush1.bf16.msra.mxu0 0
    %2125 = vmatprep.subr.bf16.mxu0 0
    %2126 = vmatpush1.bf16.msra.mxu0 0
    %2127 = vmatprep.subr.bf16.mxu0 0
    %2128 = vmatpush1.bf16.msra.mxu0 0
    %2129 = vmatprep.subr.bf16.mxu0 0
    %2130 = vmatpush1.bf16.msra.mxu0 0
    %2131 = vmatprep.subr.bf16.mxu0 0
    %2132 = vmatpush1.bf16.msra.mxu0 0
    %2133 = vmatprep.subr.bf16.mxu0 0
    %2134 = vmatpush1.bf16.msra.mxu0 0
    %2135 = vmatprep.subr.bf16.mxu0 0
    %2136 = vmatpush1.bf16.msra.mxu0 0
    %2137 = vmatprep.subr.bf16.mxu0 0
    %2138 = vmatpush1.bf16.msra.mxu0 0
    %2139 = vmatprep.mubr.bf16.mxu0 0
    %2140 = vmatmul.mubr.bf16.gmra.mrb[0].mxu0 0
    %v2141 = vpop.f32.mrb[0].mxu0
    %v2142 = vadd.f32 %v1967, %v2141
    %v2143 = vpop.f32.mrb[0].mxu0
    %v2144 = vadd.f32 %v1971, %v2143
    %v2145 = vpop.f32.mrb[0].mxu0
    %v2146 = vpop.f32.mrb[0].mxu0
    %2147 = vdwg.mxu0
    %2148 = vmatprep.subr.bf16.mxu0 0
    %2149 = vmatpush1.bf16.msra.mxu0 %v2061
    %2150 = vmatprep.subr.bf16.mxu0 0
    %2151 = vmatpush1.bf16.msra.mxu0 %v2064
    %2152 = vmatprep.subr.bf16.mxu0 0
    %2153 = vmatpush1.bf16.msra.mxu0 %v2067
    %2154 = vmatprep.subr.bf16.mxu0 0
    %2155 = vmatpush1.bf16.msra.mxu0 %v2070
    %2156 = vmatprep.subr.bf16.mxu0 0
    %2157 = vmatpush1.bf16.msra.mxu0 %v2073
    %2158 = vmatprep.subr.bf16.mxu0 0
    %2159 = vmatpush1.bf16.msra.mxu0 %v2076
    %2160 = vmatprep.subr.bf16.mxu0 0
    %2161 = vmatpush1.bf16.msra.mxu0 %v2079
    %2162 = vmatprep.subr.bf16.mxu0 0
    %2163 = vmatpush1.bf16.msra.mxu0 %v2082
    %2164 = vmatprep.subr.bf16.mxu0 0
    %2165 = vmatpush1.bf16.msra.mxu0 0
    %2166 = vmatprep.subr.bf16.mxu0 0
    %2167 = vmatpush1.bf16.msra.mxu0 0
    %2168 = vmatprep.subr.bf16.mxu0 0
    %2169 = vmatpush1.bf16.msra.mxu0 0
    %2170 = vmatprep.subr.bf16.mxu0 0
    %2171 = vmatpush1.bf16.msra.mxu0 0
    %2172 = vmatprep.subr.bf16.mxu0 0
    %2173 = vmatpush1.bf16.msra.mxu0 0
    %2174 = vmatprep.subr.bf16.mxu0 0
    %2175 = vmatpush1.bf16.msra.mxu0 0
    %2176 = vmatprep.subr.bf16.mxu0 0
    %2177 = vmatpush1.bf16.msra.mxu0 0
    %2178 = vmatprep.subr.bf16.mxu0 0
    %2179 = vmatpush1.bf16.msra.mxu0 0
    %2180 = vmatprep.mubr.bf16.mxu0 0
    %2181 = vmatmul.mubr.bf16.gmra.mrb[0].mxu0 0
    %v2182 = vpop.f32.mrb[0].mxu0
    %v2183 = vadd.f32 %v1975, %v2182
    %v2184 = vpop.f32.mrb[0].mxu0
    %v2185 = vpop.f32.mrb[0].mxu0
    %v2186 = vpop.f32.mrb[0].mxu0
    %2187 = vdwg.mxu0
    %v2188 = vadd.f32 %v1827, %v2142
    %v2189 = vxor.u32 %v2188, 2147483648
    %v2190 = vmul.f32 %v2189, 1.442695
    %v2191 = vpow.pop %v2190
    %v2192 = vadd.f32 %v2191, 1.0
    %v2193 = vrcp.pop %v2192
    %v2194 = vmul.f32 1.0, %v2193
    %v2195 = vadd.f32 %v1829, %v2144
    %v2196 = vxor.u32 %v2195, 2147483648
    %v2197 = vmul.f32 %v2196, 1.442695
    %v2198 = vpow.pop %v2197
    %v2199 = vadd.f32 %v2198, 1.0
    %v2200 = vrcp.pop %v2199
    %v2201 = vmul.f32 1.0, %v2200
    %v2202 = vmul.f32 %v2194, %v2183
    %v2203 = vadd.f32 %v1900, %v2202
    %v2204 = vtanh.pop %v2203
    %v2205 = vsub.f32 1.0, %v2201
    %v2206 = vmul.f32 %v2205, %v2204
    %v2207 = vmul.f32 %v2201, 0.0
    %v2208 = vadd.f32 %v2206, %v2207
    %v2209 = vpack.c.bf16 %v2208, %v2208
    %2210 = vmatprep.subr.bf16.mxu0 %v2060
    %2211 = vmatpush1.bf16.msra.mxu0 %v2059
    %2212 = vmatprep.subr.bf16.mxu0 %v2063
    %2213 = vmatpush1.bf16.msra.mxu0 %v2062
    %2214 = vmatprep.subr.bf16.mxu0 %v2066
    %2215 = vmatpush1.bf16.msra.mxu0 %v2065
    %2216 = vmatprep.subr.bf16.mxu0 %v2069
    %2217 = vmatpush1.bf16.msra.mxu0 %v2068
    %2218 = vmatprep.subr.bf16.mxu0 %v2072
    %2219 = vmatpush1.bf16.msra.mxu0 %v2071
    %2220 = vmatprep.subr.bf16.mxu0 %v2075
    %2221 = vmatpush1.bf16.msra.mxu0 %v2074
    %2222 = vmatprep.subr.bf16.mxu0 %v2078
    %2223 = vmatpush1.bf16.msra.mxu0 %v2077
    %2224 = vmatprep.subr.bf16.mxu0 %v2081
    %2225 = vmatpush1.bf16.msra.mxu0 %v2080
    %2226 = vmatprep.subr.bf16.mxu0 0
    %2227 = vmatpush1.bf16.msra.mxu0 0
    %2228 = vmatprep.subr.bf16.mxu0 0
    %2229 = vmatpush1.bf16.msra.mxu0 0
    %2230 = vmatprep.subr.bf16.mxu0 0
    %2231 = vmatpush1.bf16.msra.mxu0 0
    %2232 = vmatprep.subr.bf16.mxu0 0
    %2233 = vmatpush1.bf16.msra.mxu0 0
    %2234 = vmatprep.subr.bf16.mxu0 0
    %2235 = vmatpush1.bf16.msra.mxu0 0
    %2236 = vmatprep.subr.bf16.mxu0 0
    %2237 = vmatpush1.bf16.msra.mxu0 0
    %2238 = vmatprep.subr.bf16.mxu0 0
    %2239 = vmatpush1.bf16.msra.mxu0 0
    %2240 = vmatprep.subr.bf16.mxu0 0
    %2241 = vmatpush1.bf16.msra.mxu0 0
    %2242 = vmatprep.mubr.bf16.mxu0 0
    %2243 = vmatmul.mubr.bf16.gmra.mrb[0].mxu0 %v2209
    %v2244 = vpop.f32.mrb[0].mxu0
    %v2245 = vadd.f32 %v1967, %v2244
    %v2246 = vpop.f32.mrb[0].mxu0
    %v2247 = vadd.f32 %v1971, %v2246
    %v2248 = vpop.f32.mrb[0].mxu0
    %v2249 = vpop.f32.mrb[0].mxu0
    %2250 = vdwg.mxu0
    %2251 = vmatprep.subr.bf16.mxu0 0
    %2252 = vmatpush1.bf16.msra.mxu0 %v2061
    %2253 = vmatprep.subr.bf16.mxu0 0
    %2254 = vmatpush1.bf16.msra.mxu0 %v2064
    %2255 = vmatprep.subr.bf16.mxu0 0
    %2256 = vmatpush1.bf16.msra.mxu0 %v2067
    %2257 = vmatprep.subr.bf16.mxu0 0
    %2258 = vmatpush1.bf16.msra.mxu0 %v2070
    %2259 = vmatprep.subr.bf16.mxu0 0
    %2260 = vmatpush1.bf16.msra.mxu0 %v2073
    %2261 = vmatprep.subr.bf16.mxu0 0
    %2262 = vmatpush1.bf16.msra.mxu0 %v2076
    %2263 = vmatprep.subr.bf16.mxu0 0
    %2264 = vmatpush1.bf16.msra.mxu0 %v2079
    %2265 = vmatprep.subr.bf16.mxu0 0
    %2266 = vmatpush1.bf16.msra.mxu0 %v2082
    %2267 = vmatprep.subr.bf16.mxu0 0
    %2268 = vmatpush1.bf16.msra.mxu0 0
    %2269 = vmatprep.subr.bf16.mxu0 0
    %2270 = vmatpush1.bf16.msra.mxu0 0
    %2271 = vmatprep.subr.bf16.mxu0 0
    %2272 = vmatpush1.bf16.msra.mxu0 0
    %2273 = vmatprep.subr.bf16.mxu0 0
    %2274 = vmatpush1.bf16.msra.mxu0 0
    %2275 = vmatprep.subr.bf16.mxu0 0
    %2276 = vmatpush1.bf16.msra.mxu0 0
    %2277 = vmatprep.subr.bf16.mxu0 0
    %2278 = vmatpush1.bf16.msra.mxu0 0
    %2279 = vmatprep.subr.bf16.mxu0 0
    %2280 = vmatpush1.bf16.msra.mxu0 0
    %2281 = vmatprep.subr.bf16.mxu0 0
    %2282 = vmatpush1.bf16.msra.mxu0 0
    %2283 = vmatprep.mubr.bf16.mxu0 0
    %2284 = vmatmul.mubr.bf16.gmra.mrb[0].mxu0 %v2209
    %v2285 = vpop.f32.mrb[0].mxu0
    %v2286 = vadd.f32 %v1975, %v2285
    %v2287 = vpop.f32.mrb[0].mxu0
    %v2288 = vpop.f32.mrb[0].mxu0
    %v2289 = vpop.f32.mrb[0].mxu0
    %2290 = vdwg.mxu0
    %v2291 = vadd.f32 %v1831, %v2245
    %v2292 = vxor.u32 %v2291, 2147483648
    %v2293 = vmul.f32 %v2292, 1.442695
    %v2294 = vpow.pop %v2293
    %v2295 = vadd.f32 %v2294, 1.0
    %v2296 = vrcp.pop %v2295
    %v2297 = vmul.f32 1.0, %v2296
    %v2298 = vadd.f32 %v1833, %v2247
    %v2299 = vxor.u32 %v2298, 2147483648
    %v2300 = vmul.f32 %v2299, 1.442695
    %v2301 = vpow.pop %v2300
    %v2302 = vadd.f32 %v2301, 1.0
    %v2303 = vrcp.pop %v2302
    %v2304 = vmul.f32 1.0, %v2303
    %v2305 = vmul.f32 %v2297, %v2286
    %v2306 = vadd.f32 %v1903, %v2305
    %v2307 = vtanh.pop %v2306
    %v2308 = vsub.f32 1.0, %v2304
    %v2309 = vmul.f32 %v2308, %v2307
    %v2310 = vmul.f32 %v2304, %v2208
    %v2311 = vadd.f32 %v2309, %v2310
    %v2312 = vpack.c.bf16 %v2311, %v2311
    %2313 = vmatprep.subr.bf16.mxu0 %v2060
    %2314 = vmatpush1.bf16.msra.mxu0 %v2059
    %2315 = vmatprep.subr.bf16.mxu0 %v2063
    %2316 = vmatpush1.bf16.msra.mxu0 %v2062
    %2317 = vmatprep.subr.bf16.mxu0 %v2066
    %2318 = vmatpush1.bf16.msra.mxu0 %v2065
    %2319 = vmatprep.subr.bf16.mxu0 %v2069
    %2320 = vmatpush1.bf16.msra.mxu0 %v2068
    %2321 = vmatprep.subr.bf16.mxu0 %v2072
    %2322 = vmatpush1.bf16.msra.mxu0 %v2071
    %2323 = vmatprep.subr.bf16.mxu0 %v2075
    %2324 = vmatpush1.bf16.msra.mxu0 %v2074
    %2325 = vmatprep.subr.bf16.mxu0 %v2078
    %2326 = vmatpush1.bf16.msra.mxu0 %v2077
    %2327 = vmatprep.subr.bf16.mxu0 %v2081
    %2328 = vmatpush1.bf16.msra.mxu0 %v2080
    %2329 = vmatprep.subr.bf16.mxu0 0
    %2330 = vmatpush1.bf16.msra.mxu0 0
    %2331 = vmatprep.subr.bf16.mxu0 0
    %2332 = vmatpush1.bf16.msra.mxu0 0
    %2333 = vmatprep.subr.bf16.mxu0 0
    %2334 = vmatpush1.bf16.msra.mxu0 0
    %2335 = vmatprep.subr.bf16.mxu0 0
    %2336 = vmatpush1.bf16.msra.mxu0 0
    %2337 = vmatprep.subr.bf16.mxu0 0
    %2338 = vmatpush1.bf16.msra.mxu0 0
    %2339 = vmatprep.subr.bf16.mxu0 0
    %2340 = vmatpush1.bf16.msra.mxu0 0
    %2341 = vmatprep.subr.bf16.mxu0 0
    %2342 = vmatpush1.bf16.msra.mxu0 0
    %2343 = vmatprep.subr.bf16.mxu0 0
    %2344 = vmatpush1.bf16.msra.mxu0 0
    %2345 = vmatprep.mubr.bf16.mxu0 0
    %2346 = vmatmul.mubr.bf16.gmra.mrb[0].mxu0 %v2312
    %v2347 = vpop.f32.mrb[0].mxu0
    %v2348 = vadd.f32 %v1967, %v2347
    %v2349 = vpop.f32.mrb[0].mxu0
    %v2350 = vadd.f32 %v1971, %v2349
    %v2351 = vpop.f32.mrb[0].mxu0
    %v2352 = vpop.f32.mrb[0].mxu0
    %2353 = vdwg.mxu0
    %2354 = vmatprep.subr.bf16.mxu0 0
    %2355 = vmatpush1.bf16.msra.mxu0 %v2061
    %2356 = vmatprep.subr.bf16.mxu0 0
    %2357 = vmatpush1.bf16.msra.mxu0 %v2064
    %2358 = vmatprep.subr.bf16.mxu0 0
    %2359 = vmatpush1.bf16.msra.mxu0 %v2067
    %2360 = vmatprep.subr.bf16.mxu0 0
    %2361 = vmatpush1.bf16.msra.mxu0 %v2070
    %2362 = vmatprep.subr.bf16.mxu0 0
    %2363 = vmatpush1.bf16.msra.mxu0 %v2073
    %2364 = vmatprep.subr.bf16.mxu0 0
    %2365 = vmatpush1.bf16.msra.mxu0 %v2076
    %2366 = vmatprep.subr.bf16.mxu0 0
    %2367 = vmatpush1.bf16.msra.mxu0 %v2079
    %2368 = vmatprep.subr.bf16.mxu0 0
    %2369 = vmatpush1.bf16.msra.mxu0 %v2082
    %2370 = vmatprep.subr.bf16.mxu0 0
    %2371 = vmatpush1.bf16.msra.mxu0 0
    %2372 = vmatprep.subr.bf16.mxu0 0
    %2373 = vmatpush1.bf16.msra.mxu0 0
    %2374 = vmatprep.subr.bf16.mxu0 0
    %2375 = vmatpush1.bf16.msra.mxu0 0
    %2376 = vmatprep.subr.bf16.mxu0 0
    %2377 = vmatpush1.bf16.msra.mxu0 0
    %2378 = vmatprep.subr.bf16.mxu0 0
    %2379 = vmatpush1.bf16.msra.mxu0 0
    %2380 = vmatprep.subr.bf16.mxu0 0
    %2381 = vmatpush1.bf16.msra.mxu0 0
    %2382 = vmatprep.subr.bf16.mxu0 0
    %2383 = vmatpush1.bf16.msra.mxu0 0
    %2384 = vmatprep.subr.bf16.mxu0 0
    %2385 = vmatpush1.bf16.msra.mxu0 0
    %2386 = vmatprep.mubr.bf16.mxu0 0
    %2387 = vmatmul.mubr.bf16.gmra.mrb[0].mxu0 %v2312
    %v2388 = vpop.f32.mrb[0].mxu0
    %v2389 = vadd.f32 %v1975, %v2388
    %v2390 = vpop.f32.mrb[0].mxu0
    %v2391 = vpop.f32.mrb[0].mxu0
    %v2392 = vpop.f32.mrb[0].mxu0
    %2393 = vdwg.mxu0
    %v2394 = vadd.f32 %v1837, %v2348
    %v2395 = vxor.u32 %v2394, 2147483648
    %v2396 = vmul.f32 %v2395, 1.442695
    %v2397 = vpow.pop %v2396
    %v2398 = vadd.f32 %v2397, 1.0
    %v2399 = vrcp.pop %v2398
    %v2400 = vmul.f32 1.0, %v2399
    %v2401 = vadd.f32 %v1839, %v2350
    %v2402 = vxor.u32 %v2401, 2147483648
    %v2403 = vmul.f32 %v2402, 1.442695
    %v2404 = vpow.pop %v2403
    %v2405 = vadd.f32 %v2404, 1.0
    %v2406 = vrcp.pop %v2405
    %v2407 = vmul.f32 1.0, %v2406
    %v2408 = vmul.f32 %v2400, %v2389
    %v2409 = vadd.f32 %v1908, %v2408
    %v2410 = vtanh.pop %v2409
    %v2411 = vsub.f32 1.0, %v2407
    %v2412 = vmul.f32 %v2411, %v2410
    %v2413 = vmul.f32 %v2407, %v2311
    %v2414 = vadd.f32 %v2412, %v2413
    %v2415 = vpack.c.bf16 %v2414, %v2414
    %2416 = vmatprep.subr.bf16.mxu0 %v2060
    %2417 = vmatpush1.bf16.msra.mxu0 %v2059
    %2418 = vmatprep.subr.bf16.mxu0 %v2063
    %2419 = vmatpush1.bf16.msra.mxu0 %v2062
    %2420 = vmatprep.subr.bf16.mxu0 %v2066
    %2421 = vmatpush1.bf16.msra.mxu0 %v2065
    %2422 = vmatprep.subr.bf16.mxu0 %v2069
    %2423 = vmatpush1.bf16.msra.mxu0 %v2068
    %2424 = vmatprep.subr.bf16.mxu0 %v2072
    %2425 = vmatpush1.bf16.msra.mxu0 %v2071
    %2426 = vmatprep.subr.bf16.mxu0 %v2075
    %2427 = vmatpush1.bf16.msra.mxu0 %v2074
    %2428 = vmatprep.subr.bf16.mxu0 %v2078
    %2429 = vmatpush1.bf16.msra.mxu0 %v2077
    %2430 = vmatprep.subr.bf16.mxu0 %v2081
    %2431 = vmatpush1.bf16.msra.mxu0 %v2080
    %2432 = vmatprep.subr.bf16.mxu0 0
    %2433 = vmatpush1.bf16.msra.mxu0 0
    %2434 = vmatprep.subr.bf16.mxu0 0
    %2435 = vmatpush1.bf16.msra.mxu0 0
    %2436 = vmatprep.subr.bf16.mxu0 0
    %2437 = vmatpush1.bf16.msra.mxu0 0
    %2438 = vmatprep.subr.bf16.mxu0 0
    %2439 = vmatpush1.bf16.msra.mxu0 0
    %2440 = vmatprep.subr.bf16.mxu0 0
    %2441 = vmatpush1.bf16.msra.mxu0 0
    %2442 = vmatprep.subr.bf16.mxu0 0
    %2443 = vmatpush1.bf16.msra.mxu0 0
    %2444 = vmatprep.subr.bf16.mxu0 0
    %2445 = vmatpush1.bf16.msra.mxu0 0
    %2446 = vmatprep.subr.bf16.mxu0 0
    %2447 = vmatpush1.bf16.msra.mxu0 0
    %2448 = vmatprep.mubr.bf16.mxu0 0
    %2449 = vmatmul.mubr.bf16.gmra.mrb[0].mxu0 %v2415
    %v2450 = vpop.f32.mrb[0].mxu0
    %v2451 = vadd.f32 %v1967, %v2450
    %v2452 = vpop.f32.mrb[0].mxu0
    %v2453 = vadd.f32 %v1971, %v2452
    %v2454 = vpop.f32.mrb[0].mxu0
    %v2455 = vpop.f32.mrb[0].mxu0
    %2456 = vdwg.mxu0
    %2457 = vmatprep.subr.bf16.mxu0 0
    %2458 = vmatpush1.bf16.msra.mxu0 %v2061
    %2459 = vmatprep.subr.bf16.mxu0 0
    %2460 = vmatpush1.bf16.msra.mxu0 %v2064
    %2461 = vmatprep.subr.bf16.mxu0 0
    %2462 = vmatpush1.bf16.msra.mxu0 %v2067
    %2463 = vmatprep.subr.bf16.mxu0 0
    %2464 = vmatpush1.bf16.msra.mxu0 %v2070
    %2465 = vmatprep.subr.bf16.mxu0 0
    %2466 = vmatpush1.bf16.msra.mxu0 %v2073
    %2467 = vmatprep.subr.bf16.mxu0 0
    %2468 = vmatpush1.bf16.msra.mxu0 %v2076
    %2469 = vmatprep.subr.bf16.mxu0 0
    %2470 = vmatpush1.bf16.msra.mxu0 %v2079
    %2471 = vmatprep.subr.bf16.mxu0 0
    %2472 = vmatpush1.bf16.msra.mxu0 %v2082
    %2473 = vmatprep.subr.bf16.mxu0 0
    %2474 = vmatpush1.bf16.msra.mxu0 0
    %2475 = vmatprep.subr.bf16.mxu0 0
    %2476 = vmatpush1.bf16.msra.mxu0 0
    %2477 = vmatprep.subr.bf16.mxu0 0
    %2478 = vmatpush1.bf16.msra.mxu0 0
    %2479 = vmatprep.subr.bf16.mxu0 0
    %2480 = vmatpush1.bf16.msra.mxu0 0
    %2481 = vmatprep.subr.bf16.mxu0 0
    %2482 = vmatpush1.bf16.msra.mxu0 0
    %2483 = vmatprep.subr.bf16.mxu0 0
    %2484 = vmatpush1.bf16.msra.mxu0 0
    %2485 = vmatprep.subr.bf16.mxu0 0
    %2486 = vmatpush1.bf16.msra.mxu0 0
    %2487 = vmatprep.subr.bf16.mxu0 0
    %2488 = vmatpush1.bf16.msra.mxu0 0
    %2489 = vmatprep.mubr.bf16.mxu0 0
    %2490 = vmatmul.mubr.bf16.gmra.mrb[0].mxu0 %v2415
    %v2491 = vpop.f32.mrb[0].mxu0
    %v2492 = vadd.f32 %v1975, %v2491
    %v2493 = vpop.f32.mrb[0].mxu0
    %v2494 = vpop.f32.mrb[0].mxu0
    %v2495 = vpop.f32.mrb[0].mxu0
    %2496 = vdwg.mxu0
    %v2497 = vadd.f32 %v1841, %v2451
    %v2498 = vxor.u32 %v2497, 2147483648
    %v2499 = vmul.f32 %v2498, 1.442695
    %v2500 = vpow.pop %v2499
    %v2501 = vadd.f32 %v2500, 1.0
    %v2502 = vrcp.pop %v2501
    %v2503 = vmul.f32 1.0, %v2502
    %v2504 = vadd.f32 %v1843, %v2453
    %v2505 = vxor.u32 %v2504, 2147483648
    %v2506 = vmul.f32 %v2505, 1.442695
    %v2507 = vpow.pop %v2506
    %v2508 = vadd.f32 %v2507, 1.0
    %v2509 = vrcp.pop %v2508
    %v2510 = vmul.f32 1.0, %v2509
    %v2511 = vmul.f32 %v2503, %v2492
    %v2512 = vadd.f32 %v1911, %v2511
    %v2513 = vtanh.pop %v2512
    %v2514 = vsub.f32 1.0, %v2510
    %v2515 = vmul.f32 %v2514, %v2513
    %v2516 = vmul.f32 %v2510, %v2414
    %v2517 = vadd.f32 %v2515, %v2516
    %v2518 = vpack.c.bf16 %v2517, %v2517
    %2519 = vmatprep.subr.bf16.mxu0 %v2060
    %2520 = vmatpush1.bf16.msra.mxu0 %v2059
    %2521 = vmatprep.subr.bf16.mxu0 %v2063
    %2522 = vmatpush1.bf16.msra.mxu0 %v2062
    %2523 = vmatprep.subr.bf16.mxu0 %v2066
    %2524 = vmatpush1.bf16.msra.mxu0 %v2065
    %2525 = vmatprep.subr.bf16.mxu0 %v2069
    %2526 = vmatpush1.bf16.msra.mxu0 %v2068
    %2527 = vmatprep.subr.bf16.mxu0 %v2072
    %2528 = vmatpush1.bf16.msra.mxu0 %v2071
    %2529 = vmatprep.subr.bf16.mxu0 %v2075
    %2530 = vmatpush1.bf16.msra.mxu0 %v2074
    %2531 = vmatprep.subr.bf16.mxu0 %v2078
    %2532 = vmatpush1.bf16.msra.mxu0 %v2077
    %2533 = vmatprep.subr.bf16.mxu0 %v2081
    %2534 = vmatpush1.bf16.msra.mxu0 %v2080
    %2535 = vmatprep.subr.bf16.mxu0 0
    %2536 = vmatpush1.bf16.msra.mxu0 0
    %2537 = vmatprep.subr.bf16.mxu0 0
    %2538 = vmatpush1.bf16.msra.mxu0 0
    %2539 = vmatprep.subr.bf16.mxu0 0
    %2540 = vmatpush1.bf16.msra.mxu0 0
    %2541 = vmatprep.subr.bf16.mxu0 0
    %2542 = vmatpush1.bf16.msra.mxu0 0
    %2543 = vmatprep.subr.bf16.mxu0 0
    %2544 = vmatpush1.bf16.msra.mxu0 0
    %2545 = vmatprep.subr.bf16.mxu0 0
    %2546 = vmatpush1.bf16.msra.mxu0 0
    %2547 = vmatprep.subr.bf16.mxu0 0
    %2548 = vmatpush1.bf16.msra.mxu0 0
    %2549 = vmatprep.subr.bf16.mxu0 0
    %2550 = vmatpush1.bf16.msra.mxu0 0
    %2551 = vmatprep.mubr.bf16.mxu0 0
    %2552 = vmatmul.mubr.bf16.gmra.mrb[0].mxu0 %v2518
    %v2553 = vpop.f32.mrb[0].mxu0
    %v2554 = vadd.f32 %v1967, %v2553
    %v2555 = vpop.f32.mrb[0].mxu0
    %v2556 = vadd.f32 %v1971, %v2555
    %v2557 = vpop.f32.mrb[0].mxu0
    %v2558 = vpop.f32.mrb[0].mxu0
    %2559 = vdwg.mxu0
    %2560 = vmatprep.subr.bf16.mxu0 0
    %2561 = vmatpush1.bf16.msra.mxu0 %v2061
    %2562 = vmatprep.subr.bf16.mxu0 0
    %2563 = vmatpush1.bf16.msra.mxu0 %v2064
    %2564 = vmatprep.subr.bf16.mxu0 0
    %2565 = vmatpush1.bf16.msra.mxu0 %v2067
    %2566 = vmatprep.subr.bf16.mxu0 0
    %2567 = vmatpush1.bf16.msra.mxu0 %v2070
    %2568 = vmatprep.subr.bf16.mxu0 0
    %2569 = vmatpush1.bf16.msra.mxu0 %v2073
    %2570 = vmatprep.subr.bf16.mxu0 0
    %2571 = vmatpush1.bf16.msra.mxu0 %v2076
    %2572 = vmatprep.subr.bf16.mxu0 0
    %2573 = vmatpush1.bf16.msra.mxu0 %v2079
    %2574 = vmatprep.subr.bf16.mxu0 0
    %2575 = vmatpush1.bf16.msra.mxu0 %v2082
    %2576 = vmatprep.subr.bf16.mxu0 0
    %2577 = vmatpush1.bf16.msra.mxu0 0
    %2578 = vmatprep.subr.bf16.mxu0 0
    %2579 = vmatpush1.bf16.msra.mxu0 0
    %2580 = vmatprep.subr.bf16.mxu0 0
    %2581 = vmatpush1.bf16.msra.mxu0 0
    %2582 = vmatprep.subr.bf16.mxu0 0
    %2583 = vmatpush1.bf16.msra.mxu0 0
    %2584 = vmatprep.subr.bf16.mxu0 0
    %2585 = vmatpush1.bf16.msra.mxu0 0
    %2586 = vmatprep.subr.bf16.mxu0 0
    %2587 = vmatpush1.bf16.msra.mxu0 0
    %2588 = vmatprep.subr.bf16.mxu0 0
    %2589 = vmatpush1.bf16.msra.mxu0 0
    %2590 = vmatprep.subr.bf16.mxu0 0
    %2591 = vmatpush1.bf16.msra.mxu0 0
    %2592 = vmatprep.mubr.bf16.mxu0 0
    %2593 = vmatmul.mubr.bf16.gmra.mrb[0].mxu0 %v2518
    %v2594 = vpop.f32.mrb[0].mxu0
    %v2595 = vadd.f32 %v1975, %v2594
    %v2596 = vpop.f32.mrb[0].mxu0
    %v2597 = vpop.f32.mrb[0].mxu0
    %v2598 = vpop.f32.mrb[0].mxu0
    %2599 = vdwg.mxu0
    %v2600 = vadd.f32 %v1847, %v2554
    %v2601 = vxor.u32 %v2600, 2147483648
    %v2602 = vmul.f32 %v2601, 1.442695
    %v2603 = vpow.pop %v2602
    %v2604 = vadd.f32 %v2603, 1.0
    %v2605 = vrcp.pop %v2604
    %v2606 = vmul.f32 1.0, %v2605
    %v2607 = vadd.f32 %v1849, %v2556
    %v2608 = vxor.u32 %v2607, 2147483648
    %v2609 = vmul.f32 %v2608, 1.442695
    %v2610 = vpow.pop %v2609
    %v2611 = vadd.f32 %v2610, 1.0
    %v2612 = vrcp.pop %v2611
    %v2613 = vmul.f32 1.0, %v2612
    %v2614 = vmul.f32 %v2606, %v2595
    %v2615 = vadd.f32 %v1916, %v2614
    %v2616 = vtanh.pop %v2615
    %v2617 = vsub.f32 1.0, %v2613
    %v2618 = vmul.f32 %v2617, %v2616
    %v2619 = vmul.f32 %v2613, %v2517
    %v2620 = vadd.f32 %v2618, %v2619
    %v2621 = vpack.c.bf16 %v2620, %v2620
    %2622 = vmatprep.subr.bf16.mxu0 %v2060
    %2623 = vmatpush1.bf16.msra.mxu0 %v2059
    %2624 = vmatprep.subr.bf16.mxu0 %v2063
    %2625 = vmatpush1.bf16.msra.mxu0 %v2062
    %2626 = vmatprep.subr.bf16.mxu0 %v2066
    %2627 = vmatpush1.bf16.msra.mxu0 %v2065
    %2628 = vmatprep.subr.bf16.mxu0 %v2069
    %2629 = vmatpush1.bf16.msra.mxu0 %v2068
    %2630 = vmatprep.subr.bf16.mxu0 %v2072
    %2631 = vmatpush1.bf16.msra.mxu0 %v2071
    %2632 = vmatprep.subr.bf16.mxu0 %v2075
    %2633 = vmatpush1.bf16.msra.mxu0 %v2074
    %2634 = vmatprep.subr.bf16.mxu0 %v2078
    %2635 = vmatpush1.bf16.msra.mxu0 %v2077
    %2636 = vmatprep.subr.bf16.mxu0 %v2081
    %2637 = vmatpush1.bf16.msra.mxu0 %v2080
    %2638 = vmatprep.subr.bf16.mxu0 0
    %2639 = vmatpush1.bf16.msra.mxu0 0
    %2640 = vmatprep.subr.bf16.mxu0 0
    %2641 = vmatpush1.bf16.msra.mxu0 0
    %2642 = vmatprep.subr.bf16.mxu0 0
    %2643 = vmatpush1.bf16.msra.mxu0 0
    %2644 = vmatprep.subr.bf16.mxu0 0
    %2645 = vmatpush1.bf16.msra.mxu0 0
    %2646 = vmatprep.subr.bf16.mxu0 0
    %2647 = vmatpush1.bf16.msra.mxu0 0
    %2648 = vmatprep.subr.bf16.mxu0 0
    %2649 = vmatpush1.bf16.msra.mxu0 0
    %2650 = vmatprep.subr.bf16.mxu0 0
    %2651 = vmatpush1.bf16.msra.mxu0 0
    %2652 = vmatprep.subr.bf16.mxu0 0
    %2653 = vmatpush1.bf16.msra.mxu0 0
    %2654 = vmatprep.mubr.bf16.mxu0 0
    %2655 = vmatmul.mubr.bf16.gmra.mrb[0].mxu0 %v2621
    %v2656 = vpop.f32.mrb[0].mxu0
    %v2657 = vadd.f32 %v1967, %v2656
    %v2658 = vpop.f32.mrb[0].mxu0
    %v2659 = vadd.f32 %v1971, %v2658
    %v2660 = vpop.f32.mrb[0].mxu0
    %v2661 = vpop.f32.mrb[0].mxu0
    %2662 = vdwg.mxu0
    %2663 = vmatprep.subr.bf16.mxu0 0
    %2664 = vmatpush1.bf16.msra.mxu0 %v2061
    %2665 = vmatprep.subr.bf16.mxu0 0
    %2666 = vmatpush1.bf16.msra.mxu0 %v2064
    %2667 = vmatprep.subr.bf16.mxu0 0
    %2668 = vmatpush1.bf16.msra.mxu0 %v2067
    %2669 = vmatprep.subr.bf16.mxu0 0
    %2670 = vmatpush1.bf16.msra.mxu0 %v2070
    %2671 = vmatprep.subr.bf16.mxu0 0
    %2672 = vmatpush1.bf16.msra.mxu0 %v2073
    %2673 = vmatprep.subr.bf16.mxu0 0
    %2674 = vmatpush1.bf16.msra.mxu0 %v2076
    %2675 = vmatprep.subr.bf16.mxu0 0
    %2676 = vmatpush1.bf16.msra.mxu0 %v2079
    %2677 = vmatprep.subr.bf16.mxu0 0
    %2678 = vmatpush1.bf16.msra.mxu0 %v2082
    %2679 = vmatprep.subr.bf16.mxu0 0
    %2680 = vmatpush1.bf16.msra.mxu0 0
    %2681 = vmatprep.subr.bf16.mxu0 0
    %2682 = vmatpush1.bf16.msra.mxu0 0
    %2683 = vmatprep.subr.bf16.mxu0 0
    %2684 = vmatpush1.bf16.msra.mxu0 0
    %2685 = vmatprep.subr.bf16.mxu0 0
    %2686 = vmatpush1.bf16.msra.mxu0 0
    %2687 = vmatprep.subr.bf16.mxu0 0
    %2688 = vmatpush1.bf16.msra.mxu0 0
    %2689 = vmatprep.subr.bf16.mxu0 0
    %2690 = vmatpush1.bf16.msra.mxu0 0
    %2691 = vmatprep.subr.bf16.mxu0 0
    %2692 = vmatpush1.bf16.msra.mxu0 0
    %2693 = vmatprep.subr.bf16.mxu0 0
    %2694 = vmatpush1.bf16.msra.mxu0 0
    %2695 = vmatprep.mubr.bf16.mxu0 0
    %2696 = vmatmul.mubr.bf16.gmra.mrb[0].mxu0 %v2621
    %v2697 = vpop.f32.mrb[0].mxu0
    %v2698 = vadd.f32 %v1975, %v2697
    %v2699 = vpop.f32.mrb[0].mxu0
    %v2700 = vpop.f32.mrb[0].mxu0
    %v2701 = vpop.f32.mrb[0].mxu0
    %2702 = vdwg.mxu0
    %v2703 = vadd.f32 %v1851, %v2657
    %v2704 = vxor.u32 %v2703, 2147483648
    %v2705 = vmul.f32 %v2704, 1.442695
    %v2706 = vpow.pop %v2705
    %v2707 = vadd.f32 %v2706, 1.0
    %v2708 = vrcp.pop %v2707
    %v2709 = vmul.f32 1.0, %v2708
    %v2710 = vadd.f32 %v1853, %v2659
    %v2711 = vxor.u32 %v2710, 2147483648
    %v2712 = vmul.f32 %v2711, 1.442695
    %v2713 = vpow.pop %v2712
    %v2714 = vadd.f32 %v2713, 1.0
    %v2715 = vrcp.pop %v2714
    %v2716 = vmul.f32 1.0, %v2715
    %v2717 = vmul.f32 %v2709, %v2698
    %v2718 = vadd.f32 %v1919, %v2717
    %v2719 = vtanh.pop %v2718
    %v2720 = vsub.f32 1.0, %v2716
    %v2721 = vmul.f32 %v2720, %v2719
    %v2722 = vmul.f32 %v2716, %v2620
    %v2723 = vadd.f32 %v2721, %v2722
    %v2724 = vpack.c.bf16 %v2723, %v2723
    %2725 = vmatprep.subr.bf16.mxu0 %v2060
    %2726 = vmatpush1.bf16.msra.mxu0 %v2059
    %2727 = vmatprep.subr.bf16.mxu0 %v2063
    %2728 = vmatpush1.bf16.msra.mxu0 %v2062
    %2729 = vmatprep.subr.bf16.mxu0 %v2066
    %2730 = vmatpush1.bf16.msra.mxu0 %v2065
    %2731 = vmatprep.subr.bf16.mxu0 %v2069
    %2732 = vmatpush1.bf16.msra.mxu0 %v2068
    %2733 = vmatprep.subr.bf16.mxu0 %v2072
    %2734 = vmatpush1.bf16.msra.mxu0 %v2071
    %2735 = vmatprep.subr.bf16.mxu0 %v2075
    %2736 = vmatpush1.bf16.msra.mxu0 %v2074
    %2737 = vmatprep.subr.bf16.mxu0 %v2078
    %2738 = vmatpush1.bf16.msra.mxu0 %v2077
    %2739 = vmatprep.subr.bf16.mxu0 %v2081
    %2740 = vmatpush1.bf16.msra.mxu0 %v2080
    %2741 = vmatprep.subr.bf16.mxu0 0
    %2742 = vmatpush1.bf16.msra.mxu0 0
    %2743 = vmatprep.subr.bf16.mxu0 0
    %2744 = vmatpush1.bf16.msra.mxu0 0
    %2745 = vmatprep.subr.bf16.mxu0 0
    %2746 = vmatpush1.bf16.msra.mxu0 0
    %2747 = vmatprep.subr.bf16.mxu0 0
    %2748 = vmatpush1.bf16.msra.mxu0 0
    %2749 = vmatprep.subr.bf16.mxu0 0
    %2750 = vmatpush1.bf16.msra.mxu0 0
    %2751 = vmatprep.subr.bf16.mxu0 0
    %2752 = vmatpush1.bf16.msra.mxu0 0
    %2753 = vmatprep.subr.bf16.mxu0 0
    %2754 = vmatpush1.bf16.msra.mxu0 0
    %2755 = vmatprep.subr.bf16.mxu0 0
    %2756 = vmatpush1.bf16.msra.mxu0 0
    %2757 = vmatprep.mubr.bf16.mxu0 0
    %2758 = vmatmul.mubr.bf16.gmra.mrb[0].mxu0 %v2724
    %v2759 = vpop.f32.mrb[0].mxu0
    %v2760 = vadd.f32 %v1967, %v2759
    %v2761 = vpop.f32.mrb[0].mxu0
    %v2762 = vadd.f32 %v1971, %v2761
    %v2763 = vpop.f32.mrb[0].mxu0
    %v2764 = vpop.f32.mrb[0].mxu0
    %2765 = vdwg.mxu0
    %2766 = vmatprep.subr.bf16.mxu0 0
    %2767 = vmatpush1.bf16.msra.mxu0 %v2061
    %2768 = vmatprep.subr.bf16.mxu0 0
    %2769 = vmatpush1.bf16.msra.mxu0 %v2064
    %2770 = vmatprep.subr.bf16.mxu0 0
    %2771 = vmatpush1.bf16.msra.mxu0 %v2067
    %2772 = vmatprep.subr.bf16.mxu0 0
    %2773 = vmatpush1.bf16.msra.mxu0 %v2070
    %2774 = vmatprep.subr.bf16.mxu0 0
    %2775 = vmatpush1.bf16.msra.mxu0 %v2073
    %2776 = vmatprep.subr.bf16.mxu0 0
    %2777 = vmatpush1.bf16.msra.mxu0 %v2076
    %2778 = vmatprep.subr.bf16.mxu0 0
    %2779 = vmatpush1.bf16.msra.mxu0 %v2079
    %2780 = vmatprep.subr.bf16.mxu0 0
    %2781 = vmatpush1.bf16.msra.mxu0 %v2082
    %2782 = vmatprep.subr.bf16.mxu0 0
    %2783 = vmatpush1.bf16.msra.mxu0 0
    %2784 = vmatprep.subr.bf16.mxu0 0
    %2785 = vmatpush1.bf16.msra.mxu0 0
    %2786 = vmatprep.subr.bf16.mxu0 0
    %2787 = vmatpush1.bf16.msra.mxu0 0
    %2788 = vmatprep.subr.bf16.mxu0 0
    %2789 = vmatpush1.bf16.msra.mxu0 0
    %2790 = vmatprep.subr.bf16.mxu0 0
    %2791 = vmatpush1.bf16.msra.mxu0 0
    %2792 = vmatprep.subr.bf16.mxu0 0
    %2793 = vmatpush1.bf16.msra.mxu0 0
    %2794 = vmatprep.subr.bf16.mxu0 0
    %2795 = vmatpush1.bf16.msra.mxu0 0
    %2796 = vmatprep.subr.bf16.mxu0 0
    %2797 = vmatpush1.bf16.msra.mxu0 0
    %2798 = vmatprep.mubr.bf16.mxu0 0
    %2799 = vmatmul.mubr.bf16.gmra.mrb[0].mxu0 %v2724
    %v2800 = vpop.f32.mrb[0].mxu0
    %v2801 = vadd.f32 %v1975, %v2800
    %v2802 = vpop.f32.mrb[0].mxu0
    %v2803 = vpop.f32.mrb[0].mxu0
    %v2804 = vpop.f32.mrb[0].mxu0
    %2805 = vdwg.mxu0
    %v2806 = vadd.f32 %v1857, %v2760
    %v2807 = vxor.u32 %v2806, 2147483648
    %v2808 = vmul.f32 %v2807, 1.442695
    %v2809 = vpow.pop %v2808
    %v2810 = vadd.f32 %v2809, 1.0
    %v2811 = vrcp.pop %v2810
    %v2812 = vmul.f32 1.0, %v2811
    %v2813 = vadd.f32 %v1859, %v2762
    %v2814 = vxor.u32 %v2813, 2147483648
    %v2815 = vmul.f32 %v2814, 1.442695
    %v2816 = vpow.pop %v2815
    %v2817 = vadd.f32 %v2816, 1.0
    %v2818 = vrcp.pop %v2817
    %v2819 = vmul.f32 1.0, %v2818
    %v2820 = vmul.f32 %v2812, %v2801
    %v2821 = vadd.f32 %v1924, %v2820
    %v2822 = vtanh.pop %v2821
    %v2823 = vsub.f32 1.0, %v2819
    %v2824 = vmul.f32 %v2823, %v2822
    %v2825 = vmul.f32 %v2819, %v2723
    %v2826 = vadd.f32 %v2824, %v2825
    %v2827 = vpack.c.bf16 %v2826, %v2826
    %2828 = vmatprep.subr.bf16.mxu0 %v2060
    %2829 = vmatpush1.bf16.msra.mxu0 %v2059
    %2830 = vmatprep.subr.bf16.mxu0 %v2063
    %2831 = vmatpush1.bf16.msra.mxu0 %v2062
    %2832 = vmatprep.subr.bf16.mxu0 %v2066
    %2833 = vmatpush1.bf16.msra.mxu0 %v2065
    %2834 = vmatprep.subr.bf16.mxu0 %v2069
    %2835 = vmatpush1.bf16.msra.mxu0 %v2068
    %2836 = vmatprep.subr.bf16.mxu0 %v2072
    %2837 = vmatpush1.bf16.msra.mxu0 %v2071
    %2838 = vmatprep.subr.bf16.mxu0 %v2075
    %2839 = vmatpush1.bf16.msra.mxu0 %v2074
    %2840 = vmatprep.subr.bf16.mxu0 %v2078
    %2841 = vmatpush1.bf16.msra.mxu0 %v2077
    %2842 = vmatprep.subr.bf16.mxu0 %v2081
    %2843 = vmatpush1.bf16.msra.mxu0 %v2080
    %2844 = vmatprep.subr.bf16.mxu0 0
    %2845 = vmatpush1.bf16.msra.mxu0 0
    %2846 = vmatprep.subr.bf16.mxu0 0
    %2847 = vmatpush1.bf16.msra.mxu0 0
    %2848 = vmatprep.subr.bf16.mxu0 0
    %2849 = vmatpush1.bf16.msra.mxu0 0
    %2850 = vmatprep.subr.bf16.mxu0 0
    %2851 = vmatpush1.bf16.msra.mxu0 0
    %2852 = vmatprep.subr.bf16.mxu0 0
    %2853 = vmatpush1.bf16.msra.mxu0 0
    %2854 = vmatprep.subr.bf16.mxu0 0
    %2855 = vmatpush1.bf16.msra.mxu0 0
    %2856 = vmatprep.subr.bf16.mxu0 0
    %2857 = vmatpush1.bf16.msra.mxu0 0
    %2858 = vmatprep.subr.bf16.mxu0 0
    %2859 = vmatpush1.bf16.msra.mxu0 0
    %2860 = vmatprep.mubr.bf16.mxu0 0
    %2861 = vmatmul.mubr.bf16.gmra.mrb[0].mxu0 %v2827
    %v2862 = vpop.f32.mrb[0].mxu0
    %v2863 = vadd.f32 %v1967, %v2862
    %v2864 = vpop.f32.mrb[0].mxu0
    %v2865 = vadd.f32 %v1971, %v2864
    %v2866 = vpop.f32.mrb[0].mxu0
    %v2867 = vpop.f32.mrb[0].mxu0
    %2868 = vdwg.mxu0
    %2869 = vmatprep.subr.bf16.mxu0 0
    %2870 = vmatpush1.bf16.msra.mxu0 %v2061
    %2871 = vmatprep.subr.bf16.mxu0 0
    %2872 = vmatpush1.bf16.msra.mxu0 %v2064
    %2873 = vmatprep.subr.bf16.mxu0 0
    %2874 = vmatpush1.bf16.msra.mxu0 %v2067
    %2875 = vmatprep.subr.bf16.mxu0 0
    %2876 = vmatpush1.bf16.msra.mxu0 %v2070
    %2877 = vmatprep.subr.bf16.mxu0 0
    %2878 = vmatpush1.bf16.msra.mxu0 %v2073
    %2879 = vmatprep.subr.bf16.mxu0 0
    %2880 = vmatpush1.bf16.msra.mxu0 %v2076
    %2881 = vmatprep.subr.bf16.mxu0 0
    %2882 = vmatpush1.bf16.msra.mxu0 %v2079
    %2883 = vmatprep.subr.bf16.mxu0 0
    %2884 = vmatpush1.bf16.msra.mxu0 %v2082
    %2885 = vmatprep.subr.bf16.mxu0 0
    %2886 = vmatpush1.bf16.msra.mxu0 0
    %2887 = vmatprep.subr.bf16.mxu0 0
    %2888 = vmatpush1.bf16.msra.mxu0 0
    %2889 = vmatprep.subr.bf16.mxu0 0
    %2890 = vmatpush1.bf16.msra.mxu0 0
    %2891 = vmatprep.subr.bf16.mxu0 0
    %2892 = vmatpush1.bf16.msra.mxu0 0
    %2893 = vmatprep.subr.bf16.mxu0 0
    %2894 = vmatpush1.bf16.msra.mxu0 0
    %2895 = vmatprep.subr.bf16.mxu0 0
    %2896 = vmatpush1.bf16.msra.mxu0 0
    %2897 = vmatprep.subr.bf16.mxu0 0
    %2898 = vmatpush1.bf16.msra.mxu0 0
    %2899 = vmatprep.subr.bf16.mxu0 0
    %2900 = vmatpush1.bf16.msra.mxu0 0
    %2901 = vmatprep.mubr.bf16.mxu0 0
    %2902 = vmatmul.mubr.bf16.gmra.mrb[0].mxu0 %v2827
    %v2903 = vpop.f32.mrb[0].mxu0
    %v2904 = vadd.f32 %v1975, %v2903
    %v2905 = vpop.f32.mrb[0].mxu0
    %v2906 = vpop.f32.mrb[0].mxu0
    %v2907 = vpop.f32.mrb[0].mxu0
    %2908 = vdwg.mxu0
    %v2909 = vadd.f32 %v1861, %v2863
    %v2910 = vxor.u32 %v2909, 2147483648
    %v2911 = vmul.f32 %v2910, 1.442695
    %v2912 = vpow.pop %v2911
    %v2913 = vadd.f32 %v2912, 1.0
    %v2914 = vrcp.pop %v2913
    %v2915 = vmul.f32 1.0, %v2914
    %v2916 = vadd.f32 %v1863, %v2865
    %v2917 = vxor.u32 %v2916, 2147483648
    %v2918 = vmul.f32 %v2917, 1.442695
    %v2919 = vpow.pop %v2918
    %v2920 = vadd.f32 %v2919, 1.0
    %v2921 = vrcp.pop %v2920
    %v2922 = vmul.f32 1.0, %v2921
    %v2923 = vmul.f32 %v2915, %v2904
    %v2924 = vadd.f32 %v1927, %v2923
    %v2925 = vtanh.pop %v2924
    %v2926 = vsub.f32 1.0, %v2922
    %v2927 = vmul.f32 %v2926, %v2925
    %v2928 = vmul.f32 %v2922, %v2826
    %v2929 = vadd.f32 %v2927, %v2928
    %v2930 = vpack.c.bf16 %v2929, %v2929
    %v2931 = vld [vmem:[%s11] sm:$0xf]
    %v2932 = vld [vmem:[%s11 + $0x4] sm:$0xf]
    %v2933 = vld [vmem:[%s11 + $0x8] sm:$0xf]
    %v2934 = vld [vmem:[%s11 + $0xc] sm:$0xf]
    %v2935 = vld [vmem:[%s11 + $0x10] sm:$0xf]
    %v2936 = vld [vmem:[%s11 + $0x14] sm:$0xf]
    %v2937 = vld [vmem:[%s11 + $0x18] sm:$0xf]
    %v2938 = vld [vmem:[%s11 + $0x1c] sm:$0xf]
    %v2939 = vld [vmem:[%s11 + $0x20] sm:$0xf]
    %v2940 = vld [vmem:[%s11 + $0x24] sm:$0xf]
    %v2941 = vld [vmem:[%s11 + $0x28] sm:$0xf]
    %v2942 = vld [vmem:[%s11 + $0x2c] sm:$0xf]
    %v2943 = vld [vmem:[%s11 + $0x30] sm:$0xf]
    %v2944 = vld [vmem:[%s11 + $0x34] sm:$0xf]
    %v2945 = vld [vmem:[%s11 + $0x38] sm:$0xf]
    %v2946 = vld [vmem:[%s11 + $0x3c] sm:$0xf]
    %v2947 = vld [vmem:[%s12] sm:$0x1]
    %v2949 = vlaneseq
    %v2950 = vshrl.u32 %v2949, 7
    %v2951 = vsub.s32 0, %v2950
    %v2952 = vrot.slane %v2947, %v2951
    %v2970 = vunpack.c.l.b16 %v2931
    %v2971 = vunpack.c.l.b16 %v2932
    %v2972 = vunpack.c.l.b16 %v2933
    %v2973 = vunpack.c.l.b16 %v2934
    %v2974 = vunpack.c.l.b16 %v2935
    %v2975 = vunpack.c.l.b16 %v2936
    %v2976 = vunpack.c.l.b16 %v2937
    %v2977 = vunpack.c.l.b16 %v2938
    %v2978 = vunpack.c.l.b16 %v2939
    %v2979 = vunpack.c.l.b16 %v2940
    %v2980 = vunpack.c.l.b16 %v2941
    %v2981 = vunpack.c.l.b16 %v2942
    %v2982 = vunpack.c.l.b16 %v2943
    %v2983 = vunpack.c.l.b16 %v2944
    %v2984 = vunpack.c.l.b16 %v2945
    %v2985 = vunpack.c.l.b16 %v2946
    %v2986 = vpack.c.b16 %v2971, %v2970
    %v2987 = vpack.c.b16 %v2973, %v2972
    %v2988 = vpack.c.b16 %v2975, %v2974
    %v2989 = vpack.c.b16 %v2977, %v2976
    %v2990 = vpack.c.b16 %v2979, %v2978
    %v2991 = vpack.c.b16 %v2981, %v2980
    %v2992 = vpack.c.b16 %v2983, %v2982
    %v2993 = vpack.c.b16 %v2985, %v2984
    %3002 = vmatprep.subr.bf16.mxu0 0
    %3003 = vmatpush1.bf16.msra.mxu0 %v2986
    %3004 = vmatprep.subr.bf16.mxu0 0
    %3005 = vmatpush1.bf16.msra.mxu0 %v2987
    %3006 = vmatprep.subr.bf16.mxu0 0
    %3007 = vmatpush1.bf16.msra.mxu0 %v2988
    %3008 = vmatprep.subr.bf16.mxu0 0
    %3009 = vmatpush1.bf16.msra.mxu0 %v2989
    %3010 = vmatprep.subr.bf16.mxu0 0
    %3011 = vmatpush1.bf16.msra.mxu0 %v2990
    %3012 = vmatprep.subr.bf16.mxu0 0
    %3013 = vmatpush1.bf16.msra.mxu0 %v2991
    %3014 = vmatprep.subr.bf16.mxu0 0
    %3015 = vmatpush1.bf16.msra.mxu0 %v2992
    %3016 = vmatprep.subr.bf16.mxu0 0
    %3017 = vmatpush1.bf16.msra.mxu0 %v2993
    %3018 = vmatprep.subr.bf16.mxu0 0
    %3019 = vmatpush1.bf16.msra.mxu0 0
    %3020 = vmatprep.subr.bf16.mxu0 0
    %3021 = vmatpush1.bf16.msra.mxu0 0
    %3022 = vmatprep.subr.bf16.mxu0 0
    %3023 = vmatpush1.bf16.msra.mxu0 0
    %3024 = vmatprep.subr.bf16.mxu0 0
    %3025 = vmatpush1.bf16.msra.mxu0 0
    %3026 = vmatprep.subr.bf16.mxu0 0
    %3027 = vmatpush1.bf16.msra.mxu0 0
    %3028 = vmatprep.subr.bf16.mxu0 0
    %3029 = vmatpush1.bf16.msra.mxu0 0
    %3030 = vmatprep.subr.bf16.mxu0 0
    %3031 = vmatpush1.bf16.msra.mxu0 0
    %3032 = vmatprep.subr.bf16.mxu0 0
    %3033 = vmatpush1.bf16.msra.mxu0 0
    %3034 = vmatprep.mubr.bf16.mxu0 0
    %3035 = vmatmul.mubr.bf16.gmra.mrb[0].mxu0 %v2930
    %v3036 = vpop.f32.mrb[0].mxu0
    %v3037 = vadd.f32 %v2952, %v3036
    %v3038 = vpop.f32.mrb[0].mxu0
    %v3039 = vpop.f32.mrb[0].mxu0
    %v3040 = vpop.f32.mrb[0].mxu0
    %3041 = vdwg.mxu0
    %vm3042 = vcmask 130048
    %3043 = vst.msk [vmem:[#allocation5] sm:$0xff] %vm3042, %v3037
    // Predicated region
    $region58: #{tpu_custom_call.1} parent=1 // pred_check
      _
    $region59: #{tpu_custom_call.1} parent=1 // pred_check_branch
      %3045 = sbr.rel (0) target = $region61
    $region60: #{tpu_custom_call.1} parent=1 // pred_region
      %s3047 = ssub.s32 128, 128
      %3048 = vsyncadd [#allocation4], %s3047
      %s3050 = sshll.u32 [#allocation5], 4
      %s3051 = int_to_ptr.vmem [resolvable:$true] %s3050
      %3053 = dma.vmem_to_hbm [thread:$0]  %s3051, 128, %s13, [#allocation4]
    $region61: #{tpu_custom_call.1} parent=1 // pred_fallthru
      _
    // Predicated region
    $region62: #{tpu_custom_call.1} parent=1 // pred_check
      _
    $region63: #{tpu_custom_call.1} parent=1 // pred_check_branch
      %3055 = sbr.rel (0) target = $region65
    $region64: #{tpu_custom_call.1} parent=1 // pred_region
      %3056 = dma.done [#allocation4], 128
    $region65: #{tpu_custom_call.1} parent=1 // pred_fallthru
      _
    %3057 = vsyncpa [#allocation3], 1
    %3058 = vsyncpa [#allocation4], 1

</llo_original>
